<compile_context>
chip_gen: v7x
topology: tpu7x:2x2x1
jax: 0.10.0
libtpu: 0.0.40
codegen_flags: <defaults>
</compile_context>

<pallas_src>
import functools

import jax
import jax.numpy as jnp
from jax import lax
from jax.experimental import pallas as pl
from jax.experimental.pallas import tpu as pltpu


# ----------------------------------------------------------------------------
# shared in-kernel math
# ----------------------------------------------------------------------------

def _softplus(v):
    # Match torch.nn.functional.softplus (beta=1, threshold=20).
    return jnp.where(v > 20.0, v, jnp.log1p(jnp.exp(jnp.minimum(v, 20.0))))


def _num_sub_blocks(rows, sub_rows):
    """Static (trace-time) choice of how many row sub-blocks to unroll."""
    n = max(rows // max(sub_rows, 1), 1)
    while rows % n != 0:
        n -= 1
    return n


def _encode_rows(x_blk, mask_blk, w11, b11, w12, b12, w2, b2):
    """softplus(fc11) -> softplus(fc12) -> dropout -> fused [fc21|fc22].

    x is cast to bf16 in-kernel; matmuls run bf16 on the MXU with f32
    accumulation; elementwise math stays f32.  mask_blk is pre-scaled
    (0 or 1/(1-p)), so the dropout rescale is folded into one multiply.
    """
    x = x_blk.astype(jnp.bfloat16)
    e1 = _softplus(jnp.dot(x, w11, preferred_element_type=jnp.float32) + b11)
    e1 = _softplus(jnp.dot(e1.astype(jnp.bfloat16), w12,
                           preferred_element_type=jnp.float32) + b12)
    e1 = e1 * mask_blk
    return jnp.dot(e1.astype(jnp.bfloat16), w2,
                   preferred_element_type=jnp.float32) + b2


def _bn_reparam_softmax_dropout(h, bn_b, eps, mask_t, num_topics):
    """BatchNorm1d (training-mode batch stats, eps=0.001, gamma frozen at 1,
    learnable beta) on the packed (B, 2T) [mu || logvar] tensor, then
    reparameterize, softmax over topics, theta dropout."""
    m = jnp.mean(h, axis=0, keepdims=True)
    v = jnp.mean(jnp.square(h - m), axis=0, keepdims=True)     # biased variance
    hn = (h - m) * lax.rsqrt(v + 0.001) + bn_b

    mu = hn[:, :num_topics]
    logvar = hn[:, num_topics:]
    z = mu + eps * jnp.exp(0.5 * logvar)

    z_max = jnp.max(z, axis=1, keepdims=True)
    ez = jnp.exp(z - z_max)
    theta = ez / jnp.sum(ez, axis=1, keepdims=True)             # exact divide
    return theta * mask_t                                       # pre-scaled mask


# ----------------------------------------------------------------------------
# Kernel 1 (default, grid=1): whole forward pass fused in one dispatch
# ----------------------------------------------------------------------------

def prodlda_fused_kernel(x_ref,                     # (B, V)  f32
                         w11_ref, b11_ref,          # (V, E) bf16, (1, E) f32
                         w12_ref, b12_ref,          # (E, E) bf16, (1, E) f32
                         w2_ref, b2_ref,            # (E, 2T) bf16, (1, 2T) f32
                         bn_b_ref,                  # (1, 2T) f32  BN beta
                         mask1_ref,                 # (B, E)  f32  fc1 dropout mask
                         eps_ref,                   # (B, T)  f32  N(0,1) noise
                         maskt_ref,                 # (B, T)  f32  theta dropout mask
                         theta_ref,                 # (B, T)  f32  out
                         *, num_topics, sub_rows):
    b = x_ref.shape[0]
    n_sub = _num_sub_blocks(b, sub_rows)
    rows = b // n_sub

    w11 = w11_ref[...]; b11 = b11_ref[...]
    w12 = w12_ref[...]; b12 = b12_ref[...]
    w2 = w2_ref[...];   b2 = b2_ref[...]

    # Independent row sub-blocks: lets the scheduler overlap the MXU matmuls
    # of sub-block k+1 with the EUP softplus of sub-block k.
    parts = []
    for k in range(n_sub):
        sl = pl.ds(k * rows, rows)
        parts.append(_encode_rows(x_ref[sl, :], mask1_ref[sl, :],
                                  w11, b11, w12, b12, w2, b2))
    h = parts[0] if n_sub == 1 else jnp.concatenate(parts, axis=0)

    theta_ref[...] = _bn_reparam_softmax_dropout(
        h, bn_b_ref[...], eps_ref[...], maskt_ref[...], num_topics)


# ----------------------------------------------------------------------------
# Kernel 2a/2b (v7x path, tile_b < B): batch-tiled encoder + full-batch head
# ----------------------------------------------------------------------------

def encoder_kernel(x_ref, w11_ref, b11_ref, w12_ref, b12_ref,
                   w2_ref, b2_ref, mask1_ref, h_ref, *, sub_rows):
    tb = x_ref.shape[0]
    n_sub = _num_sub_blocks(tb, sub_rows)
    rows = tb // n_sub

    w11 = w11_ref[...]; b11 = b11_ref[...]
    w12 = w12_ref[...]; b12 = b12_ref[...]
    w2 = w2_ref[...];   b2 = b2_ref[...]

    for k in range(n_sub):
        sl = pl.ds(k * rows, rows)
        h_ref[sl, :] = _encode_rows(x_ref[sl, :], mask1_ref[sl, :],
                                    w11, b11, w12, b12, w2, b2)


def head_kernel(h_ref, bn_b_ref, eps_ref, maskt_ref, theta_ref, *, num_topics):
    theta_ref[...] = _bn_reparam_softmax_dropout(
        h_ref[...], bn_b_ref[...], eps_ref[...], maskt_ref[...], num_topics)


# ----------------------------------------------------------------------------
# wrapper
# ----------------------------------------------------------------------------

def prodlda_forward(x, params, key, *, dropout=0.4, tile_b=None, sub_rows=64):
    """Training-mode ProdLDA forward() -> theta.

    tile_b=None (or B): single fused kernel, one dispatch.  Best on
        single-TensorCore v5e / v6e.
    tile_b < B (e.g. B // 2 on v7x): batch-tiled encoder kernel with
        dimension_semantics=("parallel",) (one tile per TensorCore) plus a
        tiny full-batch epilogue so BatchNorm statistics stay exact.
    """
    B, V = x.shape
    E = params["w11"].shape[1]
    T2 = params["w2"].shape[1]
    T = T2 // 2
    if tile_b is None or tile_b >= B:
        tile_b = B
    assert B % tile_b == 0, "batch must be divisible by the batch tile"

    # Host-side randomness: exact torch dropout / randn semantics, and keeps
    # the kernels free of pltpu.prng_* (portable to interpret mode).
    keep = 1.0 - dropout
    k1, k2, k3 = jax.random.split(key, 3)
    inv_keep = jnp.float32(1.0 / keep)
    mask1 = jax.random.bernoulli(k1, keep, (B, E)).astype(jnp.float32) * inv_keep
    eps = jax.random.normal(k2, (B, T), jnp.float32)
    maskt = jax.random.bernoulli(k3, keep, (B, T)).astype(jnp.float32) * inv_keep

    weight_args = (x, params["w11"], params["b11"], params["w12"],
                   params["b12"], params["w2"], params["b2"])

    if tile_b == B:
        # ---- fused single-dispatch path (v5e / v6e default) ----
        full = lambda i: (0, 0)
        return pl.pallas_call(
            functools.partial(prodlda_fused_kernel,
                              num_topics=T, sub_rows=sub_rows),
            out_shape=jax.ShapeDtypeStruct((B, T), jnp.float32),
            grid=(1,),
            in_specs=[
                pl.BlockSpec((B, V), full),
                pl.BlockSpec((V, E), full), pl.BlockSpec((1, E), full),
                pl.BlockSpec((E, E), full), pl.BlockSpec((1, E), full),
                pl.BlockSpec((E, T2), full), pl.BlockSpec((1, T2), full),
                pl.BlockSpec((1, T2), full),
                pl.BlockSpec((B, E), full),
                pl.BlockSpec((B, T), full),
                pl.BlockSpec((B, T), full),
            ],
            out_specs=pl.BlockSpec((B, T), full),
        )(*weight_args, params["bn_bias"], mask1, eps, maskt)

    # ---- batch-tiled path (v7x: tile_b = B // 2 -> one tile per TensorCore) --
    batch_tile = lambda i: (i, 0)
    # Weights/biases never change across grid steps -> single-buffer them
    # (no double-buffer VMEM waste for resident operands).
    resident = lambda shape: pl.BlockSpec(shape, lambda i: (0, 0),
                                          pipeline_mode=pl.Buffered(1))

    h = pl.pallas_call(
        functools.partial(encoder_kernel, sub_rows=sub_rows),
        out_shape=jax.ShapeDtypeStruct((B, T2), jnp.float32),
        grid=(B // tile_b,),
        in_specs=[
            pl.BlockSpec((tile_b, V), batch_tile),
            resident((V, E)), resident((1, E)),
            resident((E, E)), resident((1, E)),
            resident((E, T2)), resident((1, T2)),
            pl.BlockSpec((tile_b, E), batch_tile),
        ],
        out_specs=pl.BlockSpec((tile_b, T2), batch_tile),
        compiler_params=pltpu.CompilerParams(
            dimension_semantics=("parallel",)),
    )(*weight_args, mask1)

    full = lambda i: (0, 0)
    return pl.pallas_call(
        functools.partial(head_kernel, num_topics=T),
        out_shape=jax.ShapeDtypeStruct((B, T), jnp.float32),
        grid=(1,),
        in_specs=[
            pl.BlockSpec((B, T2), full), pl.BlockSpec((1, T2), full),
            pl.BlockSpec((B, T), full), pl.BlockSpec((B, T), full),
        ],
        out_specs=pl.BlockSpec((B, T), full),
    )(h, params["bn_bias"], eps, maskt)


def init_params(key, vocab_size, en_units, num_topics):
    """nn.Linear-style init (uniform +-1/sqrt(fan_in)); weights stored
    transposed (in_features, out_features), matmul operands in bf16,
    biases / BN params in f32.  fc21|fc22 are fused into one (E, 2T) head."""
    keys = jax.random.split(key, 8)

    def linear(kw, kb, fan_in, fan_out):
        bound = 1.0 / jnp.sqrt(jnp.float32(fan_in))
        w = jax.random.uniform(kw, (fan_in, fan_out), jnp.float32, -bound, bound)
        b = jax.random.uniform(kb, (1, fan_out), jnp.float32, -bound, bound)
        return w, b

    w11, b11 = linear(keys[0], keys[1], vocab_size, en_units)
    w12, b12 = linear(keys[2], keys[3], en_units, en_units)
    w21, b21 = linear(keys[4], keys[5], en_units, num_topics)
    w22, b22 = linear(keys[6], keys[7], en_units, num_topics)

    return {
        "w11": w11.astype(jnp.bfloat16), "b11": b11,
        "w12": w12.astype(jnp.bfloat16), "b12": b12,
        # fused mu/logvar head: [fc21 | fc22]
        "w2": jnp.concatenate([w21, w22], axis=1).astype(jnp.bfloat16),
        "b2": jnp.concatenate([b21, b22], axis=1),
        # BN gamma frozen at 1.0 (folded into the kernel); beta init 0,
        # packed as [mean_bn.bias | logvar_bn.bias].
        "bn_bias": jnp.zeros((1, 2 * num_topics), jnp.float32),
    }


if __name__ == "__main__":
    # MXU/lane-friendly small shapes.
    BATCH = 128
    VOCAB = 512
    EN_UNITS = 256
    NUM_TOPICS = 64
    DROPOUT = 0.4

    root = jax.random.PRNGKey(0)
    k_x, k_p, k_noise = jax.random.split(root, 3)

    # Bag-of-words-like non-negative input counts.
    x = jax.random.uniform(k_x, (BATCH, VOCAB), jnp.float32, 0.0, 3.0)
    params = init_params(k_p, VOCAB, EN_UNITS, NUM_TOPICS)

    # Default fused single-dispatch path (v5e/v6e).  On v7x, call with
    # tile_b=BATCH // 2 to shard the encoder across the two TensorCores.
    theta = prodlda_forward(x, params, k_noise, dropout=DROPOUT)
    theta = jax.block_until_ready(theta)

    assert theta.shape == (BATCH, NUM_TOPICS)
    assert bool(jnp.all(jnp.isfinite(theta)))
    print("KERNEL_OK")
</pallas_src>

<mosaic_0001>
module attributes {stable_mosaic.version = 11 : i64} {
  func.func @prodlda_fused_kernel(%arg0: i32, %arg1: memref<128x512xf32, #tpu.memory_space<vmem>>, %arg2: memref<512x256xbf16, #tpu.memory_space<vmem>>, %arg3: memref<1x256xf32, #tpu.memory_space<vmem>>, %arg4: memref<256x256xbf16, #tpu.memory_space<vmem>>, %arg5: memref<1x256xf32, #tpu.memory_space<vmem>>, %arg6: memref<256x128xbf16, #tpu.memory_space<vmem>>, %arg7: memref<1x128xf32, #tpu.memory_space<vmem>>, %arg8: memref<1x128xf32, #tpu.memory_space<vmem>>, %arg9: memref<128x256xf32, #tpu.memory_space<vmem>>, %arg10: memref<128x64xf32, #tpu.memory_space<vmem>>, %arg11: memref<128x64xf32, #tpu.memory_space<vmem>>, %arg12: memref<128x64xf32, #tpu.memory_space<vmem>>) attributes {dimension_semantics = [#tpu.dimension_semantics<arbitrary>], iteration_bounds = array<i64: 1>, scalar_prefetch = 0 : i64, scratch_operands = 0 : i64, tpu.core_type = #tpu.core_type<tc>, window_params = [{pipeline_mode = #tpu.pipeline_mode<synchronous>, transform_indices = @transform_0, window_bounds = array<i64: 128, 512>}, {pipeline_mode = #tpu.pipeline_mode<synchronous>, transform_indices = @transform_1, window_bounds = array<i64: 512, 256>}, {pipeline_mode = #tpu.pipeline_mode<synchronous>, transform_indices = @transform_2, window_bounds = array<i64: 1, 256>}, {pipeline_mode = #tpu.pipeline_mode<synchronous>, transform_indices = @transform_3, window_bounds = array<i64: 256, 256>}, {pipeline_mode = #tpu.pipeline_mode<synchronous>, transform_indices = @transform_4, window_bounds = array<i64: 1, 256>}, {pipeline_mode = #tpu.pipeline_mode<synchronous>, transform_indices = @transform_5, window_bounds = array<i64: 256, 128>}, {pipeline_mode = #tpu.pipeline_mode<synchronous>, transform_indices = @transform_6, window_bounds = array<i64: 1, 128>}, {pipeline_mode = #tpu.pipeline_mode<synchronous>, transform_indices = @transform_7, window_bounds = array<i64: 1, 128>}, {pipeline_mode = #tpu.pipeline_mode<synchronous>, transform_indices = @transform_8, window_bounds = array<i64: 128, 256>}, {pipeline_mode = #tpu.pipeline_mode<synchronous>, transform_indices = @transform_9, window_bounds = array<i64: 128, 64>}, {pipeline_mode = #tpu.pipeline_mode<synchronous>, transform_indices = @transform_10, window_bounds = array<i64: 128, 64>}, {pipeline_mode = #tpu.pipeline_mode<synchronous>, transform_indices = @transform_11, window_bounds = array<i64: 128, 64>}]} {
    %c0 = arith.constant 0 : index
    %c0_0 = arith.constant 0 : index
    %0 = vector.load %arg2[%c0, %c0_0] : memref<512x256xbf16, #tpu.memory_space<vmem>>, vector<512x256xbf16>
    %c0_1 = arith.constant 0 : index
    %c0_2 = arith.constant 0 : index
    %1 = vector.load %arg3[%c0_1, %c0_2] : memref<1x256xf32, #tpu.memory_space<vmem>>, vector<1x256xf32>
    %c0_3 = arith.constant 0 : index
    %c0_4 = arith.constant 0 : index
    %2 = vector.load %arg4[%c0_3, %c0_4] : memref<256x256xbf16, #tpu.memory_space<vmem>>, vector<256x256xbf16>
    %c0_5 = arith.constant 0 : index
    %c0_6 = arith.constant 0 : index
    %3 = vector.load %arg5[%c0_5, %c0_6] : memref<1x256xf32, #tpu.memory_space<vmem>>, vector<1x256xf32>
    %c0_7 = arith.constant 0 : index
    %c0_8 = arith.constant 0 : index
    %4 = vector.load %arg6[%c0_7, %c0_8] : memref<256x128xbf16, #tpu.memory_space<vmem>>, vector<256x128xbf16>
    %c0_9 = arith.constant 0 : index
    %c0_10 = arith.constant 0 : index
    %5 = vector.load %arg7[%c0_9, %c0_10] : memref<1x128xf32, #tpu.memory_space<vmem>>, vector<1x128xf32>
    %c0_11 = arith.constant 0 : index
    %c0_12 = arith.constant 0 : index
    %6 = vector.load %arg1[%c0_11, %c0_12] : memref<128x512xf32, #tpu.memory_space<vmem>>, vector<64x512xf32>
    %c0_13 = arith.constant 0 : index
    %c0_14 = arith.constant 0 : index
    %7 = vector.load %arg9[%c0_13, %c0_14] : memref<128x256xf32, #tpu.memory_space<vmem>>, vector<64x256xf32>
    %8 = arith.truncf %6 : vector<64x512xf32> to vector<64x512xbf16>
    %cst = arith.constant dense<0.000000e+00> : vector<64x256xf32>
    %9 = tpu.matmul %8, %0, %cst {dimension_numbers = #tpu.dot_dimension_numbers<[1], [0], [0], [1], [0, 0, 1, 1], [], []>} : vector<64x512xbf16>, vector<512x256xbf16>, vector<64x256xf32> -> vector<64x256xf32>
    %10 = vector.broadcast %1 : vector<1x256xf32> to vector<64x256xf32>
    %11 = arith.addf %9, %10 : vector<64x256xf32>
    %cst_15 = arith.constant 2.000000e+01 : f32
    %12 = vector.broadcast %cst_15 : f32 to vector<64x256xf32>
    %13 = arith.cmpf ogt, %11, %12 : vector<64x256xf32>
    %cst_16 = arith.constant 2.000000e+01 : f32
    %14 = vector.broadcast %cst_16 : f32 to vector<64x256xf32>
    %15 = arith.minimumf %11, %14 : vector<64x256xf32>
    %16 = math.exp %15 : vector<64x256xf32>
    %17 = math.log1p %16 : vector<64x256xf32>
    %18 = arith.select %13, %11, %17 : vector<64x256xi1>, vector<64x256xf32>
    %19 = arith.truncf %18 : vector<64x256xf32> to vector<64x256xbf16>
    %cst_17 = arith.constant dense<0.000000e+00> : vector<64x256xf32>
    %20 = tpu.matmul %19, %2, %cst_17 {dimension_numbers = #tpu.dot_dimension_numbers<[1], [0], [0], [1], [0, 0, 1, 1], [], []>} : vector<64x256xbf16>, vector<256x256xbf16>, vector<64x256xf32> -> vector<64x256xf32>
    %21 = vector.broadcast %3 : vector<1x256xf32> to vector<64x256xf32>
    %22 = arith.addf %20, %21 : vector<64x256xf32>
    %cst_18 = arith.constant 2.000000e+01 : f32
    %23 = vector.broadcast %cst_18 : f32 to vector<64x256xf32>
    %24 = arith.cmpf ogt, %22, %23 : vector<64x256xf32>
    %cst_19 = arith.constant 2.000000e+01 : f32
    %25 = vector.broadcast %cst_19 : f32 to vector<64x256xf32>
    %26 = arith.minimumf %22, %25 : vector<64x256xf32>
    %27 = math.exp %26 : vector<64x256xf32>
    %28 = math.log1p %27 : vector<64x256xf32>
    %29 = arith.select %24, %22, %28 : vector<64x256xi1>, vector<64x256xf32>
    %30 = arith.mulf %29, %7 : vector<64x256xf32>
    %31 = arith.truncf %30 : vector<64x256xf32> to vector<64x256xbf16>
    %cst_20 = arith.constant dense<0.000000e+00> : vector<64x128xf32>
    %32 = tpu.matmul %31, %4, %cst_20 {dimension_numbers = #tpu.dot_dimension_numbers<[1], [0], [0], [1], [0, 0, 1, 1], [], []>} : vector<64x256xbf16>, vector<256x128xbf16>, vector<64x128xf32> -> vector<64x128xf32>
    %33 = vector.broadcast %5 : vector<1x128xf32> to vector<64x128xf32>
    %34 = arith.addf %32, %33 : vector<64x128xf32>
    %c64 = arith.constant 64 : index
    %c0_21 = arith.constant 0 : index
    %35 = vector.load %arg1[%c64, %c0_21] : memref<128x512xf32, #tpu.memory_space<vmem>>, vector<64x512xf32>
    %c64_22 = arith.constant 64 : index
    %c0_23 = arith.constant 0 : index
    %36 = vector.load %arg9[%c64_22, %c0_23] : memref<128x256xf32, #tpu.memory_space<vmem>>, vector<64x256xf32>
    %37 = arith.truncf %35 : vector<64x512xf32> to vector<64x512xbf16>
    %cst_24 = arith.constant dense<0.000000e+00> : vector<64x256xf32>
    %38 = tpu.matmul %37, %0, %cst_24 {dimension_numbers = #tpu.dot_dimension_numbers<[1], [0], [0], [1], [0, 0, 1, 1], [], []>} : vector<64x512xbf16>, vector<512x256xbf16>, vector<64x256xf32> -> vector<64x256xf32>
    %39 = vector.broadcast %1 : vector<1x256xf32> to vector<64x256xf32>
    %40 = arith.addf %38, %39 : vector<64x256xf32>
    %cst_25 = arith.constant 2.000000e+01 : f32
    %41 = vector.broadcast %cst_25 : f32 to vector<64x256xf32>
    %42 = arith.cmpf ogt, %40, %41 : vector<64x256xf32>
    %cst_26 = arith.constant 2.000000e+01 : f32
    %43 = vector.broadcast %cst_26 : f32 to vector<64x256xf32>
    %44 = arith.minimumf %40, %43 : vector<64x256xf32>
    %45 = math.exp %44 : vector<64x256xf32>
    %46 = math.log1p %45 : vector<64x256xf32>
    %47 = arith.select %42, %40, %46 : vector<64x256xi1>, vector<64x256xf32>
    %48 = arith.truncf %47 : vector<64x256xf32> to vector<64x256xbf16>
    %cst_27 = arith.constant dense<0.000000e+00> : vector<64x256xf32>
    %49 = tpu.matmul %48, %2, %cst_27 {dimension_numbers = #tpu.dot_dimension_numbers<[1], [0], [0], [1], [0, 0, 1, 1], [], []>} : vector<64x256xbf16>, vector<256x256xbf16>, vector<64x256xf32> -> vector<64x256xf32>
    %50 = vector.broadcast %3 : vector<1x256xf32> to vector<64x256xf32>
    %51 = arith.addf %49, %50 : vector<64x256xf32>
    %cst_28 = arith.constant 2.000000e+01 : f32
    %52 = vector.broadcast %cst_28 : f32 to vector<64x256xf32>
    %53 = arith.cmpf ogt, %51, %52 : vector<64x256xf32>
    %cst_29 = arith.constant 2.000000e+01 : f32
    %54 = vector.broadcast %cst_29 : f32 to vector<64x256xf32>
    %55 = arith.minimumf %51, %54 : vector<64x256xf32>
    %56 = math.exp %55 : vector<64x256xf32>
    %57 = math.log1p %56 : vector<64x256xf32>
    %58 = arith.select %53, %51, %57 : vector<64x256xi1>, vector<64x256xf32>
    %59 = arith.mulf %58, %36 : vector<64x256xf32>
    %60 = arith.truncf %59 : vector<64x256xf32> to vector<64x256xbf16>
    %cst_30 = arith.constant dense<0.000000e+00> : vector<64x128xf32>
    %61 = tpu.matmul %60, %4, %cst_30 {dimension_numbers = #tpu.dot_dimension_numbers<[1], [0], [0], [1], [0, 0, 1, 1], [], []>} : vector<64x256xbf16>, vector<256x128xbf16>, vector<64x128xf32> -> vector<64x128xf32>
    %62 = vector.broadcast %5 : vector<1x128xf32> to vector<64x128xf32>
    %63 = arith.addf %61, %62 : vector<64x128xf32>
    %64 = tpu.concatenate %34, %63 in 0 : vector<64x128xf32>, vector<64x128xf32> -> vector<128x128xf32>
    %c0_31 = arith.constant 0 : index
    %c0_32 = arith.constant 0 : index
    %65 = vector.load %arg8[%c0_31, %c0_32] : memref<1x128xf32, #tpu.memory_space<vmem>>, vector<1x128xf32>
    %c0_33 = arith.constant 0 : index
    %c0_34 = arith.constant 0 : index
    %66 = vector.load %arg10[%c0_33, %c0_34] : memref<128x64xf32, #tpu.memory_space<vmem>>, vector<128x64xf32>
    %c0_35 = arith.constant 0 : index
    %c0_36 = arith.constant 0 : index
    %67 = vector.load %arg11[%c0_35, %c0_36] : memref<128x64xf32, #tpu.memory_space<vmem>>, vector<128x64xf32>
    %cst_37 = arith.constant dense<0.000000e+00> : vector<128xf32>
    %68 = vector.multi_reduction <add>, %64, %cst_37 [0] : vector<128x128xf32> to vector<128xf32>
    %69 = vector.shape_cast %68 : vector<128xf32> to vector<1x128xf32>
    %cst_38 = arith.constant 1.280000e+02 : f32
    %70 = vector.broadcast %cst_38 : f32 to vector<1x128xf32>
    %71 = arith.divf %69, %70 : vector<1x128xf32>
    %72 = vector.broadcast %71 : vector<1x128xf32> to vector<128x128xf32>
    %73 = arith.subf %64, %72 : vector<128x128xf32>
    %74 = arith.mulf %73, %73 : vector<128x128xf32>
    %cst_39 = arith.constant dense<0.000000e+00> : vector<128xf32>
    %75 = vector.multi_reduction <add>, %74, %cst_39 [0] : vector<128x128xf32> to vector<128xf32>
    %76 = vector.shape_cast %75 : vector<128xf32> to vector<1x128xf32>
    %cst_40 = arith.constant 1.280000e+02 : f32
    %77 = vector.broadcast %cst_40 : f32 to vector<1x128xf32>
    %78 = arith.divf %76, %77 : vector<1x128xf32>
    %79 = vector.broadcast %71 : vector<1x128xf32> to vector<128x128xf32>
    %80 = arith.subf %64, %79 : vector<128x128xf32>
    %cst_41 = arith.constant 1.000000e-03 : f32
    %81 = vector.broadcast %cst_41 : f32 to vector<1x128xf32>
    %82 = arith.addf %78, %81 : vector<1x128xf32>
    %83 = math.rsqrt %82 : vector<1x128xf32>
    %84 = vector.broadcast %83 : vector<1x128xf32> to vector<128x128xf32>
    %85 = arith.mulf %80, %84 : vector<128x128xf32>
    %86 = vector.broadcast %65 : vector<1x128xf32> to vector<128x128xf32>
    %87 = arith.addf %85, %86 : vector<128x128xf32>
    %88 = vector.extract_strided_slice %87 {offsets = [0, 0], sizes = [128, 64], strides = [1, 1]} : vector<128x128xf32> to vector<128x64xf32>
    %89 = vector.extract_strided_slice %87 {offsets = [0, 64], sizes = [128, 64], strides = [1, 1]} : vector<128x128xf32> to vector<128x64xf32>
    %cst_42 = arith.constant 5.000000e-01 : f32
    %90 = vector.broadcast %cst_42 : f32 to vector<128x64xf32>
    %91 = arith.mulf %90, %89 : vector<128x64xf32>
    %92 = math.exp %91 : vector<128x64xf32>
    %93 = arith.mulf %66, %92 : vector<128x64xf32>
    %94 = arith.addf %88, %93 : vector<128x64xf32>
    %cst_43 = arith.constant dense<0xFF800000> : vector<128xf32>
    %95 = vector.multi_reduction <maximumf>, %94, %cst_43 [1] : vector<128x64xf32> to vector<128xf32>
    %96 = vector.shape_cast %95 : vector<128xf32> to vector<128x1xf32>
    %97 = vector.broadcast %96 : vector<128x1xf32> to vector<128x64xf32>
    %98 = arith.subf %94, %97 : vector<128x64xf32>
    %99 = math.exp %98 : vector<128x64xf32>
    %cst_44 = arith.constant dense<0.000000e+00> : vector<128xf32>
    %100 = vector.multi_reduction <add>, %99, %cst_44 [1] : vector<128x64xf32> to vector<128xf32>
    %101 = vector.shape_cast %100 : vector<128xf32> to vector<128x1xf32>
    %102 = vector.broadcast %101 : vector<128x1xf32> to vector<128x64xf32>
    %103 = arith.divf %99, %102 : vector<128x64xf32>
    %104 = arith.mulf %103, %67 : vector<128x64xf32>
    %c0_45 = arith.constant 0 : index
    %c0_46 = arith.constant 0 : index
    %105 = vector.load %arg12[%c0_45, %c0_46] : memref<128x64xf32, #tpu.memory_space<vmem>>, vector<128x64xf32>
    tpu.vector_store %arg12[%c0_45, %c0_46], %104 {strides = array<i32>} : memref<128x64xf32, #tpu.memory_space<vmem>>, vector<128x64xf32>,
    return
  }
  func.func @transform_0(%arg0: i32) -> (i32, i32) {
    %c0_i32 = arith.constant 0 : i32
    %c0_i32_0 = arith.constant 0 : i32
    %c0_i32_1 = arith.constant 0 : i32
    return %c0_i32, %c0_i32_0 : i32, i32
  }
  func.func @transform_1(%arg0: i32) -> (i32, i32) {
    %c0_i32 = arith.constant 0 : i32
    %c0_i32_0 = arith.constant 0 : i32
    %c0_i32_1 = arith.constant 0 : i32
    return %c0_i32, %c0_i32_0 : i32, i32
  }
  func.func @transform_2(%arg0: i32) -> (i32, i32) {
    %c0_i32 = arith.constant 0 : i32
    %c0_i32_0 = arith.constant 0 : i32
    %c0_i32_1 = arith.constant 0 : i32
    return %c0_i32, %c0_i32_0 : i32, i32
  }
  func.func @transform_3(%arg0: i32) -> (i32, i32) {
    %c0_i32 = arith.constant 0 : i32
    %c0_i32_0 = arith.constant 0 : i32
    %c0_i32_1 = arith.constant 0 : i32
    return %c0_i32, %c0_i32_0 : i32, i32
  }
  func.func @transform_4(%arg0: i32) -> (i32, i32) {
    %c0_i32 = arith.constant 0 : i32
    %c0_i32_0 = arith.constant 0 : i32
    %c0_i32_1 = arith.constant 0 : i32
    return %c0_i32, %c0_i32_0 : i32, i32
  }
  func.func @transform_5(%arg0: i32) -> (i32, i32) {
    %c0_i32 = arith.constant 0 : i32
    %c0_i32_0 = arith.constant 0 : i32
    %c0_i32_1 = arith.constant 0 : i32
    return %c0_i32, %c0_i32_0 : i32, i32
  }
  func.func @transform_6(%arg0: i32) -> (i32, i32) {
    %c0_i32 = arith.constant 0 : i32
    %c0_i32_0 = arith.constant 0 : i32
    %c0_i32_1 = arith.constant 0 : i32
    return %c0_i32, %c0_i32_0 : i32, i32
  }
  func.func @transform_7(%arg0: i32) -> (i32, i32) {
    %c0_i32 = arith.constant 0 : i32
    %c0_i32_0 = arith.constant 0 : i32
    %c0_i32_1 = arith.constant 0 : i32
    return %c0_i32, %c0_i32_0 : i32, i32
  }
  func.func @transform_8(%arg0: i32) -> (i32, i32) {
    %c0_i32 = arith.constant 0 : i32
    %c0_i32_0 = arith.constant 0 : i32
    %c0_i32_1 = arith.constant 0 : i32
    return %c0_i32, %c0_i32_0 : i32, i32
  }
  func.func @transform_9(%arg0: i32) -> (i32, i32) {
    %c0_i32 = arith.constant 0 : i32
    %c0_i32_0 = arith.constant 0 : i32
    %c0_i32_1 = arith.constant 0 : i32
    return %c0_i32, %c0_i32_0 : i32, i32
  }
  func.func @transform_10(%arg0: i32) -> (i32, i32) {
    %c0_i32 = arith.constant 0 : i32
    %c0_i32_0 = arith.constant 0 : i32
    %c0_i32_1 = arith.constant 0 : i32
    return %c0_i32, %c0_i32_0 : i32, i32
  }
  func.func @transform_11(%arg0: i32) -> (i32, i32) {
    %c0_i32 = arith.constant 0 : i32
    %c0_i32_0 = arith.constant 0 : i32
    %c0_i32_1 = arith.constant 0 : i32
    return %c0_i32, %c0_i32_0 : i32, i32
  }
}

</mosaic_0001>

<llo_original>
// kernel: tpu_custom_call.1
$region0: #{tpu_custom_call.1}
  #allocation0 [shape = 'u32[]', space=smem, size = 0x4, offset = 0x4, fixed_abs, tag = 'smem constant byte address 0x4 - core index']
  #allocation1 [shape = 'u32[144,128]{1,0:T(1,128)}', space=vmem, size = 0x12000, scoped, tag = 'internal scratch']
  %s0 = inlined_call_operand.hbm [shape: f32[128,512], index: 0, kind: input, shape index: {}]
  %s1 = inlined_call_operand.hbm [shape: bf16[512,256], index: 1, kind: input, shape index: {}]
  %s2 = inlined_call_operand.vmem [shape: f32[1,256], index: 2, kind: input, shape index: {}]
  %s3 = inlined_call_operand.vmem [shape: bf16[256,256], index: 3, kind: input, shape index: {}]
  %s4 = inlined_call_operand.vmem [shape: f32[1,256], index: 4, kind: input, shape index: {}]
  %s5 = inlined_call_operand.vmem [shape: bf16[256,128], index: 5, kind: input, shape index: {}]
  %s6 = inlined_call_operand.vmem [shape: f32[1,128], index: 6, kind: input, shape index: {}]
  %s7 = inlined_call_operand.vmem [shape: f32[1,128], index: 7, kind: input, shape index: {}]
  %s8 = inlined_call_operand.hbm [shape: f32[128,256], index: 8, kind: input, shape index: {}]
  %s9 = inlined_call_operand.vmem [shape: f32[128,64], index: 9, kind: input, shape index: {}]
  %s10 = inlined_call_operand.vmem [shape: f32[128,64], index: 10, kind: input, shape index: {}]
  %s11 = inlined_call_operand.vmem [shape: f32[128,64], index: 11, kind: output, shape index: {}]
  %s12 = sld [smem:[#allocation0]]
  $region66: #{tpu_custom_call.1} parent=0
    _
  %s14 = ssub.s32 1, %s12
  %s15 = scalar_select 0, %s14, %s12
  $region1: #{tpu_custom_call.1} parent=0
    #allocation2 [shape = 'u8[262144]{0}', space=vmem, size = 0x40000, scoped, tag = 'input window, operand 0, single buffered']
    #allocation3 [shape = 's32[1]{0}', space=sflag, size = 0x4, scoped, tag = 'scoped memory for tpu_custom_call.1']
    #allocation4 [shape = 'u8[262144]{0}', space=vmem, size = 0x40000, scoped, tag = 'input window, operand 1, single buffered']
    #allocation5 [shape = 's32[1]{0}', space=sflag, size = 0x4, scoped, tag = 'scoped memory for tpu_custom_call.1']
    #allocation6 [shape = 'u8[131072]{0}', space=vmem, size = 0x20000, scoped, tag = 'input window, operand 8, single buffered']
    %16 = vsyncpa [#allocation3], 0
    %17 = vsyncpa [#allocation5], 0
    // Predicated region
    $region2: #{tpu_custom_call.1} parent=1 // pred_check
      _
    $region3: #{tpu_custom_call.1} parent=1 // pred_check_branch
      %19 = sbr.rel (0) target = $region5
    $region4: #{tpu_custom_call.1} parent=1 // pred_region
      %s21 = ssub.s32 8192, 8192
      %22 = vsyncadd [#allocation3], %s21
      %s23 = sshll.u32 [#allocation2], 4
      %s24 = int_to_ptr.vmem [resolvable:$true] %s23
      %29 = dma.hbm_to_vmem [thread:$0]  %s0, 8192, %s24, [#allocation3], 512, 512, 32
    $region5: #{tpu_custom_call.1} parent=1 // pred_fallthru
      _
    // Predicated region
    $region6: #{tpu_custom_call.1} parent=1 // pred_check
      _
    $region7: #{tpu_custom_call.1} parent=1 // pred_check_branch
      %31 = sbr.rel (0) target = $region9
    $region8: #{tpu_custom_call.1} parent=1 // pred_region
      %s33 = ssub.s32 8192, 8192
      %34 = vsyncadd [#allocation5], %s33
      %s35 = sshll.u32 [#allocation4], 4
      %s36 = int_to_ptr.vmem [resolvable:$true] %s35
      %41 = dma.hbm_to_vmem [thread:$0]  %s1, 8192, %s36, [#allocation5], 128, 128, 8
    $region9: #{tpu_custom_call.1} parent=1 // pred_fallthru
      _
    // Predicated region
    $region10: #{tpu_custom_call.1} parent=1 // pred_check
      _
    $region11: #{tpu_custom_call.1} parent=1 // pred_check_branch
      %43 = sbr.rel (0) target = $region13
    $region12: #{tpu_custom_call.1} parent=1 // pred_region
      _
    $region13: #{tpu_custom_call.1} parent=1 // pred_fallthru
      _
    // Predicated region
    $region14: #{tpu_custom_call.1} parent=1 // pred_check
      _
    $region15: #{tpu_custom_call.1} parent=1 // pred_check_branch
      %45 = sbr.rel (0) target = $region17
    $region16: #{tpu_custom_call.1} parent=1 // pred_region
      _
    $region17: #{tpu_custom_call.1} parent=1 // pred_fallthru
      _
    // Predicated region
    $region18: #{tpu_custom_call.1} parent=1 // pred_check
      _
    $region19: #{tpu_custom_call.1} parent=1 // pred_check_branch
      %47 = sbr.rel (0) target = $region21
    $region20: #{tpu_custom_call.1} parent=1 // pred_region
      _
    $region21: #{tpu_custom_call.1} parent=1 // pred_fallthru
      _
    // Predicated region
    $region22: #{tpu_custom_call.1} parent=1 // pred_check
      _
    $region23: #{tpu_custom_call.1} parent=1 // pred_check_branch
      %49 = sbr.rel (0) target = $region25
    $region24: #{tpu_custom_call.1} parent=1 // pred_region
      _
    $region25: #{tpu_custom_call.1} parent=1 // pred_fallthru
      _
    // Predicated region
    $region26: #{tpu_custom_call.1} parent=1 // pred_check
      _
    $region27: #{tpu_custom_call.1} parent=1 // pred_check_branch
      %51 = sbr.rel (0) target = $region29
    $region28: #{tpu_custom_call.1} parent=1 // pred_region
      _
    $region29: #{tpu_custom_call.1} parent=1 // pred_fallthru
      _
    // Predicated region
    $region30: #{tpu_custom_call.1} parent=1 // pred_check
      _
    $region31: #{tpu_custom_call.1} parent=1 // pred_check_branch
      %53 = sbr.rel (0) target = $region33
    $region32: #{tpu_custom_call.1} parent=1 // pred_region
      _
    $region33: #{tpu_custom_call.1} parent=1 // pred_fallthru
      _
    // Predicated region
    $region34: #{tpu_custom_call.1} parent=1 // pred_check
      _
    $region35: #{tpu_custom_call.1} parent=1 // pred_check_branch
      %55 = sbr.rel (0) target = $region37
    $region36: #{tpu_custom_call.1} parent=1 // pred_region
      %s57 = ssub.s32 4096, 4096
      %58 = vsyncadd [#allocation5], %s57
      %s59 = sshll.u32 [#allocation6], 4
      %s60 = int_to_ptr.vmem [resolvable:$true] %s59
      %65 = dma.hbm_to_vmem [thread:$0]  %s8, 4096, %s60, [#allocation5], 256, 256, 16
    $region37: #{tpu_custom_call.1} parent=1 // pred_fallthru
      _
    // Predicated region
    $region38: #{tpu_custom_call.1} parent=1 // pred_check
      _
    $region39: #{tpu_custom_call.1} parent=1 // pred_check_branch
      %67 = sbr.rel (0) target = $region41
    $region40: #{tpu_custom_call.1} parent=1 // pred_region
      _
    $region41: #{tpu_custom_call.1} parent=1 // pred_fallthru
      _
    // Predicated region
    $region42: #{tpu_custom_call.1} parent=1 // pred_check
      _
    $region43: #{tpu_custom_call.1} parent=1 // pred_check_branch
      %69 = sbr.rel (0) target = $region45
    $region44: #{tpu_custom_call.1} parent=1 // pred_region
      _
    $region45: #{tpu_custom_call.1} parent=1 // pred_fallthru
      _
    // Predicated region
    $region46: #{tpu_custom_call.1} parent=1 // pred_check
      _
    $region47: #{tpu_custom_call.1} parent=1 // pred_check_branch
      %71 = sbr.rel (0) target = $region49
    $region48: #{tpu_custom_call.1} parent=1 // pred_region
      %72 = dma.done [#allocation3], 8192
    $region49: #{tpu_custom_call.1} parent=1 // pred_fallthru
      _
    // Predicated region
    $region50: #{tpu_custom_call.1} parent=1 // pred_check
      _
    $region51: #{tpu_custom_call.1} parent=1 // pred_check_branch
      %74 = sbr.rel (0) target = $region53
    $region52: #{tpu_custom_call.1} parent=1 // pred_region
      %75 = dma.done [#allocation5], 8192
    $region53: #{tpu_custom_call.1} parent=1 // pred_fallthru
      _
    // Predicated region
    $region54: #{tpu_custom_call.1} parent=1 // pred_check
      _
    $region55: #{tpu_custom_call.1} parent=1 // pred_check_branch
      %77 = sbr.rel (0) target = $region57
    $region56: #{tpu_custom_call.1} parent=1 // pred_region
      %78 = dma.done [#allocation5], 4096
    $region57: #{tpu_custom_call.1} parent=1 // pred_fallthru
      _
    %v80 = vld [vmem:[#allocation4] sm:$0xff]
    %v81 = vld [vmem:[#allocation4 + $0x8] sm:$0xff]
    %v82 = vld [vmem:[#allocation4 + $0x10] sm:$0xff]
    %v83 = vld [vmem:[#allocation4 + $0x18] sm:$0xff]
    %v84 = vld [vmem:[#allocation4 + $0x20] sm:$0xff]
    %v85 = vld [vmem:[#allocation4 + $0x28] sm:$0xff]
    %v86 = vld [vmem:[#allocation4 + $0x30] sm:$0xff]
    %v87 = vld [vmem:[#allocation4 + $0x38] sm:$0xff]
    %v88 = vld [vmem:[#allocation4 + $0x40] sm:$0xff]
    %v89 = vld [vmem:[#allocation4 + $0x48] sm:$0xff]
    %v90 = vld [vmem:[#allocation4 + $0x50] sm:$0xff]
    %v91 = vld [vmem:[#allocation4 + $0x58] sm:$0xff]
    %v92 = vld [vmem:[#allocation4 + $0x60] sm:$0xff]
    %v93 = vld [vmem:[#allocation4 + $0x68] sm:$0xff]
    %v94 = vld [vmem:[#allocation4 + $0x70] sm:$0xff]
    %v95 = vld [vmem:[#allocation4 + $0x78] sm:$0xff]
    %v96 = vld [vmem:[#allocation4 + $0x80] sm:$0xff]
    %v97 = vld [vmem:[#allocation4 + $0x88] sm:$0xff]
    %v98 = vld [vmem:[#allocation4 + $0x90] sm:$0xff]
    %v99 = vld [vmem:[#allocation4 + $0x98] sm:$0xff]
    %v100 = vld [vmem:[#allocation4 + $0xa0] sm:$0xff]
    %v101 = vld [vmem:[#allocation4 + $0xa8] sm:$0xff]
    %v102 = vld [vmem:[#allocation4 + $0xb0] sm:$0xff]
    %v103 = vld [vmem:[#allocation4 + $0xb8] sm:$0xff]
    %v104 = vld [vmem:[#allocation4 + $0xc0] sm:$0xff]
    %v105 = vld [vmem:[#allocation4 + $0xc8] sm:$0xff]
    %v106 = vld [vmem:[#allocation4 + $0xd0] sm:$0xff]
    %v107 = vld [vmem:[#allocation4 + $0xd8] sm:$0xff]
    %v108 = vld [vmem:[#allocation4 + $0xe0] sm:$0xff]
    %v109 = vld [vmem:[#allocation4 + $0xe8] sm:$0xff]
    %v110 = vld [vmem:[#allocation4 + $0xf0] sm:$0xff]
    %v111 = vld [vmem:[#allocation4 + $0xf8] sm:$0xff]
    %v112 = vld [vmem:[#allocation4 + $0x100] sm:$0xff]
    %v113 = vld [vmem:[#allocation4 + $0x108] sm:$0xff]
    %v114 = vld [vmem:[#allocation4 + $0x110] sm:$0xff]
    %v115 = vld [vmem:[#allocation4 + $0x118] sm:$0xff]
    %v116 = vld [vmem:[#allocation4 + $0x120] sm:$0xff]
    %v117 = vld [vmem:[#allocation4 + $0x128] sm:$0xff]
    %v118 = vld [vmem:[#allocation4 + $0x130] sm:$0xff]
    %v119 = vld [vmem:[#allocation4 + $0x138] sm:$0xff]
    %v120 = vld [vmem:[#allocation4 + $0x140] sm:$0xff]
    %v121 = vld [vmem:[#allocation4 + $0x148] sm:$0xff]
    %v122 = vld [vmem:[#allocation4 + $0x150] sm:$0xff]
    %v123 = vld [vmem:[#allocation4 + $0x158] sm:$0xff]
    %v124 = vld [vmem:[#allocation4 + $0x160] sm:$0xff]
    %v125 = vld [vmem:[#allocation4 + $0x168] sm:$0xff]
    %v126 = vld [vmem:[#allocation4 + $0x170] sm:$0xff]
    %v127 = vld [vmem:[#allocation4 + $0x178] sm:$0xff]
    %v128 = vld [vmem:[#allocation4 + $0x180] sm:$0xff]
    %v129 = vld [vmem:[#allocation4 + $0x188] sm:$0xff]
    %v130 = vld [vmem:[#allocation4 + $0x190] sm:$0xff]
    %v131 = vld [vmem:[#allocation4 + $0x198] sm:$0xff]
    %v132 = vld [vmem:[#allocation4 + $0x1a0] sm:$0xff]
    %v133 = vld [vmem:[#allocation4 + $0x1a8] sm:$0xff]
    %v134 = vld [vmem:[#allocation4 + $0x1b0] sm:$0xff]
    %v135 = vld [vmem:[#allocation4 + $0x1b8] sm:$0xff]
    %v136 = vld [vmem:[#allocation4 + $0x1c0] sm:$0xff]
    %v137 = vld [vmem:[#allocation4 + $0x1c8] sm:$0xff]
    %v138 = vld [vmem:[#allocation4 + $0x1d0] sm:$0xff]
    %v139 = vld [vmem:[#allocation4 + $0x1d8] sm:$0xff]
    %v140 = vld [vmem:[#allocation4 + $0x1e0] sm:$0xff]
    %v141 = vld [vmem:[#allocation4 + $0x1e8] sm:$0xff]
    %v142 = vld [vmem:[#allocation4 + $0x1f0] sm:$0xff]
    %v143 = vld [vmem:[#allocation4 + $0x1f8] sm:$0xff]
    %v144 = vld [vmem:[%s2] sm:$0x3]
    %v145 = vld [vmem:[%s3] sm:$0xff]
    %v146 = vld [vmem:[%s3 + $0x8] sm:$0xff]
    %v147 = vld [vmem:[%s3 + $0x10] sm:$0xff]
    %v148 = vld [vmem:[%s3 + $0x18] sm:$0xff]
    %v149 = vld [vmem:[%s3 + $0x20] sm:$0xff]
    %v150 = vld [vmem:[%s3 + $0x28] sm:$0xff]
    %v151 = vld [vmem:[%s3 + $0x30] sm:$0xff]
    %v152 = vld [vmem:[%s3 + $0x38] sm:$0xff]
    %v153 = vld [vmem:[%s3 + $0x40] sm:$0xff]
    %v154 = vld [vmem:[%s3 + $0x48] sm:$0xff]
    %v155 = vld [vmem:[%s3 + $0x50] sm:$0xff]
    %v156 = vld [vmem:[%s3 + $0x58] sm:$0xff]
    %v157 = vld [vmem:[%s3 + $0x60] sm:$0xff]
    %v158 = vld [vmem:[%s3 + $0x68] sm:$0xff]
    %v159 = vld [vmem:[%s3 + $0x70] sm:$0xff]
    %v160 = vld [vmem:[%s3 + $0x78] sm:$0xff]
    %v161 = vld [vmem:[%s3 + $0x80] sm:$0xff]
    %v162 = vld [vmem:[%s3 + $0x88] sm:$0xff]
    %v163 = vld [vmem:[%s3 + $0x90] sm:$0xff]
    %v164 = vld [vmem:[%s3 + $0x98] sm:$0xff]
    %v165 = vld [vmem:[%s3 + $0xa0] sm:$0xff]
    %v166 = vld [vmem:[%s3 + $0xa8] sm:$0xff]
    %v167 = vld [vmem:[%s3 + $0xb0] sm:$0xff]
    %v168 = vld [vmem:[%s3 + $0xb8] sm:$0xff]
    %v169 = vld [vmem:[%s3 + $0xc0] sm:$0xff]
    %v170 = vld [vmem:[%s3 + $0xc8] sm:$0xff]
    %v171 = vld [vmem:[%s3 + $0xd0] sm:$0xff]
    %v172 = vld [vmem:[%s3 + $0xd8] sm:$0xff]
    %v173 = vld [vmem:[%s3 + $0xe0] sm:$0xff]
    %v174 = vld [vmem:[%s3 + $0xe8] sm:$0xff]
    %v175 = vld [vmem:[%s3 + $0xf0] sm:$0xff]
    %v176 = vld [vmem:[%s3 + $0xf8] sm:$0xff]
    %v177 = vld [vmem:[%s4] sm:$0x3]
    %v178 = vld [vmem:[%s5] sm:$0xf]
    %v179 = vld [vmem:[%s5 + $0x4] sm:$0xf]
    %v180 = vld [vmem:[%s5 + $0x8] sm:$0xf]
    %v181 = vld [vmem:[%s5 + $0xc] sm:$0xf]
    %v182 = vld [vmem:[%s5 + $0x10] sm:$0xf]
    %v183 = vld [vmem:[%s5 + $0x14] sm:$0xf]
    %v184 = vld [vmem:[%s5 + $0x18] sm:$0xf]
    %v185 = vld [vmem:[%s5 + $0x1c] sm:$0xf]
    %v186 = vld [vmem:[%s5 + $0x20] sm:$0xf]
    %v187 = vld [vmem:[%s5 + $0x24] sm:$0xf]
    %v188 = vld [vmem:[%s5 + $0x28] sm:$0xf]
    %v189 = vld [vmem:[%s5 + $0x2c] sm:$0xf]
    %v190 = vld [vmem:[%s5 + $0x30] sm:$0xf]
    %v191 = vld [vmem:[%s5 + $0x34] sm:$0xf]
    %v192 = vld [vmem:[%s5 + $0x38] sm:$0xf]
    %v193 = vld [vmem:[%s5 + $0x3c] sm:$0xf]
    %v194 = vld [vmem:[%s5 + $0x40] sm:$0xf]
    %v195 = vld [vmem:[%s5 + $0x44] sm:$0xf]
    %v196 = vld [vmem:[%s5 + $0x48] sm:$0xf]
    %v197 = vld [vmem:[%s5 + $0x4c] sm:$0xf]
    %v198 = vld [vmem:[%s5 + $0x50] sm:$0xf]
    %v199 = vld [vmem:[%s5 + $0x54] sm:$0xf]
    %v200 = vld [vmem:[%s5 + $0x58] sm:$0xf]
    %v201 = vld [vmem:[%s5 + $0x5c] sm:$0xf]
    %v202 = vld [vmem:[%s5 + $0x60] sm:$0xf]
    %v203 = vld [vmem:[%s5 + $0x64] sm:$0xf]
    %v204 = vld [vmem:[%s5 + $0x68] sm:$0xf]
    %v205 = vld [vmem:[%s5 + $0x6c] sm:$0xf]
    %v206 = vld [vmem:[%s5 + $0x70] sm:$0xf]
    %v207 = vld [vmem:[%s5 + $0x74] sm:$0xf]
    %v208 = vld [vmem:[%s5 + $0x78] sm:$0xf]
    %v209 = vld [vmem:[%s5 + $0x7c] sm:$0xf]
    %v210 = vld [vmem:[%s6] sm:$0x1]
    %v211 = vld [vmem:[#allocation2] sm:$0xff]
    %v212 = vld [vmem:[#allocation2 + $0x8] sm:$0xff]
    %v213 = vld [vmem:[#allocation2 + $0x10] sm:$0xff]
    %v214 = vld [vmem:[#allocation2 + $0x18] sm:$0xff]
    %v215 = vld [vmem:[#allocation2 + $0x20] sm:$0xff]
    %v216 = vld [vmem:[#allocation2 + $0x28] sm:$0xff]
    %v217 = vld [vmem:[#allocation2 + $0x30] sm:$0xff]
    %v218 = vld [vmem:[#allocation2 + $0x38] sm:$0xff]
    %v219 = vld [vmem:[#allocation2 + $0x40] sm:$0xff]
    %v220 = vld [vmem:[#allocation2 + $0x48] sm:$0xff]
    %v221 = vld [vmem:[#allocation2 + $0x50] sm:$0xff]
    %v222 = vld [vmem:[#allocation2 + $0x58] sm:$0xff]
    %v223 = vld [vmem:[#allocation2 + $0x60] sm:$0xff]
    %v224 = vld [vmem:[#allocation2 + $0x68] sm:$0xff]
    %v225 = vld [vmem:[#allocation2 + $0x70] sm:$0xff]
    %v226 = vld [vmem:[#allocation2 + $0x78] sm:$0xff]
    %v227 = vld [vmem:[#allocation2 + $0x80] sm:$0xff]
    %v228 = vld [vmem:[#allocation2 + $0x88] sm:$0xff]
    %v229 = vld [vmem:[#allocation2 + $0x90] sm:$0xff]
    %v230 = vld [vmem:[#allocation2 + $0x98] sm:$0xff]
    %v231 = vld [vmem:[#allocation2 + $0xa0] sm:$0xff]
    %v232 = vld [vmem:[#allocation2 + $0xa8] sm:$0xff]
    %v233 = vld [vmem:[#allocation2 + $0xb0] sm:$0xff]
    %v234 = vld [vmem:[#allocation2 + $0xb8] sm:$0xff]
    %v235 = vld [vmem:[#allocation2 + $0xc0] sm:$0xff]
    %v236 = vld [vmem:[#allocation2 + $0xc8] sm:$0xff]
    %v237 = vld [vmem:[#allocation2 + $0xd0] sm:$0xff]
    %v238 = vld [vmem:[#allocation2 + $0xd8] sm:$0xff]
    %v239 = vld [vmem:[#allocation2 + $0xe0] sm:$0xff]
    %v240 = vld [vmem:[#allocation2 + $0xe8] sm:$0xff]
    %v241 = vld [vmem:[#allocation2 + $0xf0] sm:$0xff]
    %v242 = vld [vmem:[#allocation2 + $0xf8] sm:$0xff]
    %v243 = vld [vmem:[#allocation6] sm:$0xff]
    %v244 = vld [vmem:[#allocation6 + $0x8] sm:$0xff]
    %v245 = vld [vmem:[#allocation6 + $0x10] sm:$0xff]
    %v246 = vld [vmem:[#allocation6 + $0x18] sm:$0xff]
    %v247 = vld [vmem:[#allocation6 + $0x20] sm:$0xff]
    %v248 = vld [vmem:[#allocation6 + $0x28] sm:$0xff]
    %v249 = vld [vmem:[#allocation6 + $0x30] sm:$0xff]
    %v250 = vld [vmem:[#allocation6 + $0x38] sm:$0xff]
    %v251 = vld [vmem:[#allocation6 + $0x40] sm:$0xff]
    %v252 = vld [vmem:[#allocation6 + $0x48] sm:$0xff]
    %v253 = vld [vmem:[#allocation6 + $0x50] sm:$0xff]
    %v254 = vld [vmem:[#allocation6 + $0x58] sm:$0xff]
    %v255 = vld [vmem:[#allocation6 + $0x60] sm:$0xff]
    %v256 = vld [vmem:[#allocation6 + $0x68] sm:$0xff]
    %v257 = vld [vmem:[#allocation6 + $0x70] sm:$0xff]
    %v258 = vld [vmem:[#allocation6 + $0x78] sm:$0xff]
    %v259 = vpack.c.bf16 %v215, %v211
    %v260 = vpack.c.bf16 %v216, %v212
    %v261 = vpack.c.bf16 %v217, %v213
    %v262 = vpack.c.bf16 %v218, %v214
    %v263 = vpack.c.bf16 %v223, %v219
    %v264 = vpack.c.bf16 %v224, %v220
    %v265 = vpack.c.bf16 %v225, %v221
    %v266 = vpack.c.bf16 %v226, %v222
    %v267 = vpack.c.bf16 %v231, %v227
    %v268 = vpack.c.bf16 %v232, %v228
    %v269 = vpack.c.bf16 %v233, %v229
    %v270 = vpack.c.bf16 %v234, %v230
    %v271 = vpack.c.bf16 %v239, %v235
    %v272 = vpack.c.bf16 %v240, %v236
    %v273 = vpack.c.bf16 %v241, %v237
    %v274 = vpack.c.bf16 %v242, %v238
    %v276 = vlaneseq
    %v277 = vshrl.u32 %v276, 7
    %v278 = vsub.s32 0, %v277
    %v279 = vrot.slane %v144, %v278
    %v280 = vlaneseq
    %v281 = vshrl.u32 %v280, 7
    %v282 = vsub.s32 1, %v281
    %v283 = vrot.slane %v144, %v282
    %v350 = vunpack.c.l.b16 %v80
    %v351 = vunpack.c.h.b16 %v80
    %v352 = vunpack.c.l.b16 %v81
    %v353 = vunpack.c.h.b16 %v81
    %v354 = vunpack.c.l.b16 %v82
    %v355 = vunpack.c.h.b16 %v82
    %v356 = vunpack.c.l.b16 %v83
    %v357 = vunpack.c.h.b16 %v83
    %v358 = vunpack.c.l.b16 %v84
    %v359 = vunpack.c.h.b16 %v84
    %v360 = vunpack.c.l.b16 %v85
    %v361 = vunpack.c.h.b16 %v85
    %v362 = vunpack.c.l.b16 %v86
    %v363 = vunpack.c.h.b16 %v86
    %v364 = vunpack.c.l.b16 %v87
    %v365 = vunpack.c.h.b16 %v87
    %v366 = vunpack.c.l.b16 %v88
    %v367 = vunpack.c.h.b16 %v88
    %v368 = vunpack.c.l.b16 %v89
    %v369 = vunpack.c.h.b16 %v89
    %v370 = vunpack.c.l.b16 %v90
    %v371 = vunpack.c.h.b16 %v90
    %v372 = vunpack.c.l.b16 %v91
    %v373 = vunpack.c.h.b16 %v91
    %v374 = vunpack.c.l.b16 %v92
    %v375 = vunpack.c.h.b16 %v92
    %v376 = vunpack.c.l.b16 %v93
    %v377 = vunpack.c.h.b16 %v93
    %v378 = vunpack.c.l.b16 %v94
    %v379 = vunpack.c.h.b16 %v94
    %v380 = vunpack.c.l.b16 %v95
    %v381 = vunpack.c.h.b16 %v95
    %v382 = vunpack.c.l.b16 %v96
    %v383 = vunpack.c.h.b16 %v96
    %v384 = vunpack.c.l.b16 %v97
    %v385 = vunpack.c.h.b16 %v97
    %v386 = vunpack.c.l.b16 %v98
    %v387 = vunpack.c.h.b16 %v98
    %v388 = vunpack.c.l.b16 %v99
    %v389 = vunpack.c.h.b16 %v99
    %v390 = vunpack.c.l.b16 %v100
    %v391 = vunpack.c.h.b16 %v100
    %v392 = vunpack.c.l.b16 %v101
    %v393 = vunpack.c.h.b16 %v101
    %v394 = vunpack.c.l.b16 %v102
    %v395 = vunpack.c.h.b16 %v102
    %v396 = vunpack.c.l.b16 %v103
    %v397 = vunpack.c.h.b16 %v103
    %v398 = vunpack.c.l.b16 %v104
    %v399 = vunpack.c.h.b16 %v104
    %v400 = vunpack.c.l.b16 %v105
    %v401 = vunpack.c.h.b16 %v105
    %v402 = vunpack.c.l.b16 %v106
    %v403 = vunpack.c.h.b16 %v106
    %v404 = vunpack.c.l.b16 %v107
    %v405 = vunpack.c.h.b16 %v107
    %v406 = vunpack.c.l.b16 %v108
    %v407 = vunpack.c.h.b16 %v108
    %v408 = vunpack.c.l.b16 %v109
    %v409 = vunpack.c.h.b16 %v109
    %v410 = vunpack.c.l.b16 %v110
    %v411 = vunpack.c.h.b16 %v110
    %v412 = vunpack.c.l.b16 %v111
    %v413 = vunpack.c.h.b16 %v111
    %v414 = vunpack.c.l.b16 %v112
    %v415 = vunpack.c.h.b16 %v112
    %v416 = vunpack.c.l.b16 %v113
    %v417 = vunpack.c.h.b16 %v113
    %v418 = vunpack.c.l.b16 %v114
    %v419 = vunpack.c.h.b16 %v114
    %v420 = vunpack.c.l.b16 %v115
    %v421 = vunpack.c.h.b16 %v115
    %v422 = vunpack.c.l.b16 %v116
    %v423 = vunpack.c.h.b16 %v116
    %v424 = vunpack.c.l.b16 %v117
    %v425 = vunpack.c.h.b16 %v117
    %v426 = vunpack.c.l.b16 %v118
    %v427 = vunpack.c.h.b16 %v118
    %v428 = vunpack.c.l.b16 %v119
    %v429 = vunpack.c.h.b16 %v119
    %v430 = vunpack.c.l.b16 %v120
    %v431 = vunpack.c.h.b16 %v120
    %v432 = vunpack.c.l.b16 %v121
    %v433 = vunpack.c.h.b16 %v121
    %v434 = vunpack.c.l.b16 %v122
    %v435 = vunpack.c.h.b16 %v122
    %v436 = vunpack.c.l.b16 %v123
    %v437 = vunpack.c.h.b16 %v123
    %v438 = vunpack.c.l.b16 %v124
    %v439 = vunpack.c.h.b16 %v124
    %v440 = vunpack.c.l.b16 %v125
    %v441 = vunpack.c.h.b16 %v125
    %v442 = vunpack.c.l.b16 %v126
    %v443 = vunpack.c.h.b16 %v126
    %v444 = vunpack.c.l.b16 %v127
    %v445 = vunpack.c.h.b16 %v127
    %v446 = vunpack.c.l.b16 %v128
    %v447 = vunpack.c.h.b16 %v128
    %v448 = vunpack.c.l.b16 %v129
    %v449 = vunpack.c.h.b16 %v129
    %v450 = vunpack.c.l.b16 %v130
    %v451 = vunpack.c.h.b16 %v130
    %v452 = vunpack.c.l.b16 %v131
    %v453 = vunpack.c.h.b16 %v131
    %v454 = vunpack.c.l.b16 %v132
    %v455 = vunpack.c.h.b16 %v132
    %v456 = vunpack.c.l.b16 %v133
    %v457 = vunpack.c.h.b16 %v133
    %v458 = vunpack.c.l.b16 %v134
    %v459 = vunpack.c.h.b16 %v134
    %v460 = vunpack.c.l.b16 %v135
    %v461 = vunpack.c.h.b16 %v135
    %v462 = vunpack.c.l.b16 %v136
    %v463 = vunpack.c.h.b16 %v136
    %v464 = vunpack.c.l.b16 %v137
    %v465 = vunpack.c.h.b16 %v137
    %v466 = vunpack.c.l.b16 %v138
    %v467 = vunpack.c.h.b16 %v138
    %v468 = vunpack.c.l.b16 %v139
    %v469 = vunpack.c.h.b16 %v139
    %v470 = vunpack.c.l.b16 %v140
    %v471 = vunpack.c.h.b16 %v140
    %v472 = vunpack.c.l.b16 %v141
    %v473 = vunpack.c.h.b16 %v141
    %v474 = vunpack.c.l.b16 %v142
    %v475 = vunpack.c.h.b16 %v142
    %v476 = vunpack.c.l.b16 %v143
    %v477 = vunpack.c.h.b16 %v143
    %v478 = vpack.c.b16 %v352, %v350
    %v479 = vpack.c.b16 %v353, %v351
    %v480 = vpack.c.b16 %v356, %v354
    %v481 = vpack.c.b16 %v357, %v355
    %v482 = vpack.c.b16 %v360, %v358
    %v483 = vpack.c.b16 %v361, %v359
    %v484 = vpack.c.b16 %v364, %v362
    %v485 = vpack.c.b16 %v365, %v363
    %v486 = vpack.c.b16 %v368, %v366
    %v487 = vpack.c.b16 %v369, %v367
    %v488 = vpack.c.b16 %v372, %v370
    %v489 = vpack.c.b16 %v373, %v371
    %v490 = vpack.c.b16 %v376, %v374
    %v491 = vpack.c.b16 %v377, %v375
    %v492 = vpack.c.b16 %v380, %v378
    %v493 = vpack.c.b16 %v381, %v379
    %v494 = vpack.c.b16 %v384, %v382
    %v495 = vpack.c.b16 %v385, %v383
    %v496 = vpack.c.b16 %v388, %v386
    %v497 = vpack.c.b16 %v389, %v387
    %v498 = vpack.c.b16 %v392, %v390
    %v499 = vpack.c.b16 %v393, %v391
    %v500 = vpack.c.b16 %v396, %v394
    %v501 = vpack.c.b16 %v397, %v395
    %v502 = vpack.c.b16 %v400, %v398
    %v503 = vpack.c.b16 %v401, %v399
    %v504 = vpack.c.b16 %v404, %v402
    %v505 = vpack.c.b16 %v405, %v403
    %v506 = vpack.c.b16 %v408, %v406
    %v507 = vpack.c.b16 %v409, %v407
    %v508 = vpack.c.b16 %v412, %v410
    %v509 = vpack.c.b16 %v413, %v411
    %v510 = vpack.c.b16 %v416, %v414
    %v511 = vpack.c.b16 %v417, %v415
    %v512 = vpack.c.b16 %v420, %v418
    %v513 = vpack.c.b16 %v421, %v419
    %v514 = vpack.c.b16 %v424, %v422
    %v515 = vpack.c.b16 %v425, %v423
    %v516 = vpack.c.b16 %v428, %v426
    %v517 = vpack.c.b16 %v429, %v427
    %v518 = vpack.c.b16 %v432, %v430
    %v519 = vpack.c.b16 %v433, %v431
    %v520 = vpack.c.b16 %v436, %v434
    %v521 = vpack.c.b16 %v437, %v435
    %v522 = vpack.c.b16 %v440, %v438
    %v523 = vpack.c.b16 %v441, %v439
    %v524 = vpack.c.b16 %v444, %v442
    %v525 = vpack.c.b16 %v445, %v443
    %v526 = vpack.c.b16 %v448, %v446
    %v527 = vpack.c.b16 %v449, %v447
    %v528 = vpack.c.b16 %v452, %v450
    %v529 = vpack.c.b16 %v453, %v451
    %v530 = vpack.c.b16 %v456, %v454
    %v531 = vpack.c.b16 %v457, %v455
    %v532 = vpack.c.b16 %v460, %v458
    %v533 = vpack.c.b16 %v461, %v459
    %v534 = vpack.c.b16 %v464, %v462
    %v535 = vpack.c.b16 %v465, %v463
    %v536 = vpack.c.b16 %v468, %v466
    %v537 = vpack.c.b16 %v469, %v467
    %v538 = vpack.c.b16 %v472, %v470
    %v539 = vpack.c.b16 %v473, %v471
    %v540 = vpack.c.b16 %v476, %v474
    %v541 = vpack.c.b16 %v477, %v475
    %606 = vmatprep.subr.bf16.mxu0 %v479
    %607 = vmatpush1.bf16.msra.mxu0 %v478
    %608 = vmatprep.subr.bf16.mxu0 %v481
    %609 = vmatpush1.bf16.msra.mxu0 %v480
    %610 = vmatprep.subr.bf16.mxu0 %v483
    %611 = vmatpush1.bf16.msra.mxu0 %v482
    %612 = vmatprep.subr.bf16.mxu0 %v485
    %613 = vmatpush1.bf16.msra.mxu0 %v484
    %614 = vmatprep.subr.bf16.mxu0 %v487
    %615 = vmatpush1.bf16.msra.mxu0 %v486
    %616 = vmatprep.subr.bf16.mxu0 %v489
    %617 = vmatpush1.bf16.msra.mxu0 %v488
    %618 = vmatprep.subr.bf16.mxu0 %v491
    %619 = vmatpush1.bf16.msra.mxu0 %v490
    %620 = vmatprep.subr.bf16.mxu0 %v493
    %621 = vmatpush1.bf16.msra.mxu0 %v492
    %622 = vmatprep.subr.bf16.mxu0 %v495
    %623 = vmatpush1.bf16.msra.mxu0 %v494
    %624 = vmatprep.subr.bf16.mxu0 %v497
    %625 = vmatpush1.bf16.msra.mxu0 %v496
    %626 = vmatprep.subr.bf16.mxu0 %v499
    %627 = vmatpush1.bf16.msra.mxu0 %v498
    %628 = vmatprep.subr.bf16.mxu0 %v501
    %629 = vmatpush1.bf16.msra.mxu0 %v500
    %630 = vmatprep.subr.bf16.mxu0 %v503
    %631 = vmatpush1.bf16.msra.mxu0 %v502
    %632 = vmatprep.subr.bf16.mxu0 %v505
    %633 = vmatpush1.bf16.msra.mxu0 %v504
    %634 = vmatprep.subr.bf16.mxu0 %v507
    %635 = vmatpush1.bf16.msra.mxu0 %v506
    %636 = vmatprep.subr.bf16.mxu0 %v509
    %637 = vmatpush1.bf16.msra.mxu0 %v508
    %638 = vmatprep.mubr.bf16.mxu0 %v260
    %639 = vmatmul.mubr.bf16.gmra.mrb[0].mxu0 %v259
    %v640 = vpop.f32.mrb[0].mxu0
    %v641 = vadd.f32 %v279, %v640
    %v642 = vpop.f32.mrb[0].mxu0
    %v643 = vadd.f32 %v283, %v642
    %v644 = vpop.f32.mrb[0].mxu0
    %v645 = vadd.f32 %v279, %v644
    %v646 = vpop.f32.mrb[0].mxu0
    %v647 = vadd.f32 %v283, %v646
    %648 = vmatprep.mubr.bf16.mxu0 %v264
    %649 = vmatmul.mubr.bf16.gmra.mrb[0].mxu0 %v263
    %v650 = vpop.f32.mrb[0].mxu0
    %v651 = vadd.f32 %v279, %v650
    %v652 = vpop.f32.mrb[0].mxu0
    %v653 = vadd.f32 %v283, %v652
    %v654 = vpop.f32.mrb[0].mxu0
    %v655 = vadd.f32 %v279, %v654
    %v656 = vpop.f32.mrb[0].mxu0
    %v657 = vadd.f32 %v283, %v656
    %658 = vmatprep.mubr.bf16.mxu0 %v268
    %659 = vmatmul.mubr.bf16.gmra.mrb[0].mxu0 %v267
    %v660 = vpop.f32.mrb[0].mxu0
    %v661 = vadd.f32 %v279, %v660
    %v662 = vpop.f32.mrb[0].mxu0
    %v663 = vadd.f32 %v283, %v662
    %v664 = vpop.f32.mrb[0].mxu0
    %v665 = vadd.f32 %v279, %v664
    %v666 = vpop.f32.mrb[0].mxu0
    %v667 = vadd.f32 %v283, %v666
    %668 = vmatprep.mubr.bf16.mxu0 %v272
    %669 = vmatmul.mubr.bf16.gmra.mrb[0].mxu0 %v271
    %v670 = vpop.f32.mrb[0].mxu0
    %v671 = vadd.f32 %v279, %v670
    %v672 = vpop.f32.mrb[0].mxu0
    %v673 = vadd.f32 %v283, %v672
    %v674 = vpop.f32.mrb[0].mxu0
    %v675 = vadd.f32 %v279, %v674
    %v676 = vpop.f32.mrb[0].mxu0
    %v677 = vadd.f32 %v283, %v676
    %678 = vdwg.mxu0
    %679 = vmatprep.subr.bf16.mxu0 %v511
    %680 = vmatpush1.bf16.msra.mxu0 %v510
    %681 = vmatprep.subr.bf16.mxu0 %v513
    %682 = vmatpush1.bf16.msra.mxu0 %v512
    %683 = vmatprep.subr.bf16.mxu0 %v515
    %684 = vmatpush1.bf16.msra.mxu0 %v514
    %685 = vmatprep.subr.bf16.mxu0 %v517
    %686 = vmatpush1.bf16.msra.mxu0 %v516
    %687 = vmatprep.subr.bf16.mxu0 %v519
    %688 = vmatpush1.bf16.msra.mxu0 %v518
    %689 = vmatprep.subr.bf16.mxu0 %v521
    %690 = vmatpush1.bf16.msra.mxu0 %v520
    %691 = vmatprep.subr.bf16.mxu0 %v523
    %692 = vmatpush1.bf16.msra.mxu0 %v522
    %693 = vmatprep.subr.bf16.mxu0 %v525
    %694 = vmatpush1.bf16.msra.mxu0 %v524
    %695 = vmatprep.subr.bf16.mxu0 %v527
    %696 = vmatpush1.bf16.msra.mxu0 %v526
    %697 = vmatprep.subr.bf16.mxu0 %v529
    %698 = vmatpush1.bf16.msra.mxu0 %v528
    %699 = vmatprep.subr.bf16.mxu0 %v531
    %700 = vmatpush1.bf16.msra.mxu0 %v530
    %701 = vmatprep.subr.bf16.mxu0 %v533
    %702 = vmatpush1.bf16.msra.mxu0 %v532
    %703 = vmatprep.subr.bf16.mxu0 %v535
    %704 = vmatpush1.bf16.msra.mxu0 %v534
    %705 = vmatprep.subr.bf16.mxu0 %v537
    %706 = vmatpush1.bf16.msra.mxu0 %v536
    %707 = vmatprep.subr.bf16.mxu0 %v539
    %708 = vmatpush1.bf16.msra.mxu0 %v538
    %709 = vmatprep.subr.bf16.mxu0 %v541
    %710 = vmatpush1.bf16.msra.mxu0 %v540
    %711 = vmatprep.mubr.bf16.mxu0 %v262
    %712 = vmatmul.mubr.bf16.gmra.mrb[0].mxu0 %v261
    %v713 = vpop.f32.mrb[0].mxu0
    %v714 = vadd.f32 %v641, %v713
    %v715 = vpop.f32.mrb[0].mxu0
    %v716 = vadd.f32 %v643, %v715
    %v717 = vpop.f32.mrb[0].mxu0
    %v718 = vadd.f32 %v645, %v717
    %v719 = vpop.f32.mrb[0].mxu0
    %v720 = vadd.f32 %v647, %v719
    %721 = vmatprep.mubr.bf16.mxu0 %v266
    %722 = vmatmul.mubr.bf16.gmra.mrb[0].mxu0 %v265
    %v723 = vpop.f32.mrb[0].mxu0
    %v724 = vadd.f32 %v651, %v723
    %v725 = vpop.f32.mrb[0].mxu0
    %v726 = vadd.f32 %v653, %v725
    %v727 = vpop.f32.mrb[0].mxu0
    %v728 = vadd.f32 %v655, %v727
    %v729 = vpop.f32.mrb[0].mxu0
    %v730 = vadd.f32 %v657, %v729
    %731 = vmatprep.mubr.bf16.mxu0 %v270
    %732 = vmatmul.mubr.bf16.gmra.mrb[0].mxu0 %v269
    %v733 = vpop.f32.mrb[0].mxu0
    %v734 = vadd.f32 %v661, %v733
    %v735 = vpop.f32.mrb[0].mxu0
    %v736 = vadd.f32 %v663, %v735
    %v737 = vpop.f32.mrb[0].mxu0
    %v738 = vadd.f32 %v665, %v737
    %v739 = vpop.f32.mrb[0].mxu0
    %v740 = vadd.f32 %v667, %v739
    %741 = vmatprep.mubr.bf16.mxu0 %v274
    %742 = vmatmul.mubr.bf16.gmra.mrb[0].mxu0 %v273
    %v743 = vpop.f32.mrb[0].mxu0
    %v744 = vadd.f32 %v671, %v743
    %v745 = vpop.f32.mrb[0].mxu0
    %v746 = vadd.f32 %v673, %v745
    %v747 = vpop.f32.mrb[0].mxu0
    %v748 = vadd.f32 %v675, %v747
    %v749 = vpop.f32.mrb[0].mxu0
    %v750 = vadd.f32 %v677, %v749
    %751 = vdwg.mxu0
    %vm752 = vcmp.gt.f32.partialorder %v714, 20.0
    %vm753 = vcmp.gt.f32.partialorder %v716, 20.0
    %vm754 = vcmp.gt.f32.partialorder %v718, 20.0
    %vm755 = vcmp.gt.f32.partialorder %v720, 20.0
    %vm756 = vcmp.gt.f32.partialorder %v724, 20.0
    %vm757 = vcmp.gt.f32.partialorder %v726, 20.0
    %vm758 = vcmp.gt.f32.partialorder %v728, 20.0
    %vm759 = vcmp.gt.f32.partialorder %v730, 20.0
    %vm760 = vcmp.gt.f32.partialorder %v734, 20.0
    %vm761 = vcmp.gt.f32.partialorder %v736, 20.0
    %vm762 = vcmp.gt.f32.partialorder %v738, 20.0
    %vm763 = vcmp.gt.f32.partialorder %v740, 20.0
    %vm764 = vcmp.gt.f32.partialorder %v744, 20.0
    %vm765 = vcmp.gt.f32.partialorder %v746, 20.0
    %vm766 = vcmp.gt.f32.partialorder %v748, 20.0
    %vm767 = vcmp.gt.f32.partialorder %v750, 20.0
    %v768 = vmin.f32 %v714, 20.0
    %v769 = vmin.f32 %v716, 20.0
    %v770 = vmin.f32 %v718, 20.0
    %v771 = vmin.f32 %v720, 20.0
    %v772 = vmin.f32 %v724, 20.0
    %v773 = vmin.f32 %v726, 20.0
    %v774 = vmin.f32 %v728, 20.0
    %v775 = vmin.f32 %v730, 20.0
    %v776 = vmin.f32 %v734, 20.0
    %v777 = vmin.f32 %v736, 20.0
    %v778 = vmin.f32 %v738, 20.0
    %v779 = vmin.f32 %v740, 20.0
    %v780 = vmin.f32 %v744, 20.0
    %v781 = vmin.f32 %v746, 20.0
    %v782 = vmin.f32 %v748, 20.0
    %v783 = vmin.f32 %v750, 20.0
    %v784 = vmul.f32 %v768, 1.442695
    %v785 = vpow.pop %v784
    %v786 = vmul.f32 %v769, 1.442695
    %v787 = vpow.pop %v786
    %v788 = vmul.f32 %v770, 1.442695
    %v789 = vpow.pop %v788
    %v790 = vmul.f32 %v771, 1.442695
    %v791 = vpow.pop %v790
    %v792 = vmul.f32 %v772, 1.442695
    %v793 = vpow.pop %v792
    %v794 = vmul.f32 %v773, 1.442695
    %v795 = vpow.pop %v794
    %v796 = vmul.f32 %v774, 1.442695
    %v797 = vpow.pop %v796
    %v798 = vmul.f32 %v775, 1.442695
    %v799 = vpow.pop %v798
    %v800 = vmul.f32 %v776, 1.442695
    %v801 = vpow.pop %v800
    %v802 = vmul.f32 %v777, 1.442695
    %v803 = vpow.pop %v802
    %v804 = vmul.f32 %v778, 1.442695
    %v805 = vpow.pop %v804
    %v806 = vmul.f32 %v779, 1.442695
    %v807 = vpow.pop %v806
    %v808 = vmul.f32 %v780, 1.442695
    %v809 = vpow.pop %v808
    %v810 = vmul.f32 %v781, 1.442695
    %v811 = vpow.pop %v810
    %v812 = vmul.f32 %v782, 1.442695
    %v813 = vpow.pop %v812
    %v814 = vmul.f32 %v783, 1.442695
    %v815 = vpow.pop %v814
    %v816 = vadd.f32 %v785, 1.0
    %v817 = vlog2.pop %v816
    %v818 = vmul.f32 %v817, 0.6931472
    %v819 = vmul.f32 -0.5, %v785
    %v820 = vadd.f32 %v819, 1.0
    %v821 = vmul.f32 %v820, %v785
    %v822 = vand.u32 2147483647, %v785
    %vm823 = vcmp.lt.f32.partialorder %v822, 0.0004427343
    %v824 = vsel %vm823, %v821, %v818
    %v825 = vadd.f32 %v787, 1.0
    %v826 = vlog2.pop %v825
    %v827 = vmul.f32 %v826, 0.6931472
    %v828 = vmul.f32 -0.5, %v787
    %v829 = vadd.f32 %v828, 1.0
    %v830 = vmul.f32 %v829, %v787
    %v831 = vand.u32 2147483647, %v787
    %vm832 = vcmp.lt.f32.partialorder %v831, 0.0004427343
    %v833 = vsel %vm832, %v830, %v827
    %v834 = vadd.f32 %v789, 1.0
    %v835 = vlog2.pop %v834
    %v836 = vmul.f32 %v835, 0.6931472
    %v837 = vmul.f32 -0.5, %v789
    %v838 = vadd.f32 %v837, 1.0
    %v839 = vmul.f32 %v838, %v789
    %v840 = vand.u32 2147483647, %v789
    %vm841 = vcmp.lt.f32.partialorder %v840, 0.0004427343
    %v842 = vsel %vm841, %v839, %v836
    %v843 = vadd.f32 %v791, 1.0
    %v844 = vlog2.pop %v843
    %v845 = vmul.f32 %v844, 0.6931472
    %v846 = vmul.f32 -0.5, %v791
    %v847 = vadd.f32 %v846, 1.0
    %v848 = vmul.f32 %v847, %v791
    %v849 = vand.u32 2147483647, %v791
    %vm850 = vcmp.lt.f32.partialorder %v849, 0.0004427343
    %v851 = vsel %vm850, %v848, %v845
    %v852 = vadd.f32 %v793, 1.0
    %v853 = vlog2.pop %v852
    %v854 = vmul.f32 %v853, 0.6931472
    %v855 = vmul.f32 -0.5, %v793
    %v856 = vadd.f32 %v855, 1.0
    %v857 = vmul.f32 %v856, %v793
    %v858 = vand.u32 2147483647, %v793
    %vm859 = vcmp.lt.f32.partialorder %v858, 0.0004427343
    %v860 = vsel %vm859, %v857, %v854
    %v861 = vadd.f32 %v795, 1.0
    %v862 = vlog2.pop %v861
    %v863 = vmul.f32 %v862, 0.6931472
    %v864 = vmul.f32 -0.5, %v795
    %v865 = vadd.f32 %v864, 1.0
    %v866 = vmul.f32 %v865, %v795
    %v867 = vand.u32 2147483647, %v795
    %vm868 = vcmp.lt.f32.partialorder %v867, 0.0004427343
    %v869 = vsel %vm868, %v866, %v863
    %v870 = vadd.f32 %v797, 1.0
    %v871 = vlog2.pop %v870
    %v872 = vmul.f32 %v871, 0.6931472
    %v873 = vmul.f32 -0.5, %v797
    %v874 = vadd.f32 %v873, 1.0
    %v875 = vmul.f32 %v874, %v797
    %v876 = vand.u32 2147483647, %v797
    %vm877 = vcmp.lt.f32.partialorder %v876, 0.0004427343
    %v878 = vsel %vm877, %v875, %v872
    %v879 = vadd.f32 %v799, 1.0
    %v880 = vlog2.pop %v879
    %v881 = vmul.f32 %v880, 0.6931472
    %v882 = vmul.f32 -0.5, %v799
    %v883 = vadd.f32 %v882, 1.0
    %v884 = vmul.f32 %v883, %v799
    %v885 = vand.u32 2147483647, %v799
    %vm886 = vcmp.lt.f32.partialorder %v885, 0.0004427343
    %v887 = vsel %vm886, %v884, %v881
    %v888 = vadd.f32 %v801, 1.0
    %v889 = vlog2.pop %v888
    %v890 = vmul.f32 %v889, 0.6931472
    %v891 = vmul.f32 -0.5, %v801
    %v892 = vadd.f32 %v891, 1.0
    %v893 = vmul.f32 %v892, %v801
    %v894 = vand.u32 2147483647, %v801
    %vm895 = vcmp.lt.f32.partialorder %v894, 0.0004427343
    %v896 = vsel %vm895, %v893, %v890
    %v897 = vadd.f32 %v803, 1.0
    %v898 = vlog2.pop %v897
    %v899 = vmul.f32 %v898, 0.6931472
    %v900 = vmul.f32 -0.5, %v803
    %v901 = vadd.f32 %v900, 1.0
    %v902 = vmul.f32 %v901, %v803
    %v903 = vand.u32 2147483647, %v803
    %vm904 = vcmp.lt.f32.partialorder %v903, 0.0004427343
    %v905 = vsel %vm904, %v902, %v899
    %v906 = vadd.f32 %v805, 1.0
    %v907 = vlog2.pop %v906
    %v908 = vmul.f32 %v907, 0.6931472
    %v909 = vmul.f32 -0.5, %v805
    %v910 = vadd.f32 %v909, 1.0
    %v911 = vmul.f32 %v910, %v805
    %v912 = vand.u32 2147483647, %v805
    %vm913 = vcmp.lt.f32.partialorder %v912, 0.0004427343
    %v914 = vsel %vm913, %v911, %v908
    %v915 = vadd.f32 %v807, 1.0
    %v916 = vlog2.pop %v915
    %v917 = vmul.f32 %v916, 0.6931472
    %v918 = vmul.f32 -0.5, %v807
    %v919 = vadd.f32 %v918, 1.0
    %v920 = vmul.f32 %v919, %v807
    %v921 = vand.u32 2147483647, %v807
    %vm922 = vcmp.lt.f32.partialorder %v921, 0.0004427343
    %v923 = vsel %vm922, %v920, %v917
    %v924 = vadd.f32 %v809, 1.0
    %v925 = vlog2.pop %v924
    %v926 = vmul.f32 %v925, 0.6931472
    %v927 = vmul.f32 -0.5, %v809
    %v928 = vadd.f32 %v927, 1.0
    %v929 = vmul.f32 %v928, %v809
    %v930 = vand.u32 2147483647, %v809
    %vm931 = vcmp.lt.f32.partialorder %v930, 0.0004427343
    %v932 = vsel %vm931, %v929, %v926
    %v933 = vadd.f32 %v811, 1.0
    %v934 = vlog2.pop %v933
    %v935 = vmul.f32 %v934, 0.6931472
    %v936 = vmul.f32 -0.5, %v811
    %v937 = vadd.f32 %v936, 1.0
    %v938 = vmul.f32 %v937, %v811
    %v939 = vand.u32 2147483647, %v811
    %vm940 = vcmp.lt.f32.partialorder %v939, 0.0004427343
    %v941 = vsel %vm940, %v938, %v935
    %v942 = vadd.f32 %v813, 1.0
    %v943 = vlog2.pop %v942
    %v944 = vmul.f32 %v943, 0.6931472
    %v945 = vmul.f32 -0.5, %v813
    %v946 = vadd.f32 %v945, 1.0
    %v947 = vmul.f32 %v946, %v813
    %v948 = vand.u32 2147483647, %v813
    %vm949 = vcmp.lt.f32.partialorder %v948, 0.0004427343
    %v950 = vsel %vm949, %v947, %v944
    %v951 = vadd.f32 %v815, 1.0
    %v952 = vlog2.pop %v951
    %v953 = vmul.f32 %v952, 0.6931472
    %v954 = vmul.f32 -0.5, %v815
    %v955 = vadd.f32 %v954, 1.0
    %v956 = vmul.f32 %v955, %v815
    %v957 = vand.u32 2147483647, %v815
    %vm958 = vcmp.lt.f32.partialorder %v957, 0.0004427343
    %v959 = vsel %vm958, %v956, %v953
    %v960 = vsel %vm752, %v714, %v824
    %v961 = vsel %vm753, %v716, %v833
    %v962 = vsel %vm754, %v718, %v842
    %v963 = vsel %vm755, %v720, %v851
    %v964 = vsel %vm756, %v724, %v860
    %v965 = vsel %vm757, %v726, %v869
    %v966 = vsel %vm758, %v728, %v878
    %v967 = vsel %vm759, %v730, %v887
    %v968 = vsel %vm760, %v734, %v896
    %v969 = vsel %vm761, %v736, %v905
    %v970 = vsel %vm762, %v738, %v914
    %v971 = vsel %vm763, %v740, %v923
    %v972 = vsel %vm764, %v744, %v932
    %v973 = vsel %vm765, %v746, %v941
    %v974 = vsel %vm766, %v748, %v950
    %v975 = vsel %vm767, %v750, %v959
    %v976 = vpack.c.bf16 %v962, %v960
    %v977 = vpack.c.bf16 %v963, %v961
    %v978 = vpack.c.bf16 %v966, %v964
    %v979 = vpack.c.bf16 %v967, %v965
    %v980 = vpack.c.bf16 %v970, %v968
    %v981 = vpack.c.bf16 %v971, %v969
    %v982 = vpack.c.bf16 %v974, %v972
    %v983 = vpack.c.bf16 %v975, %v973
    %v985 = vlaneseq
    %v986 = vshrl.u32 %v985, 7
    %v987 = vsub.s32 0, %v986
    %v988 = vrot.slane %v177, %v987
    %v989 = vlaneseq
    %v990 = vshrl.u32 %v989, 7
    %v991 = vsub.s32 1, %v990
    %v992 = vrot.slane %v177, %v991
    %v1027 = vunpack.c.l.b16 %v145
    %v1028 = vunpack.c.h.b16 %v145
    %v1029 = vunpack.c.l.b16 %v146
    %v1030 = vunpack.c.h.b16 %v146
    %v1031 = vunpack.c.l.b16 %v147
    %v1032 = vunpack.c.h.b16 %v147
    %v1033 = vunpack.c.l.b16 %v148
    %v1034 = vunpack.c.h.b16 %v148
    %v1035 = vunpack.c.l.b16 %v149
    %v1036 = vunpack.c.h.b16 %v149
    %v1037 = vunpack.c.l.b16 %v150
    %v1038 = vunpack.c.h.b16 %v150
    %v1039 = vunpack.c.l.b16 %v151
    %v1040 = vunpack.c.h.b16 %v151
    %v1041 = vunpack.c.l.b16 %v152
    %v1042 = vunpack.c.h.b16 %v152
    %v1043 = vunpack.c.l.b16 %v153
    %v1044 = vunpack.c.h.b16 %v153
    %v1045 = vunpack.c.l.b16 %v154
    %v1046 = vunpack.c.h.b16 %v154
    %v1047 = vunpack.c.l.b16 %v155
    %v1048 = vunpack.c.h.b16 %v155
    %v1049 = vunpack.c.l.b16 %v156
    %v1050 = vunpack.c.h.b16 %v156
    %v1051 = vunpack.c.l.b16 %v157
    %v1052 = vunpack.c.h.b16 %v157
    %v1053 = vunpack.c.l.b16 %v158
    %v1054 = vunpack.c.h.b16 %v158
    %v1055 = vunpack.c.l.b16 %v159
    %v1056 = vunpack.c.h.b16 %v159
    %v1057 = vunpack.c.l.b16 %v160
    %v1058 = vunpack.c.h.b16 %v160
    %v1059 = vunpack.c.l.b16 %v161
    %v1060 = vunpack.c.h.b16 %v161
    %v1061 = vunpack.c.l.b16 %v162
    %v1062 = vunpack.c.h.b16 %v162
    %v1063 = vunpack.c.l.b16 %v163
    %v1064 = vunpack.c.h.b16 %v163
    %v1065 = vunpack.c.l.b16 %v164
    %v1066 = vunpack.c.h.b16 %v164
    %v1067 = vunpack.c.l.b16 %v165
    %v1068 = vunpack.c.h.b16 %v165
    %v1069 = vunpack.c.l.b16 %v166
    %v1070 = vunpack.c.h.b16 %v166
    %v1071 = vunpack.c.l.b16 %v167
    %v1072 = vunpack.c.h.b16 %v167
    %v1073 = vunpack.c.l.b16 %v168
    %v1074 = vunpack.c.h.b16 %v168
    %v1075 = vunpack.c.l.b16 %v169
    %v1076 = vunpack.c.h.b16 %v169
    %v1077 = vunpack.c.l.b16 %v170
    %v1078 = vunpack.c.h.b16 %v170
    %v1079 = vunpack.c.l.b16 %v171
    %v1080 = vunpack.c.h.b16 %v171
    %v1081 = vunpack.c.l.b16 %v172
    %v1082 = vunpack.c.h.b16 %v172
    %v1083 = vunpack.c.l.b16 %v173
    %v1084 = vunpack.c.h.b16 %v173
    %v1085 = vunpack.c.l.b16 %v174
    %v1086 = vunpack.c.h.b16 %v174
    %v1087 = vunpack.c.l.b16 %v175
    %v1088 = vunpack.c.h.b16 %v175
    %v1089 = vunpack.c.l.b16 %v176
    %v1090 = vunpack.c.h.b16 %v176
    %v1091 = vpack.c.b16 %v1029, %v1027
    %v1092 = vpack.c.b16 %v1030, %v1028
    %v1093 = vpack.c.b16 %v1033, %v1031
    %v1094 = vpack.c.b16 %v1034, %v1032
    %v1095 = vpack.c.b16 %v1037, %v1035
    %v1096 = vpack.c.b16 %v1038, %v1036
    %v1097 = vpack.c.b16 %v1041, %v1039
    %v1098 = vpack.c.b16 %v1042, %v1040
    %v1099 = vpack.c.b16 %v1045, %v1043
    %v1100 = vpack.c.b16 %v1046, %v1044
    %v1101 = vpack.c.b16 %v1049, %v1047
    %v1102 = vpack.c.b16 %v1050, %v1048
    %v1103 = vpack.c.b16 %v1053, %v1051
    %v1104 = vpack.c.b16 %v1054, %v1052
    %v1105 = vpack.c.b16 %v1057, %v1055
    %v1106 = vpack.c.b16 %v1058, %v1056
    %v1107 = vpack.c.b16 %v1061, %v1059
    %v1108 = vpack.c.b16 %v1062, %v1060
    %v1109 = vpack.c.b16 %v1065, %v1063
    %v1110 = vpack.c.b16 %v1066, %v1064
    %v1111 = vpack.c.b16 %v1069, %v1067
    %v1112 = vpack.c.b16 %v1070, %v1068
    %v1113 = vpack.c.b16 %v1073, %v1071
    %v1114 = vpack.c.b16 %v1074, %v1072
    %v1115 = vpack.c.b16 %v1077, %v1075
    %v1116 = vpack.c.b16 %v1078, %v1076
    %v1117 = vpack.c.b16 %v1081, %v1079
    %v1118 = vpack.c.b16 %v1082, %v1080
    %v1119 = vpack.c.b16 %v1085, %v1083
    %v1120 = vpack.c.b16 %v1086, %v1084
    %v1121 = vpack.c.b16 %v1089, %v1087
    %v1122 = vpack.c.b16 %v1090, %v1088
    %1155 = vmatprep.subr.bf16.mxu0 %v1092
    %1156 = vmatpush1.bf16.msra.mxu0 %v1091
    %1157 = vmatprep.subr.bf16.mxu0 %v1094
    %1158 = vmatpush1.bf16.msra.mxu0 %v1093
    %1159 = vmatprep.subr.bf16.mxu0 %v1096
    %1160 = vmatpush1.bf16.msra.mxu0 %v1095
    %1161 = vmatprep.subr.bf16.mxu0 %v1098
    %1162 = vmatpush1.bf16.msra.mxu0 %v1097
    %1163 = vmatprep.subr.bf16.mxu0 %v1100
    %1164 = vmatpush1.bf16.msra.mxu0 %v1099
    %1165 = vmatprep.subr.bf16.mxu0 %v1102
    %1166 = vmatpush1.bf16.msra.mxu0 %v1101
    %1167 = vmatprep.subr.bf16.mxu0 %v1104
    %1168 = vmatpush1.bf16.msra.mxu0 %v1103
    %1169 = vmatprep.subr.bf16.mxu0 %v1106
    %1170 = vmatpush1.bf16.msra.mxu0 %v1105
    %1171 = vmatprep.subr.bf16.mxu0 %v1108
    %1172 = vmatpush1.bf16.msra.mxu0 %v1107
    %1173 = vmatprep.subr.bf16.mxu0 %v1110
    %1174 = vmatpush1.bf16.msra.mxu0 %v1109
    %1175 = vmatprep.subr.bf16.mxu0 %v1112
    %1176 = vmatpush1.bf16.msra.mxu0 %v1111
    %1177 = vmatprep.subr.bf16.mxu0 %v1114
    %1178 = vmatpush1.bf16.msra.mxu0 %v1113
    %1179 = vmatprep.subr.bf16.mxu0 %v1116
    %1180 = vmatpush1.bf16.msra.mxu0 %v1115
    %1181 = vmatprep.subr.bf16.mxu0 %v1118
    %1182 = vmatpush1.bf16.msra.mxu0 %v1117
    %1183 = vmatprep.subr.bf16.mxu0 %v1120
    %1184 = vmatpush1.bf16.msra.mxu0 %v1119
    %1185 = vmatprep.subr.bf16.mxu0 %v1122
    %1186 = vmatpush1.bf16.msra.mxu0 %v1121
    %1187 = vmatprep.mubr.bf16.mxu0 %v977
    %1188 = vmatmul.mubr.bf16.gmra.mrb[0].mxu0 %v976
    %v1189 = vpop.f32.mrb[0].mxu0
    %v1190 = vadd.f32 %v988, %v1189
    %v1191 = vpop.f32.mrb[0].mxu0
    %v1192 = vadd.f32 %v992, %v1191
    %v1193 = vpop.f32.mrb[0].mxu0
    %v1194 = vadd.f32 %v988, %v1193
    %v1195 = vpop.f32.mrb[0].mxu0
    %v1196 = vadd.f32 %v992, %v1195
    %1197 = vmatprep.mubr.bf16.mxu0 %v979
    %1198 = vmatmul.mubr.bf16.gmra.mrb[0].mxu0 %v978
    %v1199 = vpop.f32.mrb[0].mxu0
    %v1200 = vadd.f32 %v988, %v1199
    %v1201 = vpop.f32.mrb[0].mxu0
    %v1202 = vadd.f32 %v992, %v1201
    %v1203 = vpop.f32.mrb[0].mxu0
    %v1204 = vadd.f32 %v988, %v1203
    %v1205 = vpop.f32.mrb[0].mxu0
    %v1206 = vadd.f32 %v992, %v1205
    %1207 = vmatprep.mubr.bf16.mxu0 %v981
    %1208 = vmatmul.mubr.bf16.gmra.mrb[0].mxu0 %v980
    %v1209 = vpop.f32.mrb[0].mxu0
    %v1210 = vadd.f32 %v988, %v1209
    %v1211 = vpop.f32.mrb[0].mxu0
    %v1212 = vadd.f32 %v992, %v1211
    %v1213 = vpop.f32.mrb[0].mxu0
    %v1214 = vadd.f32 %v988, %v1213
    %v1215 = vpop.f32.mrb[0].mxu0
    %v1216 = vadd.f32 %v992, %v1215
    %1217 = vmatprep.mubr.bf16.mxu0 %v983
    %1218 = vmatmul.mubr.bf16.gmra.mrb[0].mxu0 %v982
    %v1219 = vpop.f32.mrb[0].mxu0
    %v1220 = vadd.f32 %v988, %v1219
    %v1221 = vpop.f32.mrb[0].mxu0
    %v1222 = vadd.f32 %v992, %v1221
    %v1223 = vpop.f32.mrb[0].mxu0
    %v1224 = vadd.f32 %v988, %v1223
    %v1225 = vpop.f32.mrb[0].mxu0
    %v1226 = vadd.f32 %v992, %v1225
    %1227 = vdwg.mxu0
    %vm1228 = vcmp.gt.f32.partialorder %v1190, 20.0
    %vm1229 = vcmp.gt.f32.partialorder %v1192, 20.0
    %vm1230 = vcmp.gt.f32.partialorder %v1194, 20.0
    %vm1231 = vcmp.gt.f32.partialorder %v1196, 20.0
    %vm1232 = vcmp.gt.f32.partialorder %v1200, 20.0
    %vm1233 = vcmp.gt.f32.partialorder %v1202, 20.0
    %vm1234 = vcmp.gt.f32.partialorder %v1204, 20.0
    %vm1235 = vcmp.gt.f32.partialorder %v1206, 20.0
    %vm1236 = vcmp.gt.f32.partialorder %v1210, 20.0
    %vm1237 = vcmp.gt.f32.partialorder %v1212, 20.0
    %vm1238 = vcmp.gt.f32.partialorder %v1214, 20.0
    %vm1239 = vcmp.gt.f32.partialorder %v1216, 20.0
    %vm1240 = vcmp.gt.f32.partialorder %v1220, 20.0
    %vm1241 = vcmp.gt.f32.partialorder %v1222, 20.0
    %vm1242 = vcmp.gt.f32.partialorder %v1224, 20.0
    %vm1243 = vcmp.gt.f32.partialorder %v1226, 20.0
    %v1244 = vmin.f32 %v1190, 20.0
    %v1245 = vmin.f32 %v1192, 20.0
    %v1246 = vmin.f32 %v1194, 20.0
    %v1247 = vmin.f32 %v1196, 20.0
    %v1248 = vmin.f32 %v1200, 20.0
    %v1249 = vmin.f32 %v1202, 20.0
    %v1250 = vmin.f32 %v1204, 20.0
    %v1251 = vmin.f32 %v1206, 20.0
    %v1252 = vmin.f32 %v1210, 20.0
    %v1253 = vmin.f32 %v1212, 20.0
    %v1254 = vmin.f32 %v1214, 20.0
    %v1255 = vmin.f32 %v1216, 20.0
    %v1256 = vmin.f32 %v1220, 20.0
    %v1257 = vmin.f32 %v1222, 20.0
    %v1258 = vmin.f32 %v1224, 20.0
    %v1259 = vmin.f32 %v1226, 20.0
    %v1260 = vmul.f32 %v1244, 1.442695
    %v1261 = vpow.pop %v1260
    %v1262 = vmul.f32 %v1245, 1.442695
    %v1263 = vpow.pop %v1262
    %v1264 = vmul.f32 %v1246, 1.442695
    %v1265 = vpow.pop %v1264
    %v1266 = vmul.f32 %v1247, 1.442695
    %v1267 = vpow.pop %v1266
    %v1268 = vmul.f32 %v1248, 1.442695
    %v1269 = vpow.pop %v1268
    %v1270 = vmul.f32 %v1249, 1.442695
    %v1271 = vpow.pop %v1270
    %v1272 = vmul.f32 %v1250, 1.442695
    %v1273 = vpow.pop %v1272
    %v1274 = vmul.f32 %v1251, 1.442695
    %v1275 = vpow.pop %v1274
    %v1276 = vmul.f32 %v1252, 1.442695
    %v1277 = vpow.pop %v1276
    %v1278 = vmul.f32 %v1253, 1.442695
    %v1279 = vpow.pop %v1278
    %v1280 = vmul.f32 %v1254, 1.442695
    %v1281 = vpow.pop %v1280
    %v1282 = vmul.f32 %v1255, 1.442695
    %v1283 = vpow.pop %v1282
    %v1284 = vmul.f32 %v1256, 1.442695
    %v1285 = vpow.pop %v1284
    %v1286 = vmul.f32 %v1257, 1.442695
    %v1287 = vpow.pop %v1286
    %v1288 = vmul.f32 %v1258, 1.442695
    %v1289 = vpow.pop %v1288
    %v1290 = vmul.f32 %v1259, 1.442695
    %v1291 = vpow.pop %v1290
    %v1292 = vadd.f32 %v1261, 1.0
    %v1293 = vlog2.pop %v1292
    %v1294 = vmul.f32 %v1293, 0.6931472
    %v1295 = vmul.f32 -0.5, %v1261
    %v1296 = vadd.f32 %v1295, 1.0
    %v1297 = vmul.f32 %v1296, %v1261
    %v1298 = vand.u32 2147483647, %v1261
    %vm1299 = vcmp.lt.f32.partialorder %v1298, 0.0004427343
    %v1300 = vsel %vm1299, %v1297, %v1294
    %v1301 = vadd.f32 %v1263, 1.0
    %v1302 = vlog2.pop %v1301
    %v1303 = vmul.f32 %v1302, 0.6931472
    %v1304 = vmul.f32 -0.5, %v1263
    %v1305 = vadd.f32 %v1304, 1.0
    %v1306 = vmul.f32 %v1305, %v1263
    %v1307 = vand.u32 2147483647, %v1263
    %vm1308 = vcmp.lt.f32.partialorder %v1307, 0.0004427343
    %v1309 = vsel %vm1308, %v1306, %v1303
    %v1310 = vadd.f32 %v1265, 1.0
    %v1311 = vlog2.pop %v1310
    %v1312 = vmul.f32 %v1311, 0.6931472
    %v1313 = vmul.f32 -0.5, %v1265
    %v1314 = vadd.f32 %v1313, 1.0
    %v1315 = vmul.f32 %v1314, %v1265
    %v1316 = vand.u32 2147483647, %v1265
    %vm1317 = vcmp.lt.f32.partialorder %v1316, 0.0004427343
    %v1318 = vsel %vm1317, %v1315, %v1312
    %v1319 = vadd.f32 %v1267, 1.0
    %v1320 = vlog2.pop %v1319
    %v1321 = vmul.f32 %v1320, 0.6931472
    %v1322 = vmul.f32 -0.5, %v1267
    %v1323 = vadd.f32 %v1322, 1.0
    %v1324 = vmul.f32 %v1323, %v1267
    %v1325 = vand.u32 2147483647, %v1267
    %vm1326 = vcmp.lt.f32.partialorder %v1325, 0.0004427343
    %v1327 = vsel %vm1326, %v1324, %v1321
    %v1328 = vadd.f32 %v1269, 1.0
    %v1329 = vlog2.pop %v1328
    %v1330 = vmul.f32 %v1329, 0.6931472
    %v1331 = vmul.f32 -0.5, %v1269
    %v1332 = vadd.f32 %v1331, 1.0
    %v1333 = vmul.f32 %v1332, %v1269
    %v1334 = vand.u32 2147483647, %v1269
    %vm1335 = vcmp.lt.f32.partialorder %v1334, 0.0004427343
    %v1336 = vsel %vm1335, %v1333, %v1330
    %v1337 = vadd.f32 %v1271, 1.0
    %v1338 = vlog2.pop %v1337
    %v1339 = vmul.f32 %v1338, 0.6931472
    %v1340 = vmul.f32 -0.5, %v1271
    %v1341 = vadd.f32 %v1340, 1.0
    %v1342 = vmul.f32 %v1341, %v1271
    %v1343 = vand.u32 2147483647, %v1271
    %vm1344 = vcmp.lt.f32.partialorder %v1343, 0.0004427343
    %v1345 = vsel %vm1344, %v1342, %v1339
    %v1346 = vadd.f32 %v1273, 1.0
    %v1347 = vlog2.pop %v1346
    %v1348 = vmul.f32 %v1347, 0.6931472
    %v1349 = vmul.f32 -0.5, %v1273
    %v1350 = vadd.f32 %v1349, 1.0
    %v1351 = vmul.f32 %v1350, %v1273
    %v1352 = vand.u32 2147483647, %v1273
    %vm1353 = vcmp.lt.f32.partialorder %v1352, 0.0004427343
    %v1354 = vsel %vm1353, %v1351, %v1348
    %v1355 = vadd.f32 %v1275, 1.0
    %v1356 = vlog2.pop %v1355
    %v1357 = vmul.f32 %v1356, 0.6931472
    %v1358 = vmul.f32 -0.5, %v1275
    %v1359 = vadd.f32 %v1358, 1.0
    %v1360 = vmul.f32 %v1359, %v1275
    %v1361 = vand.u32 2147483647, %v1275
    %vm1362 = vcmp.lt.f32.partialorder %v1361, 0.0004427343
    %v1363 = vsel %vm1362, %v1360, %v1357
    %v1364 = vadd.f32 %v1277, 1.0
    %v1365 = vlog2.pop %v1364
    %v1366 = vmul.f32 %v1365, 0.6931472
    %v1367 = vmul.f32 -0.5, %v1277
    %v1368 = vadd.f32 %v1367, 1.0
    %v1369 = vmul.f32 %v1368, %v1277
    %v1370 = vand.u32 2147483647, %v1277
    %vm1371 = vcmp.lt.f32.partialorder %v1370, 0.0004427343
    %v1372 = vsel %vm1371, %v1369, %v1366
    %v1373 = vadd.f32 %v1279, 1.0
    %v1374 = vlog2.pop %v1373
    %v1375 = vmul.f32 %v1374, 0.6931472
    %v1376 = vmul.f32 -0.5, %v1279
    %v1377 = vadd.f32 %v1376, 1.0
    %v1378 = vmul.f32 %v1377, %v1279
    %v1379 = vand.u32 2147483647, %v1279
    %vm1380 = vcmp.lt.f32.partialorder %v1379, 0.0004427343
    %v1381 = vsel %vm1380, %v1378, %v1375
    %v1382 = vadd.f32 %v1281, 1.0
    %v1383 = vlog2.pop %v1382
    %v1384 = vmul.f32 %v1383, 0.6931472
    %v1385 = vmul.f32 -0.5, %v1281
    %v1386 = vadd.f32 %v1385, 1.0
    %v1387 = vmul.f32 %v1386, %v1281
    %v1388 = vand.u32 2147483647, %v1281
    %vm1389 = vcmp.lt.f32.partialorder %v1388, 0.0004427343
    %v1390 = vsel %vm1389, %v1387, %v1384
    %v1391 = vadd.f32 %v1283, 1.0
    %v1392 = vlog2.pop %v1391
    %v1393 = vmul.f32 %v1392, 0.6931472
    %v1394 = vmul.f32 -0.5, %v1283
    %v1395 = vadd.f32 %v1394, 1.0
    %v1396 = vmul.f32 %v1395, %v1283
    %v1397 = vand.u32 2147483647, %v1283
    %vm1398 = vcmp.lt.f32.partialorder %v1397, 0.0004427343
    %v1399 = vsel %vm1398, %v1396, %v1393
    %v1400 = vadd.f32 %v1285, 1.0
    %v1401 = vlog2.pop %v1400
    %v1402 = vmul.f32 %v1401, 0.6931472
    %v1403 = vmul.f32 -0.5, %v1285
    %v1404 = vadd.f32 %v1403, 1.0
    %v1405 = vmul.f32 %v1404, %v1285
    %v1406 = vand.u32 2147483647, %v1285
    %vm1407 = vcmp.lt.f32.partialorder %v1406, 0.0004427343
    %v1408 = vsel %vm1407, %v1405, %v1402
    %v1409 = vadd.f32 %v1287, 1.0
    %v1410 = vlog2.pop %v1409
    %v1411 = vmul.f32 %v1410, 0.6931472
    %v1412 = vmul.f32 -0.5, %v1287
    %v1413 = vadd.f32 %v1412, 1.0
    %v1414 = vmul.f32 %v1413, %v1287
    %v1415 = vand.u32 2147483647, %v1287
    %vm1416 = vcmp.lt.f32.partialorder %v1415, 0.0004427343
    %v1417 = vsel %vm1416, %v1414, %v1411
    %v1418 = vadd.f32 %v1289, 1.0
    %v1419 = vlog2.pop %v1418
    %v1420 = vmul.f32 %v1419, 0.6931472
    %v1421 = vmul.f32 -0.5, %v1289
    %v1422 = vadd.f32 %v1421, 1.0
    %v1423 = vmul.f32 %v1422, %v1289
    %v1424 = vand.u32 2147483647, %v1289
    %vm1425 = vcmp.lt.f32.partialorder %v1424, 0.0004427343
    %v1426 = vsel %vm1425, %v1423, %v1420
    %v1427 = vadd.f32 %v1291, 1.0
    %v1428 = vlog2.pop %v1427
    %v1429 = vmul.f32 %v1428, 0.6931472
    %v1430 = vmul.f32 -0.5, %v1291
    %v1431 = vadd.f32 %v1430, 1.0
    %v1432 = vmul.f32 %v1431, %v1291
    %v1433 = vand.u32 2147483647, %v1291
    %vm1434 = vcmp.lt.f32.partialorder %v1433, 0.0004427343
    %v1435 = vsel %vm1434, %v1432, %v1429
    %v1436 = vsel %vm1228, %v1190, %v1300
    %v1437 = vsel %vm1229, %v1192, %v1309
    %v1438 = vsel %vm1230, %v1194, %v1318
    %v1439 = vsel %vm1231, %v1196, %v1327
    %v1440 = vsel %vm1232, %v1200, %v1336
    %v1441 = vsel %vm1233, %v1202, %v1345
    %v1442 = vsel %vm1234, %v1204, %v1354
    %v1443 = vsel %vm1235, %v1206, %v1363
    %v1444 = vsel %vm1236, %v1210, %v1372
    %v1445 = vsel %vm1237, %v1212, %v1381
    %v1446 = vsel %vm1238, %v1214, %v1390
    %v1447 = vsel %vm1239, %v1216, %v1399
    %v1448 = vsel %vm1240, %v1220, %v1408
    %v1449 = vsel %vm1241, %v1222, %v1417
    %v1450 = vsel %vm1242, %v1224, %v1426
    %v1451 = vsel %vm1243, %v1226, %v1435
    %v1452 = vmul.f32 %v1436, %v243
    %v1453 = vmul.f32 %v1437, %v244
    %v1454 = vmul.f32 %v1438, %v245
    %v1455 = vmul.f32 %v1439, %v246
    %v1456 = vmul.f32 %v1440, %v247
    %v1457 = vmul.f32 %v1441, %v248
    %v1458 = vmul.f32 %v1442, %v249
    %v1459 = vmul.f32 %v1443, %v250
    %v1460 = vmul.f32 %v1444, %v251
    %v1461 = vmul.f32 %v1445, %v252
    %v1462 = vmul.f32 %v1446, %v253
    %v1463 = vmul.f32 %v1447, %v254
    %v1464 = vmul.f32 %v1448, %v255
    %v1465 = vmul.f32 %v1449, %v256
    %v1466 = vmul.f32 %v1450, %v257
    %v1467 = vmul.f32 %v1451, %v258
    %v1468 = vpack.c.bf16 %v1454, %v1452
    %v1469 = vpack.c.bf16 %v1455, %v1453
    %v1470 = vpack.c.bf16 %v1458, %v1456
    %v1471 = vpack.c.bf16 %v1459, %v1457
    %v1472 = vpack.c.bf16 %v1462, %v1460
    %v1473 = vpack.c.bf16 %v1463, %v1461
    %v1474 = vpack.c.bf16 %v1466, %v1464
    %v1475 = vpack.c.bf16 %v1467, %v1465
    %v1477 = vlaneseq
    %v1478 = vshrl.u32 %v1477, 7
    %v1479 = vsub.s32 0, %v1478
    %v1480 = vrot.slane %v210, %v1479
    %v1514 = vunpack.c.l.b16 %v178
    %v1515 = vunpack.c.l.b16 %v179
    %v1516 = vunpack.c.l.b16 %v180
    %v1517 = vunpack.c.l.b16 %v181
    %v1518 = vunpack.c.l.b16 %v182
    %v1519 = vunpack.c.l.b16 %v183
    %v1520 = vunpack.c.l.b16 %v184
    %v1521 = vunpack.c.l.b16 %v185
    %v1522 = vunpack.c.l.b16 %v186
    %v1523 = vunpack.c.l.b16 %v187
    %v1524 = vunpack.c.l.b16 %v188
    %v1525 = vunpack.c.l.b16 %v189
    %v1526 = vunpack.c.l.b16 %v190
    %v1527 = vunpack.c.l.b16 %v191
    %v1528 = vunpack.c.l.b16 %v192
    %v1529 = vunpack.c.l.b16 %v193
    %v1530 = vunpack.c.l.b16 %v194
    %v1531 = vunpack.c.l.b16 %v195
    %v1532 = vunpack.c.l.b16 %v196
    %v1533 = vunpack.c.l.b16 %v197
    %v1534 = vunpack.c.l.b16 %v198
    %v1535 = vunpack.c.l.b16 %v199
    %v1536 = vunpack.c.l.b16 %v200
    %v1537 = vunpack.c.l.b16 %v201
    %v1538 = vunpack.c.l.b16 %v202
    %v1539 = vunpack.c.l.b16 %v203
    %v1540 = vunpack.c.l.b16 %v204
    %v1541 = vunpack.c.l.b16 %v205
    %v1542 = vunpack.c.l.b16 %v206
    %v1543 = vunpack.c.l.b16 %v207
    %v1544 = vunpack.c.l.b16 %v208
    %v1545 = vunpack.c.l.b16 %v209
    %v1546 = vpack.c.b16 %v1515, %v1514
    %v1547 = vpack.c.b16 %v1517, %v1516
    %v1548 = vpack.c.b16 %v1519, %v1518
    %v1549 = vpack.c.b16 %v1521, %v1520
    %v1550 = vpack.c.b16 %v1523, %v1522
    %v1551 = vpack.c.b16 %v1525, %v1524
    %v1552 = vpack.c.b16 %v1527, %v1526
    %v1553 = vpack.c.b16 %v1529, %v1528
    %v1554 = vpack.c.b16 %v1531, %v1530
    %v1555 = vpack.c.b16 %v1533, %v1532
    %v1556 = vpack.c.b16 %v1535, %v1534
    %v1557 = vpack.c.b16 %v1537, %v1536
    %v1558 = vpack.c.b16 %v1539, %v1538
    %v1559 = vpack.c.b16 %v1541, %v1540
    %v1560 = vpack.c.b16 %v1543, %v1542
    %v1561 = vpack.c.b16 %v1545, %v1544
    %1578 = vmatprep.subr.bf16.mxu0 0
    %1579 = vmatpush1.bf16.msra.mxu0 %v1546
    %1580 = vmatprep.subr.bf16.mxu0 0
    %1581 = vmatpush1.bf16.msra.mxu0 %v1547
    %1582 = vmatprep.subr.bf16.mxu0 0
    %1583 = vmatpush1.bf16.msra.mxu0 %v1548
    %1584 = vmatprep.subr.bf16.mxu0 0
    %1585 = vmatpush1.bf16.msra.mxu0 %v1549
    %1586 = vmatprep.subr.bf16.mxu0 0
    %1587 = vmatpush1.bf16.msra.mxu0 %v1550
    %1588 = vmatprep.subr.bf16.mxu0 0
    %1589 = vmatpush1.bf16.msra.mxu0 %v1551
    %1590 = vmatprep.subr.bf16.mxu0 0
    %1591 = vmatpush1.bf16.msra.mxu0 %v1552
    %1592 = vmatprep.subr.bf16.mxu0 0
    %1593 = vmatpush1.bf16.msra.mxu0 %v1553
    %1594 = vmatprep.subr.bf16.mxu0 0
    %1595 = vmatpush1.bf16.msra.mxu0 %v1554
    %1596 = vmatprep.subr.bf16.mxu0 0
    %1597 = vmatpush1.bf16.msra.mxu0 %v1555
    %1598 = vmatprep.subr.bf16.mxu0 0
    %1599 = vmatpush1.bf16.msra.mxu0 %v1556
    %1600 = vmatprep.subr.bf16.mxu0 0
    %1601 = vmatpush1.bf16.msra.mxu0 %v1557
    %1602 = vmatprep.subr.bf16.mxu0 0
    %1603 = vmatpush1.bf16.msra.mxu0 %v1558
    %1604 = vmatprep.subr.bf16.mxu0 0
    %1605 = vmatpush1.bf16.msra.mxu0 %v1559
    %1606 = vmatprep.subr.bf16.mxu0 0
    %1607 = vmatpush1.bf16.msra.mxu0 %v1560
    %1608 = vmatprep.subr.bf16.mxu0 0
    %1609 = vmatpush1.bf16.msra.mxu0 %v1561
    %1610 = vmatprep.mubr.bf16.mxu0 %v1469
    %1611 = vmatmul.mubr.bf16.gmra.mrb[0].mxu0 %v1468
    %v1612 = vpop.f32.mrb[0].mxu0
    %v1613 = vadd.f32 %v1480, %v1612
    %v1614 = vpop.f32.mrb[0].mxu0
    %v1615 = vpop.f32.mrb[0].mxu0
    %v1616 = vadd.f32 %v1480, %v1615
    %v1617 = vpop.f32.mrb[0].mxu0
    %1618 = vmatprep.mubr.bf16.mxu0 %v1471
    %1619 = vmatmul.mubr.bf16.gmra.mrb[0].mxu0 %v1470
    %v1620 = vpop.f32.mrb[0].mxu0
    %v1621 = vadd.f32 %v1480, %v1620
    %v1622 = vpop.f32.mrb[0].mxu0
    %v1623 = vpop.f32.mrb[0].mxu0
    %v1624 = vadd.f32 %v1480, %v1623
    %v1625 = vpop.f32.mrb[0].mxu0
    %1626 = vmatprep.mubr.bf16.mxu0 %v1473
    %1627 = vmatmul.mubr.bf16.gmra.mrb[0].mxu0 %v1472
    %v1628 = vpop.f32.mrb[0].mxu0
    %v1629 = vadd.f32 %v1480, %v1628
    %v1630 = vpop.f32.mrb[0].mxu0
    %v1631 = vpop.f32.mrb[0].mxu0
    %v1632 = vadd.f32 %v1480, %v1631
    %v1633 = vpop.f32.mrb[0].mxu0
    %1634 = vmatprep.mubr.bf16.mxu0 %v1475
    %1635 = vmatmul.mubr.bf16.gmra.mrb[0].mxu0 %v1474
    %v1636 = vpop.f32.mrb[0].mxu0
    %v1637 = vadd.f32 %v1480, %v1636
    %v1638 = vpop.f32.mrb[0].mxu0
    %v1639 = vpop.f32.mrb[0].mxu0
    %v1640 = vadd.f32 %v1480, %v1639
    %v1641 = vpop.f32.mrb[0].mxu0
    %1642 = vdwg.mxu0
    %v1643 = vld [vmem:[#allocation2 + $0x100] sm:$0xff]
    %v1644 = vld [vmem:[#allocation2 + $0x108] sm:$0xff]
    %v1645 = vld [vmem:[#allocation2 + $0x110] sm:$0xff]
    %v1646 = vld [vmem:[#allocation2 + $0x118] sm:$0xff]
    %v1647 = vld [vmem:[#allocation2 + $0x120] sm:$0xff]
    %v1648 = vld [vmem:[#allocation2 + $0x128] sm:$0xff]
    %v1649 = vld [vmem:[#allocation2 + $0x130] sm:$0xff]
    %v1650 = vld [vmem:[#allocation2 + $0x138] sm:$0xff]
    %v1651 = vld [vmem:[#allocation2 + $0x140] sm:$0xff]
    %v1652 = vld [vmem:[#allocation2 + $0x148] sm:$0xff]
    %v1653 = vld [vmem:[#allocation2 + $0x150] sm:$0xff]
    %v1654 = vld [vmem:[#allocation2 + $0x158] sm:$0xff]
    %v1655 = vld [vmem:[#allocation2 + $0x160] sm:$0xff]
    %v1656 = vld [vmem:[#allocation2 + $0x168] sm:$0xff]
    %v1657 = vld [vmem:[#allocation2 + $0x170] sm:$0xff]
    %v1658 = vld [vmem:[#allocation2 + $0x178] sm:$0xff]
    %v1659 = vld [vmem:[#allocation2 + $0x180] sm:$0xff]
    %v1660 = vld [vmem:[#allocation2 + $0x188] sm:$0xff]
    %v1661 = vld [vmem:[#allocation2 + $0x190] sm:$0xff]
    %v1662 = vld [vmem:[#allocation2 + $0x198] sm:$0xff]
    %v1663 = vld [vmem:[#allocation2 + $0x1a0] sm:$0xff]
    %v1664 = vld [vmem:[#allocation2 + $0x1a8] sm:$0xff]
    %v1665 = vld [vmem:[#allocation2 + $0x1b0] sm:$0xff]
    %v1666 = vld [vmem:[#allocation2 + $0x1b8] sm:$0xff]
    %v1667 = vld [vmem:[#allocation2 + $0x1c0] sm:$0xff]
    %v1668 = vld [vmem:[#allocation2 + $0x1c8] sm:$0xff]
    %v1669 = vld [vmem:[#allocation2 + $0x1d0] sm:$0xff]
    %v1670 = vld [vmem:[#allocation2 + $0x1d8] sm:$0xff]
    %v1671 = vld [vmem:[#allocation2 + $0x1e0] sm:$0xff]
    %v1672 = vld [vmem:[#allocation2 + $0x1e8] sm:$0xff]
    %v1673 = vld [vmem:[#allocation2 + $0x1f0] sm:$0xff]
    %v1674 = vld [vmem:[#allocation2 + $0x1f8] sm:$0xff]
    %v1675 = vld [vmem:[#allocation6 + $0x80] sm:$0xff]
    %v1676 = vld [vmem:[#allocation6 + $0x88] sm:$0xff]
    %v1677 = vld [vmem:[#allocation6 + $0x90] sm:$0xff]
    %v1678 = vld [vmem:[#allocation6 + $0x98] sm:$0xff]
    %v1679 = vld [vmem:[#allocation6 + $0xa0] sm:$0xff]
    %v1680 = vld [vmem:[#allocation6 + $0xa8] sm:$0xff]
    %v1681 = vld [vmem:[#allocation6 + $0xb0] sm:$0xff]
    %v1682 = vld [vmem:[#allocation6 + $0xb8] sm:$0xff]
    %v1683 = vld [vmem:[#allocation6 + $0xc0] sm:$0xff]
    %v1684 = vld [vmem:[#allocation6 + $0xc8] sm:$0xff]
    %v1685 = vld [vmem:[#allocation6 + $0xd0] sm:$0xff]
    %v1686 = vld [vmem:[#allocation6 + $0xd8] sm:$0xff]
    %v1687 = vld [vmem:[#allocation6 + $0xe0] sm:$0xff]
    %v1688 = vld [vmem:[#allocation6 + $0xe8] sm:$0xff]
    %v1689 = vld [vmem:[#allocation6 + $0xf0] sm:$0xff]
    %v1690 = vld [vmem:[#allocation6 + $0xf8] sm:$0xff]
    %v1691 = vpack.c.bf16 %v1647, %v1643
    %v1692 = vpack.c.bf16 %v1648, %v1644
    %v1693 = vpack.c.bf16 %v1649, %v1645
    %v1694 = vpack.c.bf16 %v1650, %v1646
    %v1695 = vpack.c.bf16 %v1655, %v1651
    %v1696 = vpack.c.bf16 %v1656, %v1652
    %v1697 = vpack.c.bf16 %v1657, %v1653
    %v1698 = vpack.c.bf16 %v1658, %v1654
    %v1699 = vpack.c.bf16 %v1663, %v1659
    %v1700 = vpack.c.bf16 %v1664, %v1660
    %v1701 = vpack.c.bf16 %v1665, %v1661
    %v1702 = vpack.c.bf16 %v1666, %v1662
    %v1703 = vpack.c.bf16 %v1671, %v1667
    %v1704 = vpack.c.bf16 %v1672, %v1668
    %v1705 = vpack.c.bf16 %v1673, %v1669
    %v1706 = vpack.c.bf16 %v1674, %v1670
    %1707 = vmatprep.subr.bf16.mxu0 %v479
    %1708 = vmatpush1.bf16.msra.mxu0 %v478
    %1709 = vmatprep.subr.bf16.mxu0 %v481
    %1710 = vmatpush1.bf16.msra.mxu0 %v480
    %1711 = vmatprep.subr.bf16.mxu0 %v483
    %1712 = vmatpush1.bf16.msra.mxu0 %v482
    %1713 = vmatprep.subr.bf16.mxu0 %v485
    %1714 = vmatpush1.bf16.msra.mxu0 %v484
    %1715 = vmatprep.subr.bf16.mxu0 %v487
    %1716 = vmatpush1.bf16.msra.mxu0 %v486
    %1717 = vmatprep.subr.bf16.mxu0 %v489
    %1718 = vmatpush1.bf16.msra.mxu0 %v488
    %1719 = vmatprep.subr.bf16.mxu0 %v491
    %1720 = vmatpush1.bf16.msra.mxu0 %v490
    %1721 = vmatprep.subr.bf16.mxu0 %v493
    %1722 = vmatpush1.bf16.msra.mxu0 %v492
    %1723 = vmatprep.subr.bf16.mxu0 %v495
    %1724 = vmatpush1.bf16.msra.mxu0 %v494
    %1725 = vmatprep.subr.bf16.mxu0 %v497
    %1726 = vmatpush1.bf16.msra.mxu0 %v496
    %1727 = vmatprep.subr.bf16.mxu0 %v499
    %1728 = vmatpush1.bf16.msra.mxu0 %v498
    %1729 = vmatprep.subr.bf16.mxu0 %v501
    %1730 = vmatpush1.bf16.msra.mxu0 %v500
    %1731 = vmatprep.subr.bf16.mxu0 %v503
    %1732 = vmatpush1.bf16.msra.mxu0 %v502
    %1733 = vmatprep.subr.bf16.mxu0 %v505
    %1734 = vmatpush1.bf16.msra.mxu0 %v504
    %1735 = vmatprep.subr.bf16.mxu0 %v507
    %1736 = vmatpush1.bf16.msra.mxu0 %v506
    %1737 = vmatprep.subr.bf16.mxu0 %v509
    %1738 = vmatpush1.bf16.msra.mxu0 %v508
    %1739 = vmatprep.mubr.bf16.mxu0 %v1692
    %1740 = vmatmul.mubr.bf16.gmra.mrb[0].mxu0 %v1691
    %v1741 = vpop.f32.mrb[0].mxu0
    %v1742 = vadd.f32 %v279, %v1741
    %v1743 = vpop.f32.mrb[0].mxu0
    %v1744 = vadd.f32 %v283, %v1743
    %v1745 = vpop.f32.mrb[0].mxu0
    %v1746 = vadd.f32 %v279, %v1745
    %v1747 = vpop.f32.mrb[0].mxu0
    %v1748 = vadd.f32 %v283, %v1747
    %1749 = vmatprep.mubr.bf16.mxu0 %v1696
    %1750 = vmatmul.mubr.bf16.gmra.mrb[0].mxu0 %v1695
    %v1751 = vpop.f32.mrb[0].mxu0
    %v1752 = vadd.f32 %v279, %v1751
    %v1753 = vpop.f32.mrb[0].mxu0
    %v1754 = vadd.f32 %v283, %v1753
    %v1755 = vpop.f32.mrb[0].mxu0
    %v1756 = vadd.f32 %v279, %v1755
    %v1757 = vpop.f32.mrb[0].mxu0
    %v1758 = vadd.f32 %v283, %v1757
    %1759 = vmatprep.mubr.bf16.mxu0 %v1700
    %1760 = vmatmul.mubr.bf16.gmra.mrb[0].mxu0 %v1699
    %v1761 = vpop.f32.mrb[0].mxu0
    %v1762 = vadd.f32 %v279, %v1761
    %v1763 = vpop.f32.mrb[0].mxu0
    %v1764 = vadd.f32 %v283, %v1763
    %v1765 = vpop.f32.mrb[0].mxu0
    %v1766 = vadd.f32 %v279, %v1765
    %v1767 = vpop.f32.mrb[0].mxu0
    %v1768 = vadd.f32 %v283, %v1767
    %1769 = vmatprep.mubr.bf16.mxu0 %v1704
    %1770 = vmatmul.mubr.bf16.gmra.mrb[0].mxu0 %v1703
    %v1771 = vpop.f32.mrb[0].mxu0
    %v1772 = vadd.f32 %v279, %v1771
    %v1773 = vpop.f32.mrb[0].mxu0
    %v1774 = vadd.f32 %v283, %v1773
    %v1775 = vpop.f32.mrb[0].mxu0
    %v1776 = vadd.f32 %v279, %v1775
    %v1777 = vpop.f32.mrb[0].mxu0
    %v1778 = vadd.f32 %v283, %v1777
    %1779 = vdwg.mxu0
    %1780 = vmatprep.subr.bf16.mxu0 %v511
    %1781 = vmatpush1.bf16.msra.mxu0 %v510
    %1782 = vmatprep.subr.bf16.mxu0 %v513
    %1783 = vmatpush1.bf16.msra.mxu0 %v512
    %1784 = vmatprep.subr.bf16.mxu0 %v515
    %1785 = vmatpush1.bf16.msra.mxu0 %v514
    %1786 = vmatprep.subr.bf16.mxu0 %v517
    %1787 = vmatpush1.bf16.msra.mxu0 %v516
    %1788 = vmatprep.subr.bf16.mxu0 %v519
    %1789 = vmatpush1.bf16.msra.mxu0 %v518
    %1790 = vmatprep.subr.bf16.mxu0 %v521
    %1791 = vmatpush1.bf16.msra.mxu0 %v520
    %1792 = vmatprep.subr.bf16.mxu0 %v523
    %1793 = vmatpush1.bf16.msra.mxu0 %v522
    %1794 = vmatprep.subr.bf16.mxu0 %v525
    %1795 = vmatpush1.bf16.msra.mxu0 %v524
    %1796 = vmatprep.subr.bf16.mxu0 %v527
    %1797 = vmatpush1.bf16.msra.mxu0 %v526
    %1798 = vmatprep.subr.bf16.mxu0 %v529
    %1799 = vmatpush1.bf16.msra.mxu0 %v528
    %1800 = vmatprep.subr.bf16.mxu0 %v531
    %1801 = vmatpush1.bf16.msra.mxu0 %v530
    %1802 = vmatprep.subr.bf16.mxu0 %v533
    %1803 = vmatpush1.bf16.msra.mxu0 %v532
    %1804 = vmatprep.subr.bf16.mxu0 %v535
    %1805 = vmatpush1.bf16.msra.mxu0 %v534
    %1806 = vmatprep.subr.bf16.mxu0 %v537
    %1807 = vmatpush1.bf16.msra.mxu0 %v536
    %1808 = vmatprep.subr.bf16.mxu0 %v539
    %1809 = vmatpush1.bf16.msra.mxu0 %v538
    %1810 = vmatprep.subr.bf16.mxu0 %v541
    %1811 = vmatpush1.bf16.msra.mxu0 %v540
    %1812 = vmatprep.mubr.bf16.mxu0 %v1694
    %1813 = vmatmul.mubr.bf16.gmra.mrb[0].mxu0 %v1693
    %v1814 = vpop.f32.mrb[0].mxu0
    %v1815 = vadd.f32 %v1742, %v1814
    %v1816 = vpop.f32.mrb[0].mxu0
    %v1817 = vadd.f32 %v1744, %v1816
    %v1818 = vpop.f32.mrb[0].mxu0
    %v1819 = vadd.f32 %v1746, %v1818
    %v1820 = vpop.f32.mrb[0].mxu0
    %v1821 = vadd.f32 %v1748, %v1820
    %1822 = vmatprep.mubr.bf16.mxu0 %v1698
    %1823 = vmatmul.mubr.bf16.gmra.mrb[0].mxu0 %v1697
    %v1824 = vpop.f32.mrb[0].mxu0
    %v1825 = vadd.f32 %v1752, %v1824
    %v1826 = vpop.f32.mrb[0].mxu0
    %v1827 = vadd.f32 %v1754, %v1826
    %v1828 = vpop.f32.mrb[0].mxu0
    %v1829 = vadd.f32 %v1756, %v1828
    %v1830 = vpop.f32.mrb[0].mxu0
    %v1831 = vadd.f32 %v1758, %v1830
    %1832 = vmatprep.mubr.bf16.mxu0 %v1702
    %1833 = vmatmul.mubr.bf16.gmra.mrb[0].mxu0 %v1701
    %v1834 = vpop.f32.mrb[0].mxu0
    %v1835 = vadd.f32 %v1762, %v1834
    %v1836 = vpop.f32.mrb[0].mxu0
    %v1837 = vadd.f32 %v1764, %v1836
    %v1838 = vpop.f32.mrb[0].mxu0
    %v1839 = vadd.f32 %v1766, %v1838
    %v1840 = vpop.f32.mrb[0].mxu0
    %v1841 = vadd.f32 %v1768, %v1840
    %1842 = vmatprep.mubr.bf16.mxu0 %v1706
    %1843 = vmatmul.mubr.bf16.gmra.mrb[0].mxu0 %v1705
    %v1844 = vpop.f32.mrb[0].mxu0
    %v1845 = vadd.f32 %v1772, %v1844
    %v1846 = vpop.f32.mrb[0].mxu0
    %v1847 = vadd.f32 %v1774, %v1846
    %v1848 = vpop.f32.mrb[0].mxu0
    %v1849 = vadd.f32 %v1776, %v1848
    %v1850 = vpop.f32.mrb[0].mxu0
    %v1851 = vadd.f32 %v1778, %v1850
    %1852 = vdwg.mxu0
    %vm1853 = vcmp.gt.f32.partialorder %v1815, 20.0
    %vm1854 = vcmp.gt.f32.partialorder %v1817, 20.0
    %vm1855 = vcmp.gt.f32.partialorder %v1819, 20.0
    %vm1856 = vcmp.gt.f32.partialorder %v1821, 20.0
    %vm1857 = vcmp.gt.f32.partialorder %v1825, 20.0
    %vm1858 = vcmp.gt.f32.partialorder %v1827, 20.0
    %vm1859 = vcmp.gt.f32.partialorder %v1829, 20.0
    %vm1860 = vcmp.gt.f32.partialorder %v1831, 20.0
    %vm1861 = vcmp.gt.f32.partialorder %v1835, 20.0
    %vm1862 = vcmp.gt.f32.partialorder %v1837, 20.0
    %vm1863 = vcmp.gt.f32.partialorder %v1839, 20.0
    %vm1864 = vcmp.gt.f32.partialorder %v1841, 20.0
    %vm1865 = vcmp.gt.f32.partialorder %v1845, 20.0
    %vm1866 = vcmp.gt.f32.partialorder %v1847, 20.0
    %vm1867 = vcmp.gt.f32.partialorder %v1849, 20.0
    %vm1868 = vcmp.gt.f32.partialorder %v1851, 20.0
    %v1869 = vmin.f32 %v1815, 20.0
    %v1870 = vmin.f32 %v1817, 20.0
    %v1871 = vmin.f32 %v1819, 20.0
    %v1872 = vmin.f32 %v1821, 20.0
    %v1873 = vmin.f32 %v1825, 20.0
    %v1874 = vmin.f32 %v1827, 20.0
    %v1875 = vmin.f32 %v1829, 20.0
    %v1876 = vmin.f32 %v1831, 20.0
    %v1877 = vmin.f32 %v1835, 20.0
    %v1878 = vmin.f32 %v1837, 20.0
    %v1879 = vmin.f32 %v1839, 20.0
    %v1880 = vmin.f32 %v1841, 20.0
    %v1881 = vmin.f32 %v1845, 20.0
    %v1882 = vmin.f32 %v1847, 20.0
    %v1883 = vmin.f32 %v1849, 20.0
    %v1884 = vmin.f32 %v1851, 20.0
    %v1885 = vmul.f32 %v1869, 1.442695
    %v1886 = vpow.pop %v1885
    %v1887 = vmul.f32 %v1870, 1.442695
    %v1888 = vpow.pop %v1887
    %v1889 = vmul.f32 %v1871, 1.442695
    %v1890 = vpow.pop %v1889
    %v1891 = vmul.f32 %v1872, 1.442695
    %v1892 = vpow.pop %v1891
    %v1893 = vmul.f32 %v1873, 1.442695
    %v1894 = vpow.pop %v1893
    %v1895 = vmul.f32 %v1874, 1.442695
    %v1896 = vpow.pop %v1895
    %v1897 = vmul.f32 %v1875, 1.442695
    %v1898 = vpow.pop %v1897
    %v1899 = vmul.f32 %v1876, 1.442695
    %v1900 = vpow.pop %v1899
    %v1901 = vmul.f32 %v1877, 1.442695
    %v1902 = vpow.pop %v1901
    %v1903 = vmul.f32 %v1878, 1.442695
    %v1904 = vpow.pop %v1903
    %v1905 = vmul.f32 %v1879, 1.442695
    %v1906 = vpow.pop %v1905
    %v1907 = vmul.f32 %v1880, 1.442695
    %v1908 = vpow.pop %v1907
    %v1909 = vmul.f32 %v1881, 1.442695
    %v1910 = vpow.pop %v1909
    %v1911 = vmul.f32 %v1882, 1.442695
    %v1912 = vpow.pop %v1911
    %v1913 = vmul.f32 %v1883, 1.442695
    %v1914 = vpow.pop %v1913
    %v1915 = vmul.f32 %v1884, 1.442695
    %v1916 = vpow.pop %v1915
    %v1917 = vadd.f32 %v1886, 1.0
    %v1918 = vlog2.pop %v1917
    %v1919 = vmul.f32 %v1918, 0.6931472
    %v1920 = vmul.f32 -0.5, %v1886
    %v1921 = vadd.f32 %v1920, 1.0
    %v1922 = vmul.f32 %v1921, %v1886
    %v1923 = vand.u32 2147483647, %v1886
    %vm1924 = vcmp.lt.f32.partialorder %v1923, 0.0004427343
    %v1925 = vsel %vm1924, %v1922, %v1919
    %v1926 = vadd.f32 %v1888, 1.0
    %v1927 = vlog2.pop %v1926
    %v1928 = vmul.f32 %v1927, 0.6931472
    %v1929 = vmul.f32 -0.5, %v1888
    %v1930 = vadd.f32 %v1929, 1.0
    %v1931 = vmul.f32 %v1930, %v1888
    %v1932 = vand.u32 2147483647, %v1888
    %vm1933 = vcmp.lt.f32.partialorder %v1932, 0.0004427343
    %v1934 = vsel %vm1933, %v1931, %v1928
    %v1935 = vadd.f32 %v1890, 1.0
    %v1936 = vlog2.pop %v1935
    %v1937 = vmul.f32 %v1936, 0.6931472
    %v1938 = vmul.f32 -0.5, %v1890
    %v1939 = vadd.f32 %v1938, 1.0
    %v1940 = vmul.f32 %v1939, %v1890
    %v1941 = vand.u32 2147483647, %v1890
    %vm1942 = vcmp.lt.f32.partialorder %v1941, 0.0004427343
    %v1943 = vsel %vm1942, %v1940, %v1937
    %v1944 = vadd.f32 %v1892, 1.0
    %v1945 = vlog2.pop %v1944
    %v1946 = vmul.f32 %v1945, 0.6931472
    %v1947 = vmul.f32 -0.5, %v1892
    %v1948 = vadd.f32 %v1947, 1.0
    %v1949 = vmul.f32 %v1948, %v1892
    %v1950 = vand.u32 2147483647, %v1892
    %vm1951 = vcmp.lt.f32.partialorder %v1950, 0.0004427343
    %v1952 = vsel %vm1951, %v1949, %v1946
    %v1953 = vadd.f32 %v1894, 1.0
    %v1954 = vlog2.pop %v1953
    %v1955 = vmul.f32 %v1954, 0.6931472
    %v1956 = vmul.f32 -0.5, %v1894
    %v1957 = vadd.f32 %v1956, 1.0
    %v1958 = vmul.f32 %v1957, %v1894
    %v1959 = vand.u32 2147483647, %v1894
    %vm1960 = vcmp.lt.f32.partialorder %v1959, 0.0004427343
    %v1961 = vsel %vm1960, %v1958, %v1955
    %v1962 = vadd.f32 %v1896, 1.0
    %v1963 = vlog2.pop %v1962
    %v1964 = vmul.f32 %v1963, 0.6931472
    %v1965 = vmul.f32 -0.5, %v1896
    %v1966 = vadd.f32 %v1965, 1.0
    %v1967 = vmul.f32 %v1966, %v1896
    %v1968 = vand.u32 2147483647, %v1896
    %vm1969 = vcmp.lt.f32.partialorder %v1968, 0.0004427343
    %v1970 = vsel %vm1969, %v1967, %v1964
    %v1971 = vadd.f32 %v1898, 1.0
    %v1972 = vlog2.pop %v1971
    %v1973 = vmul.f32 %v1972, 0.6931472
    %v1974 = vmul.f32 -0.5, %v1898
    %v1975 = vadd.f32 %v1974, 1.0
    %v1976 = vmul.f32 %v1975, %v1898
    %v1977 = vand.u32 2147483647, %v1898
    %vm1978 = vcmp.lt.f32.partialorder %v1977, 0.0004427343
    %v1979 = vsel %vm1978, %v1976, %v1973
    %v1980 = vadd.f32 %v1900, 1.0
    %v1981 = vlog2.pop %v1980
    %v1982 = vmul.f32 %v1981, 0.6931472
    %v1983 = vmul.f32 -0.5, %v1900
    %v1984 = vadd.f32 %v1983, 1.0
    %v1985 = vmul.f32 %v1984, %v1900
    %v1986 = vand.u32 2147483647, %v1900
    %vm1987 = vcmp.lt.f32.partialorder %v1986, 0.0004427343
    %v1988 = vsel %vm1987, %v1985, %v1982
    %v1989 = vadd.f32 %v1902, 1.0
    %v1990 = vlog2.pop %v1989
    %v1991 = vmul.f32 %v1990, 0.6931472
    %v1992 = vmul.f32 -0.5, %v1902
    %v1993 = vadd.f32 %v1992, 1.0
    %v1994 = vmul.f32 %v1993, %v1902
    %v1995 = vand.u32 2147483647, %v1902
    %vm1996 = vcmp.lt.f32.partialorder %v1995, 0.0004427343
    %v1997 = vsel %vm1996, %v1994, %v1991
    %v1998 = vadd.f32 %v1904, 1.0
    %v1999 = vlog2.pop %v1998
    %v2000 = vmul.f32 %v1999, 0.6931472
    %v2001 = vmul.f32 -0.5, %v1904
    %v2002 = vadd.f32 %v2001, 1.0
    %v2003 = vmul.f32 %v2002, %v1904
    %v2004 = vand.u32 2147483647, %v1904
    %vm2005 = vcmp.lt.f32.partialorder %v2004, 0.0004427343
    %v2006 = vsel %vm2005, %v2003, %v2000
    %v2007 = vadd.f32 %v1906, 1.0
    %v2008 = vlog2.pop %v2007
    %v2009 = vmul.f32 %v2008, 0.6931472
    %v2010 = vmul.f32 -0.5, %v1906
    %v2011 = vadd.f32 %v2010, 1.0
    %v2012 = vmul.f32 %v2011, %v1906
    %v2013 = vand.u32 2147483647, %v1906
    %vm2014 = vcmp.lt.f32.partialorder %v2013, 0.0004427343
    %v2015 = vsel %vm2014, %v2012, %v2009
    %v2016 = vadd.f32 %v1908, 1.0
    %v2017 = vlog2.pop %v2016
    %v2018 = vmul.f32 %v2017, 0.6931472
    %v2019 = vmul.f32 -0.5, %v1908
    %v2020 = vadd.f32 %v2019, 1.0
    %v2021 = vmul.f32 %v2020, %v1908
    %v2022 = vand.u32 2147483647, %v1908
    %vm2023 = vcmp.lt.f32.partialorder %v2022, 0.0004427343
    %v2024 = vsel %vm2023, %v2021, %v2018
    %v2025 = vadd.f32 %v1910, 1.0
    %v2026 = vlog2.pop %v2025
    %v2027 = vmul.f32 %v2026, 0.6931472
    %v2028 = vmul.f32 -0.5, %v1910
    %v2029 = vadd.f32 %v2028, 1.0
    %v2030 = vmul.f32 %v2029, %v1910
    %v2031 = vand.u32 2147483647, %v1910
    %vm2032 = vcmp.lt.f32.partialorder %v2031, 0.0004427343
    %v2033 = vsel %vm2032, %v2030, %v2027
    %v2034 = vadd.f32 %v1912, 1.0
    %v2035 = vlog2.pop %v2034
    %v2036 = vmul.f32 %v2035, 0.6931472
    %v2037 = vmul.f32 -0.5, %v1912
    %v2038 = vadd.f32 %v2037, 1.0
    %v2039 = vmul.f32 %v2038, %v1912
    %v2040 = vand.u32 2147483647, %v1912
    %vm2041 = vcmp.lt.f32.partialorder %v2040, 0.0004427343
    %v2042 = vsel %vm2041, %v2039, %v2036
    %v2043 = vadd.f32 %v1914, 1.0
    %v2044 = vlog2.pop %v2043
    %v2045 = vmul.f32 %v2044, 0.6931472
    %v2046 = vmul.f32 -0.5, %v1914
    %v2047 = vadd.f32 %v2046, 1.0
    %v2048 = vmul.f32 %v2047, %v1914
    %v2049 = vand.u32 2147483647, %v1914
    %vm2050 = vcmp.lt.f32.partialorder %v2049, 0.0004427343
    %v2051 = vsel %vm2050, %v2048, %v2045
    %v2052 = vadd.f32 %v1916, 1.0
    %v2053 = vlog2.pop %v2052
    %v2054 = vmul.f32 %v2053, 0.6931472
    %v2055 = vmul.f32 -0.5, %v1916
    %v2056 = vadd.f32 %v2055, 1.0
    %v2057 = vmul.f32 %v2056, %v1916
    %v2058 = vand.u32 2147483647, %v1916
    %vm2059 = vcmp.lt.f32.partialorder %v2058, 0.0004427343
    %v2060 = vsel %vm2059, %v2057, %v2054
    %v2061 = vsel %vm1853, %v1815, %v1925
    %v2062 = vsel %vm1854, %v1817, %v1934
    %v2063 = vsel %vm1855, %v1819, %v1943
    %v2064 = vsel %vm1856, %v1821, %v1952
    %v2065 = vsel %vm1857, %v1825, %v1961
    %v2066 = vsel %vm1858, %v1827, %v1970
    %v2067 = vsel %vm1859, %v1829, %v1979
    %v2068 = vsel %vm1860, %v1831, %v1988
    %v2069 = vsel %vm1861, %v1835, %v1997
    %v2070 = vsel %vm1862, %v1837, %v2006
    %v2071 = vsel %vm1863, %v1839, %v2015
    %v2072 = vsel %vm1864, %v1841, %v2024
    %v2073 = vsel %vm1865, %v1845, %v2033
    %v2074 = vsel %vm1866, %v1847, %v2042
    %v2075 = vsel %vm1867, %v1849, %v2051
    %v2076 = vsel %vm1868, %v1851, %v2060
    %v2077 = vpack.c.bf16 %v2063, %v2061
    %v2078 = vpack.c.bf16 %v2064, %v2062
    %v2079 = vpack.c.bf16 %v2067, %v2065
    %v2080 = vpack.c.bf16 %v2068, %v2066
    %v2081 = vpack.c.bf16 %v2071, %v2069
    %v2082 = vpack.c.bf16 %v2072, %v2070
    %v2083 = vpack.c.bf16 %v2075, %v2073
    %v2084 = vpack.c.bf16 %v2076, %v2074
    %2085 = vmatprep.subr.bf16.mxu0 %v1092
    %2086 = vmatpush1.bf16.msra.mxu0 %v1091
    %2087 = vmatprep.subr.bf16.mxu0 %v1094
    %2088 = vmatpush1.bf16.msra.mxu0 %v1093
    %2089 = vmatprep.subr.bf16.mxu0 %v1096
    %2090 = vmatpush1.bf16.msra.mxu0 %v1095
    %2091 = vmatprep.subr.bf16.mxu0 %v1098
    %2092 = vmatpush1.bf16.msra.mxu0 %v1097
    %2093 = vmatprep.subr.bf16.mxu0 %v1100
    %2094 = vmatpush1.bf16.msra.mxu0 %v1099
    %2095 = vmatprep.subr.bf16.mxu0 %v1102
    %2096 = vmatpush1.bf16.msra.mxu0 %v1101
    %2097 = vmatprep.subr.bf16.mxu0 %v1104
    %2098 = vmatpush1.bf16.msra.mxu0 %v1103
    %2099 = vmatprep.subr.bf16.mxu0 %v1106
    %2100 = vmatpush1.bf16.msra.mxu0 %v1105
    %2101 = vmatprep.subr.bf16.mxu0 %v1108
    %2102 = vmatpush1.bf16.msra.mxu0 %v1107
    %2103 = vmatprep.subr.bf16.mxu0 %v1110
    %2104 = vmatpush1.bf16.msra.mxu0 %v1109
    %2105 = vmatprep.subr.bf16.mxu0 %v1112
    %2106 = vmatpush1.bf16.msra.mxu0 %v1111
    %2107 = vmatprep.subr.bf16.mxu0 %v1114
    %2108 = vmatpush1.bf16.msra.mxu0 %v1113
    %2109 = vmatprep.subr.bf16.mxu0 %v1116
    %2110 = vmatpush1.bf16.msra.mxu0 %v1115
    %2111 = vmatprep.subr.bf16.mxu0 %v1118
    %2112 = vmatpush1.bf16.msra.mxu0 %v1117
    %2113 = vmatprep.subr.bf16.mxu0 %v1120
    %2114 = vmatpush1.bf16.msra.mxu0 %v1119
    %2115 = vmatprep.subr.bf16.mxu0 %v1122
    %2116 = vmatpush1.bf16.msra.mxu0 %v1121
    %2117 = vmatprep.mubr.bf16.mxu0 %v2078
    %2118 = vmatmul.mubr.bf16.gmra.mrb[0].mxu0 %v2077
    %v2119 = vpop.f32.mrb[0].mxu0
    %v2120 = vadd.f32 %v988, %v2119
    %v2121 = vpop.f32.mrb[0].mxu0
    %v2122 = vadd.f32 %v992, %v2121
    %v2123 = vpop.f32.mrb[0].mxu0
    %v2124 = vadd.f32 %v988, %v2123
    %v2125 = vpop.f32.mrb[0].mxu0
    %v2126 = vadd.f32 %v992, %v2125
    %2127 = vmatprep.mubr.bf16.mxu0 %v2080
    %2128 = vmatmul.mubr.bf16.gmra.mrb[0].mxu0 %v2079
    %v2129 = vpop.f32.mrb[0].mxu0
    %v2130 = vadd.f32 %v988, %v2129
    %v2131 = vpop.f32.mrb[0].mxu0
    %v2132 = vadd.f32 %v992, %v2131
    %v2133 = vpop.f32.mrb[0].mxu0
    %v2134 = vadd.f32 %v988, %v2133
    %v2135 = vpop.f32.mrb[0].mxu0
    %v2136 = vadd.f32 %v992, %v2135
    %2137 = vmatprep.mubr.bf16.mxu0 %v2082
    %2138 = vmatmul.mubr.bf16.gmra.mrb[0].mxu0 %v2081
    %v2139 = vpop.f32.mrb[0].mxu0
    %v2140 = vadd.f32 %v988, %v2139
    %v2141 = vpop.f32.mrb[0].mxu0
    %v2142 = vadd.f32 %v992, %v2141
    %v2143 = vpop.f32.mrb[0].mxu0
    %v2144 = vadd.f32 %v988, %v2143
    %v2145 = vpop.f32.mrb[0].mxu0
    %v2146 = vadd.f32 %v992, %v2145
    %2147 = vmatprep.mubr.bf16.mxu0 %v2084
    %2148 = vmatmul.mubr.bf16.gmra.mrb[0].mxu0 %v2083
    %v2149 = vpop.f32.mrb[0].mxu0
    %v2150 = vadd.f32 %v988, %v2149
    %v2151 = vpop.f32.mrb[0].mxu0
    %v2152 = vadd.f32 %v992, %v2151
    %v2153 = vpop.f32.mrb[0].mxu0
    %v2154 = vadd.f32 %v988, %v2153
    %v2155 = vpop.f32.mrb[0].mxu0
    %v2156 = vadd.f32 %v992, %v2155
    %2157 = vdwg.mxu0
    %vm2158 = vcmp.gt.f32.partialorder %v2120, 20.0
    %vm2159 = vcmp.gt.f32.partialorder %v2122, 20.0
    %vm2160 = vcmp.gt.f32.partialorder %v2124, 20.0
    %vm2161 = vcmp.gt.f32.partialorder %v2126, 20.0
    %vm2162 = vcmp.gt.f32.partialorder %v2130, 20.0
    %vm2163 = vcmp.gt.f32.partialorder %v2132, 20.0
    %vm2164 = vcmp.gt.f32.partialorder %v2134, 20.0
    %vm2165 = vcmp.gt.f32.partialorder %v2136, 20.0
    %vm2166 = vcmp.gt.f32.partialorder %v2140, 20.0
    %vm2167 = vcmp.gt.f32.partialorder %v2142, 20.0
    %vm2168 = vcmp.gt.f32.partialorder %v2144, 20.0
    %vm2169 = vcmp.gt.f32.partialorder %v2146, 20.0
    %vm2170 = vcmp.gt.f32.partialorder %v2150, 20.0
    %vm2171 = vcmp.gt.f32.partialorder %v2152, 20.0
    %vm2172 = vcmp.gt.f32.partialorder %v2154, 20.0
    %vm2173 = vcmp.gt.f32.partialorder %v2156, 20.0
    %v2174 = vmin.f32 %v2120, 20.0
    %v2175 = vmin.f32 %v2122, 20.0
    %v2176 = vmin.f32 %v2124, 20.0
    %v2177 = vmin.f32 %v2126, 20.0
    %v2178 = vmin.f32 %v2130, 20.0
    %v2179 = vmin.f32 %v2132, 20.0
    %v2180 = vmin.f32 %v2134, 20.0
    %v2181 = vmin.f32 %v2136, 20.0
    %v2182 = vmin.f32 %v2140, 20.0
    %v2183 = vmin.f32 %v2142, 20.0
    %v2184 = vmin.f32 %v2144, 20.0
    %v2185 = vmin.f32 %v2146, 20.0
    %v2186 = vmin.f32 %v2150, 20.0
    %v2187 = vmin.f32 %v2152, 20.0
    %v2188 = vmin.f32 %v2154, 20.0
    %v2189 = vmin.f32 %v2156, 20.0
    %v2190 = vmul.f32 %v2174, 1.442695
    %v2191 = vpow.pop %v2190
    %v2192 = vmul.f32 %v2175, 1.442695
    %v2193 = vpow.pop %v2192
    %v2194 = vmul.f32 %v2176, 1.442695
    %v2195 = vpow.pop %v2194
    %v2196 = vmul.f32 %v2177, 1.442695
    %v2197 = vpow.pop %v2196
    %v2198 = vmul.f32 %v2178, 1.442695
    %v2199 = vpow.pop %v2198
    %v2200 = vmul.f32 %v2179, 1.442695
    %v2201 = vpow.pop %v2200
    %v2202 = vmul.f32 %v2180, 1.442695
    %v2203 = vpow.pop %v2202
    %v2204 = vmul.f32 %v2181, 1.442695
    %v2205 = vpow.pop %v2204
    %v2206 = vmul.f32 %v2182, 1.442695
    %v2207 = vpow.pop %v2206
    %v2208 = vmul.f32 %v2183, 1.442695
    %v2209 = vpow.pop %v2208
    %v2210 = vmul.f32 %v2184, 1.442695
    %v2211 = vpow.pop %v2210
    %v2212 = vmul.f32 %v2185, 1.442695
    %v2213 = vpow.pop %v2212
    %v2214 = vmul.f32 %v2186, 1.442695
    %v2215 = vpow.pop %v2214
    %v2216 = vmul.f32 %v2187, 1.442695
    %v2217 = vpow.pop %v2216
    %v2218 = vmul.f32 %v2188, 1.442695
    %v2219 = vpow.pop %v2218
    %v2220 = vmul.f32 %v2189, 1.442695
    %v2221 = vpow.pop %v2220
    %v2222 = vadd.f32 %v2191, 1.0
    %v2223 = vlog2.pop %v2222
    %v2224 = vmul.f32 %v2223, 0.6931472
    %v2225 = vmul.f32 -0.5, %v2191
    %v2226 = vadd.f32 %v2225, 1.0
    %v2227 = vmul.f32 %v2226, %v2191
    %v2228 = vand.u32 2147483647, %v2191
    %vm2229 = vcmp.lt.f32.partialorder %v2228, 0.0004427343
    %v2230 = vsel %vm2229, %v2227, %v2224
    %v2231 = vadd.f32 %v2193, 1.0
    %v2232 = vlog2.pop %v2231
    %v2233 = vmul.f32 %v2232, 0.6931472
    %v2234 = vmul.f32 -0.5, %v2193
    %v2235 = vadd.f32 %v2234, 1.0
    %v2236 = vmul.f32 %v2235, %v2193
    %v2237 = vand.u32 2147483647, %v2193
    %vm2238 = vcmp.lt.f32.partialorder %v2237, 0.0004427343
    %v2239 = vsel %vm2238, %v2236, %v2233
    %v2240 = vadd.f32 %v2195, 1.0
    %v2241 = vlog2.pop %v2240
    %v2242 = vmul.f32 %v2241, 0.6931472
    %v2243 = vmul.f32 -0.5, %v2195
    %v2244 = vadd.f32 %v2243, 1.0
    %v2245 = vmul.f32 %v2244, %v2195
    %v2246 = vand.u32 2147483647, %v2195
    %vm2247 = vcmp.lt.f32.partialorder %v2246, 0.0004427343
    %v2248 = vsel %vm2247, %v2245, %v2242
    %v2249 = vadd.f32 %v2197, 1.0
    %v2250 = vlog2.pop %v2249
    %v2251 = vmul.f32 %v2250, 0.6931472
    %v2252 = vmul.f32 -0.5, %v2197
    %v2253 = vadd.f32 %v2252, 1.0
    %v2254 = vmul.f32 %v2253, %v2197
    %v2255 = vand.u32 2147483647, %v2197
    %vm2256 = vcmp.lt.f32.partialorder %v2255, 0.0004427343
    %v2257 = vsel %vm2256, %v2254, %v2251
    %v2258 = vadd.f32 %v2199, 1.0
    %v2259 = vlog2.pop %v2258
    %v2260 = vmul.f32 %v2259, 0.6931472
    %v2261 = vmul.f32 -0.5, %v2199
    %v2262 = vadd.f32 %v2261, 1.0
    %v2263 = vmul.f32 %v2262, %v2199
    %v2264 = vand.u32 2147483647, %v2199
    %vm2265 = vcmp.lt.f32.partialorder %v2264, 0.0004427343
    %v2266 = vsel %vm2265, %v2263, %v2260
    %v2267 = vadd.f32 %v2201, 1.0
    %v2268 = vlog2.pop %v2267
    %v2269 = vmul.f32 %v2268, 0.6931472
    %v2270 = vmul.f32 -0.5, %v2201
    %v2271 = vadd.f32 %v2270, 1.0
    %v2272 = vmul.f32 %v2271, %v2201
    %v2273 = vand.u32 2147483647, %v2201
    %vm2274 = vcmp.lt.f32.partialorder %v2273, 0.0004427343
    %v2275 = vsel %vm2274, %v2272, %v2269
    %v2276 = vadd.f32 %v2203, 1.0
    %v2277 = vlog2.pop %v2276
    %v2278 = vmul.f32 %v2277, 0.6931472
    %v2279 = vmul.f32 -0.5, %v2203
    %v2280 = vadd.f32 %v2279, 1.0
    %v2281 = vmul.f32 %v2280, %v2203
    %v2282 = vand.u32 2147483647, %v2203
    %vm2283 = vcmp.lt.f32.partialorder %v2282, 0.0004427343
    %v2284 = vsel %vm2283, %v2281, %v2278
    %v2285 = vadd.f32 %v2205, 1.0
    %v2286 = vlog2.pop %v2285
    %v2287 = vmul.f32 %v2286, 0.6931472
    %v2288 = vmul.f32 -0.5, %v2205
    %v2289 = vadd.f32 %v2288, 1.0
    %v2290 = vmul.f32 %v2289, %v2205
    %v2291 = vand.u32 2147483647, %v2205
    %vm2292 = vcmp.lt.f32.partialorder %v2291, 0.0004427343
    %v2293 = vsel %vm2292, %v2290, %v2287
    %v2294 = vadd.f32 %v2207, 1.0
    %v2295 = vlog2.pop %v2294
    %v2296 = vmul.f32 %v2295, 0.6931472
    %v2297 = vmul.f32 -0.5, %v2207
    %v2298 = vadd.f32 %v2297, 1.0
    %v2299 = vmul.f32 %v2298, %v2207
    %v2300 = vand.u32 2147483647, %v2207
    %vm2301 = vcmp.lt.f32.partialorder %v2300, 0.0004427343
    %v2302 = vsel %vm2301, %v2299, %v2296
    %v2303 = vadd.f32 %v2209, 1.0
    %v2304 = vlog2.pop %v2303
    %v2305 = vmul.f32 %v2304, 0.6931472
    %v2306 = vmul.f32 -0.5, %v2209
    %v2307 = vadd.f32 %v2306, 1.0
    %v2308 = vmul.f32 %v2307, %v2209
    %v2309 = vand.u32 2147483647, %v2209
    %vm2310 = vcmp.lt.f32.partialorder %v2309, 0.0004427343
    %v2311 = vsel %vm2310, %v2308, %v2305
    %v2312 = vadd.f32 %v2211, 1.0
    %v2313 = vlog2.pop %v2312
    %v2314 = vmul.f32 %v2313, 0.6931472
    %v2315 = vmul.f32 -0.5, %v2211
    %v2316 = vadd.f32 %v2315, 1.0
    %v2317 = vmul.f32 %v2316, %v2211
    %v2318 = vand.u32 2147483647, %v2211
    %vm2319 = vcmp.lt.f32.partialorder %v2318, 0.0004427343
    %v2320 = vsel %vm2319, %v2317, %v2314
    %v2321 = vadd.f32 %v2213, 1.0
    %v2322 = vlog2.pop %v2321
    %v2323 = vmul.f32 %v2322, 0.6931472
    %v2324 = vmul.f32 -0.5, %v2213
    %v2325 = vadd.f32 %v2324, 1.0
    %v2326 = vmul.f32 %v2325, %v2213
    %v2327 = vand.u32 2147483647, %v2213
    %vm2328 = vcmp.lt.f32.partialorder %v2327, 0.0004427343
    %v2329 = vsel %vm2328, %v2326, %v2323
    %v2330 = vadd.f32 %v2215, 1.0
    %v2331 = vlog2.pop %v2330
    %v2332 = vmul.f32 %v2331, 0.6931472
    %v2333 = vmul.f32 -0.5, %v2215
    %v2334 = vadd.f32 %v2333, 1.0
    %v2335 = vmul.f32 %v2334, %v2215
    %v2336 = vand.u32 2147483647, %v2215
    %vm2337 = vcmp.lt.f32.partialorder %v2336, 0.0004427343
    %v2338 = vsel %vm2337, %v2335, %v2332
    %v2339 = vadd.f32 %v2217, 1.0
    %v2340 = vlog2.pop %v2339
    %v2341 = vmul.f32 %v2340, 0.6931472
    %v2342 = vmul.f32 -0.5, %v2217
    %v2343 = vadd.f32 %v2342, 1.0
    %v2344 = vmul.f32 %v2343, %v2217
    %v2345 = vand.u32 2147483647, %v2217
    %vm2346 = vcmp.lt.f32.partialorder %v2345, 0.0004427343
    %v2347 = vsel %vm2346, %v2344, %v2341
    %v2348 = vadd.f32 %v2219, 1.0
    %v2349 = vlog2.pop %v2348
    %v2350 = vmul.f32 %v2349, 0.6931472
    %v2351 = vmul.f32 -0.5, %v2219
    %v2352 = vadd.f32 %v2351, 1.0
    %v2353 = vmul.f32 %v2352, %v2219
    %v2354 = vand.u32 2147483647, %v2219
    %vm2355 = vcmp.lt.f32.partialorder %v2354, 0.0004427343
    %v2356 = vsel %vm2355, %v2353, %v2350
    %v2357 = vadd.f32 %v2221, 1.0
    %v2358 = vlog2.pop %v2357
    %v2359 = vmul.f32 %v2358, 0.6931472
    %v2360 = vmul.f32 -0.5, %v2221
    %v2361 = vadd.f32 %v2360, 1.0
    %v2362 = vmul.f32 %v2361, %v2221
    %v2363 = vand.u32 2147483647, %v2221
    %vm2364 = vcmp.lt.f32.partialorder %v2363, 0.0004427343
    %v2365 = vsel %vm2364, %v2362, %v2359
    %v2366 = vsel %vm2158, %v2120, %v2230
    %v2367 = vsel %vm2159, %v2122, %v2239
    %v2368 = vsel %vm2160, %v2124, %v2248
    %v2369 = vsel %vm2161, %v2126, %v2257
    %v2370 = vsel %vm2162, %v2130, %v2266
    %v2371 = vsel %vm2163, %v2132, %v2275
    %v2372 = vsel %vm2164, %v2134, %v2284
    %v2373 = vsel %vm2165, %v2136, %v2293
    %v2374 = vsel %vm2166, %v2140, %v2302
    %v2375 = vsel %vm2167, %v2142, %v2311
    %v2376 = vsel %vm2168, %v2144, %v2320
    %v2377 = vsel %vm2169, %v2146, %v2329
    %v2378 = vsel %vm2170, %v2150, %v2338
    %v2379 = vsel %vm2171, %v2152, %v2347
    %v2380 = vsel %vm2172, %v2154, %v2356
    %v2381 = vsel %vm2173, %v2156, %v2365
    %v2382 = vmul.f32 %v2366, %v1675
    %v2383 = vmul.f32 %v2367, %v1676
    %v2384 = vmul.f32 %v2368, %v1677
    %v2385 = vmul.f32 %v2369, %v1678
    %v2386 = vmul.f32 %v2370, %v1679
    %v2387 = vmul.f32 %v2371, %v1680
    %v2388 = vmul.f32 %v2372, %v1681
    %v2389 = vmul.f32 %v2373, %v1682
    %v2390 = vmul.f32 %v2374, %v1683
    %v2391 = vmul.f32 %v2375, %v1684
    %v2392 = vmul.f32 %v2376, %v1685
    %v2393 = vmul.f32 %v2377, %v1686
    %v2394 = vmul.f32 %v2378, %v1687
    %v2395 = vmul.f32 %v2379, %v1688
    %v2396 = vmul.f32 %v2380, %v1689
    %v2397 = vmul.f32 %v2381, %v1690
    %v2398 = vpack.c.bf16 %v2384, %v2382
    %v2399 = vpack.c.bf16 %v2385, %v2383
    %v2400 = vpack.c.bf16 %v2388, %v2386
    %v2401 = vpack.c.bf16 %v2389, %v2387
    %v2402 = vpack.c.bf16 %v2392, %v2390
    %v2403 = vpack.c.bf16 %v2393, %v2391
    %v2404 = vpack.c.bf16 %v2396, %v2394
    %v2405 = vpack.c.bf16 %v2397, %v2395
    %2406 = vmatprep.subr.bf16.mxu0 0
    %2407 = vmatpush1.bf16.msra.mxu0 %v1546
    %2408 = vmatprep.subr.bf16.mxu0 0
    %2409 = vmatpush1.bf16.msra.mxu0 %v1547
    %2410 = vmatprep.subr.bf16.mxu0 0
    %2411 = vmatpush1.bf16.msra.mxu0 %v1548
    %2412 = vmatprep.subr.bf16.mxu0 0
    %2413 = vmatpush1.bf16.msra.mxu0 %v1549
    %2414 = vmatprep.subr.bf16.mxu0 0
    %2415 = vmatpush1.bf16.msra.mxu0 %v1550
    %2416 = vmatprep.subr.bf16.mxu0 0
    %2417 = vmatpush1.bf16.msra.mxu0 %v1551
    %2418 = vmatprep.subr.bf16.mxu0 0
    %2419 = vmatpush1.bf16.msra.mxu0 %v1552
    %2420 = vmatprep.subr.bf16.mxu0 0
    %2421 = vmatpush1.bf16.msra.mxu0 %v1553
    %2422 = vmatprep.subr.bf16.mxu0 0
    %2423 = vmatpush1.bf16.msra.mxu0 %v1554
    %2424 = vmatprep.subr.bf16.mxu0 0
    %2425 = vmatpush1.bf16.msra.mxu0 %v1555
    %2426 = vmatprep.subr.bf16.mxu0 0
    %2427 = vmatpush1.bf16.msra.mxu0 %v1556
    %2428 = vmatprep.subr.bf16.mxu0 0
    %2429 = vmatpush1.bf16.msra.mxu0 %v1557
    %2430 = vmatprep.subr.bf16.mxu0 0
    %2431 = vmatpush1.bf16.msra.mxu0 %v1558
    %2432 = vmatprep.subr.bf16.mxu0 0
    %2433 = vmatpush1.bf16.msra.mxu0 %v1559
    %2434 = vmatprep.subr.bf16.mxu0 0
    %2435 = vmatpush1.bf16.msra.mxu0 %v1560
    %2436 = vmatprep.subr.bf16.mxu0 0
    %2437 = vmatpush1.bf16.msra.mxu0 %v1561
    %2438 = vmatprep.mubr.bf16.mxu0 %v2399
    %2439 = vmatmul.mubr.bf16.gmra.mrb[0].mxu0 %v2398
    %v2440 = vpop.f32.mrb[0].mxu0
    %v2441 = vadd.f32 %v1480, %v2440
    %v2442 = vpop.f32.mrb[0].mxu0
    %v2443 = vpop.f32.mrb[0].mxu0
    %v2444 = vadd.f32 %v1480, %v2443
    %v2445 = vpop.f32.mrb[0].mxu0
    %2446 = vmatprep.mubr.bf16.mxu0 %v2401
    %2447 = vmatmul.mubr.bf16.gmra.mrb[0].mxu0 %v2400
    %v2448 = vpop.f32.mrb[0].mxu0
    %v2449 = vadd.f32 %v1480, %v2448
    %v2450 = vpop.f32.mrb[0].mxu0
    %v2451 = vpop.f32.mrb[0].mxu0
    %v2452 = vadd.f32 %v1480, %v2451
    %v2453 = vpop.f32.mrb[0].mxu0
    %2454 = vmatprep.mubr.bf16.mxu0 %v2403
    %2455 = vmatmul.mubr.bf16.gmra.mrb[0].mxu0 %v2402
    %v2456 = vpop.f32.mrb[0].mxu0
    %v2457 = vadd.f32 %v1480, %v2456
    %v2458 = vpop.f32.mrb[0].mxu0
    %v2459 = vpop.f32.mrb[0].mxu0
    %v2460 = vadd.f32 %v1480, %v2459
    %v2461 = vpop.f32.mrb[0].mxu0
    %2462 = vmatprep.mubr.bf16.mxu0 %v2405
    %2463 = vmatmul.mubr.bf16.gmra.mrb[0].mxu0 %v2404
    %v2464 = vpop.f32.mrb[0].mxu0
    %v2465 = vadd.f32 %v1480, %v2464
    %v2466 = vpop.f32.mrb[0].mxu0
    %v2467 = vpop.f32.mrb[0].mxu0
    %v2468 = vadd.f32 %v1480, %v2467
    %v2469 = vpop.f32.mrb[0].mxu0
    %2470 = vdwg.mxu0
    %v2471 = vld [vmem:[%s7] sm:$0x1]
    %v2472 = vld [vmem:[%s9] sm:$0xff]
    %v2473 = vld [vmem:[%s9 + $0x8] sm:$0xff]
    %v2474 = vld [vmem:[%s9 + $0x10] sm:$0xff]
    %v2475 = vld [vmem:[%s9 + $0x18] sm:$0xff]
    %v2476 = vld [vmem:[%s9 + $0x20] sm:$0xff]
    %v2477 = vld [vmem:[%s9 + $0x28] sm:$0xff]
    %v2478 = vld [vmem:[%s9 + $0x30] sm:$0xff]
    %v2479 = vld [vmem:[%s9 + $0x38] sm:$0xff]
    %v2480 = vld [vmem:[%s9 + $0x40] sm:$0xff]
    %v2481 = vld [vmem:[%s9 + $0x48] sm:$0xff]
    %v2482 = vld [vmem:[%s9 + $0x50] sm:$0xff]
    %v2483 = vld [vmem:[%s9 + $0x58] sm:$0xff]
    %v2484 = vld [vmem:[%s9 + $0x60] sm:$0xff]
    %v2485 = vld [vmem:[%s9 + $0x68] sm:$0xff]
    %v2486 = vld [vmem:[%s9 + $0x70] sm:$0xff]
    %v2487 = vld [vmem:[%s9 + $0x78] sm:$0xff]
    %v2488 = vld [vmem:[%s10] sm:$0xff]
    %v2489 = vld [vmem:[%s10 + $0x8] sm:$0xff]
    %v2490 = vld [vmem:[%s10 + $0x10] sm:$0xff]
    %v2491 = vld [vmem:[%s10 + $0x18] sm:$0xff]
    %v2492 = vld [vmem:[%s10 + $0x20] sm:$0xff]
    %v2493 = vld [vmem:[%s10 + $0x28] sm:$0xff]
    %v2494 = vld [vmem:[%s10 + $0x30] sm:$0xff]
    %v2495 = vld [vmem:[%s10 + $0x38] sm:$0xff]
    %v2496 = vld [vmem:[%s10 + $0x40] sm:$0xff]
    %v2497 = vld [vmem:[%s10 + $0x48] sm:$0xff]
    %v2498 = vld [vmem:[%s10 + $0x50] sm:$0xff]
    %v2499 = vld [vmem:[%s10 + $0x58] sm:$0xff]
    %v2500 = vld [vmem:[%s10 + $0x60] sm:$0xff]
    %v2501 = vld [vmem:[%s10 + $0x68] sm:$0xff]
    %v2502 = vld [vmem:[%s10 + $0x70] sm:$0xff]
    %v2503 = vld [vmem:[%s10 + $0x78] sm:$0xff]
    %v2504 = vadd.f32 %v1613, %v1616
    %v2505 = vadd.f32 %v2504, %v1621
    %v2506 = vadd.f32 %v2505, %v1624
    %v2507 = vadd.f32 %v2506, %v1629
    %v2508 = vadd.f32 %v2507, %v1632
    %v2509 = vadd.f32 %v2508, %v1637
    %v2510 = vadd.f32 %v2509, %v1640
    %v2511 = vadd.f32 %v2510, %v2441
    %v2512 = vadd.f32 %v2511, %v2444
    %v2513 = vadd.f32 %v2512, %v2449
    %v2514 = vadd.f32 %v2513, %v2452
    %v2515 = vadd.f32 %v2514, %v2457
    %v2516 = vadd.f32 %v2515, %v2460
    %v2517 = vadd.f32 %v2516, %v2465
    %v2518 = vadd.f32 %v2517, %v2468
    %v2519 = vrot.slane %v2518, 4
    %v2520 = vadd.f32 %v2518, %v2519
    %v2521 = vrot.slane %v2520, 2
    %v2522 = vadd.f32 %v2520, %v2521
    %v2523 = vrot.slane %v2522, 1
    %v2524 = vadd.f32 %v2522, %v2523
    %v2525 = vrcp.pop 128.0
    %v2526 = vmul.f32 %v2524, %v2525
    %v2527 = vsub.f32 %v1613, %v2526
    %v2528 = vsub.f32 %v1616, %v2526
    %v2529 = vsub.f32 %v1621, %v2526
    %v2530 = vsub.f32 %v1624, %v2526
    %v2531 = vsub.f32 %v1629, %v2526
    %v2532 = vsub.f32 %v1632, %v2526
    %v2533 = vsub.f32 %v1637, %v2526
    %v2534 = vsub.f32 %v1640, %v2526
    %v2535 = vsub.f32 %v2441, %v2526
    %v2536 = vsub.f32 %v2444, %v2526
    %v2537 = vsub.f32 %v2449, %v2526
    %v2538 = vsub.f32 %v2452, %v2526
    %v2539 = vsub.f32 %v2457, %v2526
    %v2540 = vsub.f32 %v2460, %v2526
    %v2541 = vsub.f32 %v2465, %v2526
    %v2542 = vsub.f32 %v2468, %v2526
    %v2543 = vmul.f32 %v2527, %v2527
    %v2544 = vmul.f32 %v2528, %v2528
    %v2545 = vmul.f32 %v2529, %v2529
    %v2546 = vmul.f32 %v2530, %v2530
    %v2547 = vmul.f32 %v2531, %v2531
    %v2548 = vmul.f32 %v2532, %v2532
    %v2549 = vmul.f32 %v2533, %v2533
    %v2550 = vmul.f32 %v2534, %v2534
    %v2551 = vmul.f32 %v2535, %v2535
    %v2552 = vmul.f32 %v2536, %v2536
    %v2553 = vmul.f32 %v2537, %v2537
    %v2554 = vmul.f32 %v2538, %v2538
    %v2555 = vmul.f32 %v2539, %v2539
    %v2556 = vmul.f32 %v2540, %v2540
    %v2557 = vmul.f32 %v2541, %v2541
    %v2558 = vmul.f32 %v2542, %v2542
    %v2559 = vadd.f32 %v2543, %v2544
    %v2560 = vadd.f32 %v2559, %v2545
    %v2561 = vadd.f32 %v2560, %v2546
    %v2562 = vadd.f32 %v2561, %v2547
    %v2563 = vadd.f32 %v2562, %v2548
    %v2564 = vadd.f32 %v2563, %v2549
    %v2565 = vadd.f32 %v2564, %v2550
    %v2566 = vadd.f32 %v2565, %v2551
    %v2567 = vadd.f32 %v2566, %v2552
    %v2568 = vadd.f32 %v2567, %v2553
    %v2569 = vadd.f32 %v2568, %v2554
    %v2570 = vadd.f32 %v2569, %v2555
    %v2571 = vadd.f32 %v2570, %v2556
    %v2572 = vadd.f32 %v2571, %v2557
    %v2573 = vadd.f32 %v2572, %v2558
    %v2574 = vrot.slane %v2573, 4
    %v2575 = vadd.f32 %v2573, %v2574
    %v2576 = vrot.slane %v2575, 2
    %v2577 = vadd.f32 %v2575, %v2576
    %v2578 = vrot.slane %v2577, 1
    %v2579 = vadd.f32 %v2577, %v2578
    %v2580 = vmul.f32 %v2579, %v2525
    %v2581 = vadd.f32 %v2580, 0.001
    %v2582 = vrsqrt.pop %v2581
    %v2583 = vmul.f32 %v2527, %v2582
    %v2584 = vmul.f32 %v2528, %v2582
    %v2585 = vmul.f32 %v2529, %v2582
    %v2586 = vmul.f32 %v2530, %v2582
    %v2587 = vmul.f32 %v2531, %v2582
    %v2588 = vmul.f32 %v2532, %v2582
    %v2589 = vmul.f32 %v2533, %v2582
    %v2590 = vmul.f32 %v2534, %v2582
    %v2591 = vmul.f32 %v2535, %v2582
    %v2592 = vmul.f32 %v2536, %v2582
    %v2593 = vmul.f32 %v2537, %v2582
    %v2594 = vmul.f32 %v2538, %v2582
    %v2595 = vmul.f32 %v2539, %v2582
    %v2596 = vmul.f32 %v2540, %v2582
    %v2597 = vmul.f32 %v2541, %v2582
    %v2598 = vmul.f32 %v2542, %v2582
    %v2600 = vlaneseq
    %v2601 = vshrl.u32 %v2600, 7
    %v2602 = vsub.s32 0, %v2601
    %v2603 = vrot.slane %v2471, %v2602
    %v2605 = vadd.f32 %v2583, %v2603
    %v2606 = vadd.f32 %v2584, %v2603
    %v2607 = vadd.f32 %v2585, %v2603
    %v2608 = vadd.f32 %v2586, %v2603
    %v2609 = vadd.f32 %v2587, %v2603
    %v2610 = vadd.f32 %v2588, %v2603
    %v2611 = vadd.f32 %v2589, %v2603
    %v2612 = vadd.f32 %v2590, %v2603
    %v2613 = vadd.f32 %v2591, %v2603
    %v2614 = vadd.f32 %v2592, %v2603
    %v2615 = vadd.f32 %v2593, %v2603
    %v2616 = vadd.f32 %v2594, %v2603
    %v2617 = vadd.f32 %v2595, %v2603
    %v2618 = vadd.f32 %v2596, %v2603
    %v2619 = vadd.f32 %v2597, %v2603
    %v2620 = vadd.f32 %v2598, %v2603
    %v2621 = vmul.f32 %v2605, 0.5
    %v2622 = vmul.f32 %v2606, 0.5
    %v2623 = vmul.f32 %v2607, 0.5
    %v2624 = vmul.f32 %v2608, 0.5
    %v2625 = vmul.f32 %v2609, 0.5
    %v2626 = vmul.f32 %v2610, 0.5
    %v2627 = vmul.f32 %v2611, 0.5
    %v2628 = vmul.f32 %v2612, 0.5
    %v2629 = vmul.f32 %v2613, 0.5
    %v2630 = vmul.f32 %v2614, 0.5
    %v2631 = vmul.f32 %v2615, 0.5
    %v2632 = vmul.f32 %v2616, 0.5
    %v2633 = vmul.f32 %v2617, 0.5
    %v2634 = vmul.f32 %v2618, 0.5
    %v2635 = vmul.f32 %v2619, 0.5
    %v2636 = vmul.f32 %v2620, 0.5
    %v2637 = vmul.f32 %v2621, 1.442695
    %v2638 = vpow.pop %v2637
    %v2639 = vmul.f32 %v2622, 1.442695
    %v2640 = vpow.pop %v2639
    %v2641 = vmul.f32 %v2623, 1.442695
    %v2642 = vpow.pop %v2641
    %v2643 = vmul.f32 %v2624, 1.442695
    %v2644 = vpow.pop %v2643
    %v2645 = vmul.f32 %v2625, 1.442695
    %v2646 = vpow.pop %v2645
    %v2647 = vmul.f32 %v2626, 1.442695
    %v2648 = vpow.pop %v2647
    %v2649 = vmul.f32 %v2627, 1.442695
    %v2650 = vpow.pop %v2649
    %v2651 = vmul.f32 %v2628, 1.442695
    %v2652 = vpow.pop %v2651
    %v2653 = vmul.f32 %v2629, 1.442695
    %v2654 = vpow.pop %v2653
    %v2655 = vmul.f32 %v2630, 1.442695
    %v2656 = vpow.pop %v2655
    %v2657 = vmul.f32 %v2631, 1.442695
    %v2658 = vpow.pop %v2657
    %v2659 = vmul.f32 %v2632, 1.442695
    %v2660 = vpow.pop %v2659
    %v2661 = vmul.f32 %v2633, 1.442695
    %v2662 = vpow.pop %v2661
    %v2663 = vmul.f32 %v2634, 1.442695
    %v2664 = vpow.pop %v2663
    %v2665 = vmul.f32 %v2635, 1.442695
    %v2666 = vpow.pop %v2665
    %v2667 = vmul.f32 %v2636, 1.442695
    %v2668 = vpow.pop %v2667
    %2685 = vrot.lane.b32.xlu0 %v2638, 64
    %v2686 = vpop.permute.xlu0 %2685
    %2687 = vrot.lane.b32.xlu0 %v2640, 64
    %v2688 = vpop.permute.xlu0 %2687
    %2689 = vrot.lane.b32.xlu0 %v2642, 64
    %v2690 = vpop.permute.xlu0 %2689
    %2691 = vrot.lane.b32.xlu0 %v2644, 64
    %v2692 = vpop.permute.xlu0 %2691
    %2693 = vrot.lane.b32.xlu0 %v2646, 64
    %v2694 = vpop.permute.xlu0 %2693
    %2695 = vrot.lane.b32.xlu0 %v2648, 64
    %v2696 = vpop.permute.xlu0 %2695
    %2697 = vrot.lane.b32.xlu0 %v2650, 64
    %v2698 = vpop.permute.xlu0 %2697
    %2699 = vrot.lane.b32.xlu0 %v2652, 64
    %v2700 = vpop.permute.xlu0 %2699
    %2701 = vrot.lane.b32.xlu0 %v2654, 64
    %v2702 = vpop.permute.xlu0 %2701
    %2703 = vrot.lane.b32.xlu0 %v2656, 64
    %v2704 = vpop.permute.xlu0 %2703
    %2705 = vrot.lane.b32.xlu0 %v2658, 64
    %v2706 = vpop.permute.xlu0 %2705
    %2707 = vrot.lane.b32.xlu0 %v2660, 64
    %v2708 = vpop.permute.xlu0 %2707
    %2709 = vrot.lane.b32.xlu0 %v2662, 64
    %v2710 = vpop.permute.xlu0 %2709
    %2711 = vrot.lane.b32.xlu0 %v2664, 64
    %v2712 = vpop.permute.xlu0 %2711
    %2713 = vrot.lane.b32.xlu0 %v2666, 64
    %v2714 = vpop.permute.xlu0 %2713
    %2715 = vrot.lane.b32.xlu0 %v2668, 64
    %v2716 = vpop.permute.xlu0 %2715
    %v2733 = vmul.f32 %v2472, %v2686
    %v2734 = vmul.f32 %v2473, %v2688
    %v2735 = vmul.f32 %v2474, %v2690
    %v2736 = vmul.f32 %v2475, %v2692
    %v2737 = vmul.f32 %v2476, %v2694
    %v2738 = vmul.f32 %v2477, %v2696
    %v2739 = vmul.f32 %v2478, %v2698
    %v2740 = vmul.f32 %v2479, %v2700
    %v2741 = vmul.f32 %v2480, %v2702
    %v2742 = vmul.f32 %v2481, %v2704
    %v2743 = vmul.f32 %v2482, %v2706
    %v2744 = vmul.f32 %v2483, %v2708
    %v2745 = vmul.f32 %v2484, %v2710
    %v2746 = vmul.f32 %v2485, %v2712
    %v2747 = vmul.f32 %v2486, %v2714
    %v2748 = vmul.f32 %v2487, %v2716
    %v2749 = vadd.f32 %v2605, %v2733
    %v2750 = vadd.f32 %v2606, %v2734
    %v2751 = vadd.f32 %v2607, %v2735
    %v2752 = vadd.f32 %v2608, %v2736
    %v2753 = vadd.f32 %v2609, %v2737
    %v2754 = vadd.f32 %v2610, %v2738
    %v2755 = vadd.f32 %v2611, %v2739
    %v2756 = vadd.f32 %v2612, %v2740
    %v2757 = vadd.f32 %v2613, %v2741
    %v2758 = vadd.f32 %v2614, %v2742
    %v2759 = vadd.f32 %v2615, %v2743
    %v2760 = vadd.f32 %v2616, %v2744
    %v2761 = vadd.f32 %v2617, %v2745
    %v2762 = vadd.f32 %v2618, %v2746
    %v2763 = vadd.f32 %v2619, %v2747
    %v2764 = vadd.f32 %v2620, %v2748
    %vm2765 = vcmask 523264
    %v2766 = vsel %vm2765, %v2749, -inf
    %2767 = vmax.xlane.f32.xlu0 %v2766
    %v2768 = vpop.xlane.xlu0 %2767
    %v2769 = vsel %vm2765, %v2750, -inf
    %2770 = vmax.xlane.f32.xlu0 %v2769
    %v2771 = vpop.xlane.xlu0 %2770
    %v2772 = vsel %vm2765, %v2751, -inf
    %2773 = vmax.xlane.f32.xlu0 %v2772
    %v2774 = vpop.xlane.xlu0 %2773
    %v2775 = vsel %vm2765, %v2752, -inf
    %2776 = vmax.xlane.f32.xlu0 %v2775
    %v2777 = vpop.xlane.xlu0 %2776
    %v2778 = vsel %vm2765, %v2753, -inf
    %2779 = vmax.xlane.f32.xlu0 %v2778
    %v2780 = vpop.xlane.xlu0 %2779
    %v2781 = vsel %vm2765, %v2754, -inf
    %2782 = vmax.xlane.f32.xlu0 %v2781
    %v2783 = vpop.xlane.xlu0 %2782
    %v2784 = vsel %vm2765, %v2755, -inf
    %2785 = vmax.xlane.f32.xlu0 %v2784
    %v2786 = vpop.xlane.xlu0 %2785
    %v2787 = vsel %vm2765, %v2756, -inf
    %2788 = vmax.xlane.f32.xlu0 %v2787
    %v2789 = vpop.xlane.xlu0 %2788
    %v2790 = vsel %vm2765, %v2757, -inf
    %2791 = vmax.xlane.f32.xlu0 %v2790
    %v2792 = vpop.xlane.xlu0 %2791
    %v2793 = vsel %vm2765, %v2758, -inf
    %2794 = vmax.xlane.f32.xlu0 %v2793
    %v2795 = vpop.xlane.xlu0 %2794
    %v2796 = vsel %vm2765, %v2759, -inf
    %2797 = vmax.xlane.f32.xlu0 %v2796
    %v2798 = vpop.xlane.xlu0 %2797
    %v2799 = vsel %vm2765, %v2760, -inf
    %2800 = vmax.xlane.f32.xlu0 %v2799
    %v2801 = vpop.xlane.xlu0 %2800
    %v2802 = vsel %vm2765, %v2761, -inf
    %2803 = vmax.xlane.f32.xlu0 %v2802
    %v2804 = vpop.xlane.xlu0 %2803
    %v2805 = vsel %vm2765, %v2762, -inf
    %2806 = vmax.xlane.f32.xlu0 %v2805
    %v2807 = vpop.xlane.xlu0 %2806
    %v2808 = vsel %vm2765, %v2763, -inf
    %2809 = vmax.xlane.f32.xlu0 %v2808
    %v2810 = vpop.xlane.xlu0 %2809
    %v2811 = vsel %vm2765, %v2764, -inf
    %2812 = vmax.xlane.f32.xlu0 %v2811
    %v2813 = vpop.xlane.xlu0 %2812
    %v2814 = vsub.f32 %v2749, %v2768
    %v2815 = vsub.f32 %v2750, %v2771
    %v2816 = vsub.f32 %v2751, %v2774
    %v2817 = vsub.f32 %v2752, %v2777
    %v2818 = vsub.f32 %v2753, %v2780
    %v2819 = vsub.f32 %v2754, %v2783
    %v2820 = vsub.f32 %v2755, %v2786
    %v2821 = vsub.f32 %v2756, %v2789
    %v2822 = vsub.f32 %v2757, %v2792
    %v2823 = vsub.f32 %v2758, %v2795
    %v2824 = vsub.f32 %v2759, %v2798
    %v2825 = vsub.f32 %v2760, %v2801
    %v2826 = vsub.f32 %v2761, %v2804
    %v2827 = vsub.f32 %v2762, %v2807
    %v2828 = vsub.f32 %v2763, %v2810
    %v2829 = vsub.f32 %v2764, %v2813
    %v2830 = vmul.f32 %v2814, 1.442695
    %v2831 = vpow.pop %v2830
    %v2832 = vmul.f32 %v2815, 1.442695
    %v2833 = vpow.pop %v2832
    %v2834 = vmul.f32 %v2816, 1.442695
    %v2835 = vpow.pop %v2834
    %v2836 = vmul.f32 %v2817, 1.442695
    %v2837 = vpow.pop %v2836
    %v2838 = vmul.f32 %v2818, 1.442695
    %v2839 = vpow.pop %v2838
    %v2840 = vmul.f32 %v2819, 1.442695
    %v2841 = vpow.pop %v2840
    %v2842 = vmul.f32 %v2820, 1.442695
    %v2843 = vpow.pop %v2842
    %v2844 = vmul.f32 %v2821, 1.442695
    %v2845 = vpow.pop %v2844
    %v2846 = vmul.f32 %v2822, 1.442695
    %v2847 = vpow.pop %v2846
    %v2848 = vmul.f32 %v2823, 1.442695
    %v2849 = vpow.pop %v2848
    %v2850 = vmul.f32 %v2824, 1.442695
    %v2851 = vpow.pop %v2850
    %v2852 = vmul.f32 %v2825, 1.442695
    %v2853 = vpow.pop %v2852
    %v2854 = vmul.f32 %v2826, 1.442695
    %v2855 = vpow.pop %v2854
    %v2856 = vmul.f32 %v2827, 1.442695
    %v2857 = vpow.pop %v2856
    %v2858 = vmul.f32 %v2828, 1.442695
    %v2859 = vpow.pop %v2858
    %v2860 = vmul.f32 %v2829, 1.442695
    %v2861 = vpow.pop %v2860
    %v2862 = vsel %vm2765, %v2831, 0.0
    %2863 = vadd.xlane.f32.xlu0 %v2862
    %v2864 = vpop.xlane.xlu0 %2863
    %v2865 = vsel %vm2765, %v2833, 0.0
    %2866 = vadd.xlane.f32.xlu0 %v2865
    %v2867 = vpop.xlane.xlu0 %2866
    %v2868 = vsel %vm2765, %v2835, 0.0
    %2869 = vadd.xlane.f32.xlu0 %v2868
    %v2870 = vpop.xlane.xlu0 %2869
    %v2871 = vsel %vm2765, %v2837, 0.0
    %2872 = vadd.xlane.f32.xlu0 %v2871
    %v2873 = vpop.xlane.xlu0 %2872
    %v2874 = vsel %vm2765, %v2839, 0.0
    %2875 = vadd.xlane.f32.xlu0 %v2874
    %v2876 = vpop.xlane.xlu0 %2875
    %v2877 = vsel %vm2765, %v2841, 0.0
    %2878 = vadd.xlane.f32.xlu0 %v2877
    %v2879 = vpop.xlane.xlu0 %2878
    %v2880 = vsel %vm2765, %v2843, 0.0
    %2881 = vadd.xlane.f32.xlu0 %v2880
    %v2882 = vpop.xlane.xlu0 %2881
    %v2883 = vsel %vm2765, %v2845, 0.0
    %2884 = vadd.xlane.f32.xlu0 %v2883
    %v2885 = vpop.xlane.xlu0 %2884
    %v2886 = vsel %vm2765, %v2847, 0.0
    %2887 = vadd.xlane.f32.xlu0 %v2886
    %v2888 = vpop.xlane.xlu0 %2887
    %v2889 = vsel %vm2765, %v2849, 0.0
    %2890 = vadd.xlane.f32.xlu0 %v2889
    %v2891 = vpop.xlane.xlu0 %2890
    %v2892 = vsel %vm2765, %v2851, 0.0
    %2893 = vadd.xlane.f32.xlu0 %v2892
    %v2894 = vpop.xlane.xlu0 %2893
    %v2895 = vsel %vm2765, %v2853, 0.0
    %2896 = vadd.xlane.f32.xlu0 %v2895
    %v2897 = vpop.xlane.xlu0 %2896
    %v2898 = vsel %vm2765, %v2855, 0.0
    %2899 = vadd.xlane.f32.xlu0 %v2898
    %v2900 = vpop.xlane.xlu0 %2899
    %v2901 = vsel %vm2765, %v2857, 0.0
    %2902 = vadd.xlane.f32.xlu0 %v2901
    %v2903 = vpop.xlane.xlu0 %2902
    %v2904 = vsel %vm2765, %v2859, 0.0
    %2905 = vadd.xlane.f32.xlu0 %v2904
    %v2906 = vpop.xlane.xlu0 %2905
    %v2907 = vsel %vm2765, %v2861, 0.0
    %2908 = vadd.xlane.f32.xlu0 %v2907
    %v2909 = vpop.xlane.xlu0 %2908
    %v2910 = vrcp.pop %v2864
    %v2911 = vmul.f32 %v2831, %v2910
    %v2912 = vrcp.pop %v2867
    %v2913 = vmul.f32 %v2833, %v2912
    %v2914 = vrcp.pop %v2870
    %v2915 = vmul.f32 %v2835, %v2914
    %v2916 = vrcp.pop %v2873
    %v2917 = vmul.f32 %v2837, %v2916
    %v2918 = vrcp.pop %v2876
    %v2919 = vmul.f32 %v2839, %v2918
    %v2920 = vrcp.pop %v2879
    %v2921 = vmul.f32 %v2841, %v2920
    %v2922 = vrcp.pop %v2882
    %v2923 = vmul.f32 %v2843, %v2922
    %v2924 = vrcp.pop %v2885
    %v2925 = vmul.f32 %v2845, %v2924
    %v2926 = vrcp.pop %v2888
    %v2927 = vmul.f32 %v2847, %v2926
    %v2928 = vrcp.pop %v2891
    %v2929 = vmul.f32 %v2849, %v2928
    %v2930 = vrcp.pop %v2894
    %v2931 = vmul.f32 %v2851, %v2930
    %v2932 = vrcp.pop %v2897
    %v2933 = vmul.f32 %v2853, %v2932
    %v2934 = vrcp.pop %v2900
    %v2935 = vmul.f32 %v2855, %v2934
    %v2936 = vrcp.pop %v2903
    %v2937 = vmul.f32 %v2857, %v2936
    %v2938 = vrcp.pop %v2906
    %v2939 = vmul.f32 %v2859, %v2938
    %v2940 = vrcp.pop %v2909
    %v2941 = vmul.f32 %v2861, %v2940
    %v2942 = vmul.f32 %v2911, %v2488
    %v2943 = vmul.f32 %v2913, %v2489
    %v2944 = vmul.f32 %v2915, %v2490
    %v2945 = vmul.f32 %v2917, %v2491
    %v2946 = vmul.f32 %v2919, %v2492
    %v2947 = vmul.f32 %v2921, %v2493
    %v2948 = vmul.f32 %v2923, %v2494
    %v2949 = vmul.f32 %v2925, %v2495
    %v2950 = vmul.f32 %v2927, %v2496
    %v2951 = vmul.f32 %v2929, %v2497
    %v2952 = vmul.f32 %v2931, %v2498
    %v2953 = vmul.f32 %v2933, %v2499
    %v2954 = vmul.f32 %v2935, %v2500
    %v2955 = vmul.f32 %v2937, %v2501
    %v2956 = vmul.f32 %v2939, %v2502
    %v2957 = vmul.f32 %v2941, %v2503
    %2958 = vst.msk [vmem:[%s11] sm:$0xff] %vm2765, %v2942
    %2959 = vst.msk [vmem:[%s11 + $0x8] sm:$0xff] %vm2765, %v2943
    %2960 = vst.msk [vmem:[%s11 + $0x10] sm:$0xff] %vm2765, %v2944
    %2961 = vst.msk [vmem:[%s11 + $0x18] sm:$0xff] %vm2765, %v2945
    %2962 = vst.msk [vmem:[%s11 + $0x20] sm:$0xff] %vm2765, %v2946
    %2963 = vst.msk [vmem:[%s11 + $0x28] sm:$0xff] %vm2765, %v2947
    %2964 = vst.msk [vmem:[%s11 + $0x30] sm:$0xff] %vm2765, %v2948
    %2965 = vst.msk [vmem:[%s11 + $0x38] sm:$0xff] %vm2765, %v2949
    %2966 = vst.msk [vmem:[%s11 + $0x40] sm:$0xff] %vm2765, %v2950
    %2967 = vst.msk [vmem:[%s11 + $0x48] sm:$0xff] %vm2765, %v2951
    %2968 = vst.msk [vmem:[%s11 + $0x50] sm:$0xff] %vm2765, %v2952
    %2969 = vst.msk [vmem:[%s11 + $0x58] sm:$0xff] %vm2765, %v2953
    %2970 = vst.msk [vmem:[%s11 + $0x60] sm:$0xff] %vm2765, %v2954
    %2971 = vst.msk [vmem:[%s11 + $0x68] sm:$0xff] %vm2765, %v2955
    %2972 = vst.msk [vmem:[%s11 + $0x70] sm:$0xff] %vm2765, %v2956
    %2973 = vst.msk [vmem:[%s11 + $0x78] sm:$0xff] %vm2765, %v2957
    // Predicated region
    $region58: #{tpu_custom_call.1} parent=1 // pred_check
      _
    $region59: #{tpu_custom_call.1} parent=1 // pred_check_branch
      %2975 = sbr.rel (0) target = $region61
    $region60: #{tpu_custom_call.1} parent=1 // pred_region
      _
    $region61: #{tpu_custom_call.1} parent=1 // pred_fallthru
      _
    // Predicated region
    $region62: #{tpu_custom_call.1} parent=1 // pred_check
      _
    $region63: #{tpu_custom_call.1} parent=1 // pred_check_branch
      %2977 = sbr.rel (0) target = $region65
    $region64: #{tpu_custom_call.1} parent=1 // pred_region
      _
    $region65: #{tpu_custom_call.1} parent=1 // pred_fallthru
      _
    %2978 = vsyncpa [#allocation3], 1
    %2979 = vsyncpa [#allocation5], 1

</llo_original>
